<compile_context>
chip_gen: v6e
topology: v6e:2x2x1
jax: 0.10.0
libtpu: 0.0.40
codegen_flags: <defaults>
</compile_context>

<pallas_src>
import functools

import jax
import jax.numpy as jnp
from jax import lax
from jax.experimental import pallas as pl
from jax.experimental.pallas import tpu as pltpu


def _identity(n, dtype=jnp.float32):
    """(n, n) identity built via iota (no closed-over array constants)."""
    r = lax.broadcasted_iota(jnp.int32, (n, n), 0)
    c = lax.broadcasted_iota(jnp.int32, (n, n), 1)
    return (r == c).astype(dtype)


def _voxel_loss_kernel(reg_ref, ppos_ref, pos_ref, neg_ref, tgt_ref, out_ref,
                       *, sigma2, eps):
    """One (batch, spatial-tile) grid step.

    Block layouts:
      reg_ref : (1, 14, T)  channel-major (free view of NCHW)
      ppos_ref: (1,  2, T)  channel-major (free view of NCHW)
      pos_ref : (1, T,  2)  position-major (free view of NHWC)
      neg_ref : (1, T,  2)  position-major (free view of NHWC)
      tgt_ref : (1, T, 14)  position-major (free view of NHWC)
      out_ref : (1, 1, 8, 128)  rows 0..4 = partial sums (see below)
    """
    f32 = jnp.float32
    reg = reg_ref[0].astype(f32)       # (14, T) lane-dense
    ppos = ppos_ref[0].astype(f32)     # (2, T)  lane-dense
    pos_pc = pos_ref[0].astype(f32)    # (T, 2)  NHWC-native
    neg_pc = neg_ref[0].astype(f32)    # (T, 2)  NHWC-native
    tgt_pc = tgt_ref[0].astype(f32)    # (T, 14) NHWC-native

    C = reg.shape[0]
    half = C // 2

    # --- targets: NHWC-native (T, C) -> channel-major (C, T) on the MXU -----
    # out[c, p] = sum_k I[c, k] * tgt_pc[p, k]  (q @ k^T style dim numbers).
    tgt = lax.dot_general(
        _identity(C), tgt_pc,
        dimension_numbers=(((1,), (1,)), ((), ())),
        precision=lax.Precision.HIGHEST,
        preferred_element_type=f32)            # (C, T)

    # --- smooth-L1 (lane-dense), reduced per anchor group --------------------
    d = reg - tgt
    absd = jnp.abs(d)
    sl = jnp.where(absd < (1.0 / sigma2),
                   d * d * (0.5 * sigma2),
                   absd - (0.5 / sigma2))      # (C, T)
    sl01 = jnp.concatenate(
        [jnp.sum(sl[:half, :], axis=0, keepdims=True),    # anchor 0: ch 0..6
         jnp.sum(sl[half:, :], axis=0, keepdims=True)],   # anchor 1: ch 7..13
        axis=0)                                             # (2, T)

    # --- mask application / cls losses as Frobenius inner products on MXU ----
    ident2 = _identity(2)

    def frob(lhs_2t, rhs_t2):
        # sum_{a,p} lhs[a, p] * rhs[p, a]  ==  trace(lhs @ rhs)
        m = lax.dot_general(lhs_2t, rhs_t2,
                            dimension_numbers=(((1,), (0,)), ((), ())),
                            precision=lax.Precision.HIGHEST,
                            preferred_element_type=f32)     # (2, 2)
        return jnp.sum(m * ident2)

    reg_sum = frob(sl01, pos_pc)
    cls_pos = frob(-jnp.log(ppos + eps), pos_pc)
    cls_neg = frob(-jnp.log(1.0 - ppos + eps), neg_pc)
    pos_cnt = jnp.sum(pos_pc)
    neg_cnt = jnp.sum(neg_pc)

    # --- single merged output block ------------------------------------------
    row = lax.broadcasted_iota(jnp.int32, (8, 128), 0)
    vals = jnp.where(row == 0, reg_sum,
           jnp.where(row == 1, cls_pos,
           jnp.where(row == 2, cls_neg,
           jnp.where(row == 3, pos_cnt, neg_cnt))))
    out_ref[0, 0] = vals


def _pick_tile(hw, max_tile):
    """Largest multiple-of-128 divisor of hw that is <= max_tile."""
    best = 0
    t = 128
    while t <= min(hw, max_tile):
        if hw % t == 0:
            best = t
        t += 128
    # TODO(synk): pad HW (with zero masks) when it has no multiple-of-128
    # divisor, so huge non-divisible feature maps still get spatial tiling.
    return best if best else hw


def voxel_loss(reg, p_pos, pos_equal_one, neg_equal_one, targets,
               alpha=1.5, beta=1.0, gamma=3.0, max_tile_hw=8192):
    """Pallas version of VoxelLoss.forward.

    Args (PyTorch conventions):
      reg:            (B, 14, H, W)  NCHW regression output
      p_pos:          (B, 2, H, W)   NCHW probability output
      pos_equal_one:  (B, H, W, 2)   NHWC positive-anchor mask
      neg_equal_one:  (B, H, W, 2)   NHWC negative-anchor mask
      targets:        (B, H, W, 14)  NHWC regression targets
    Returns:
      (loss, cls_loss, reg_loss, cls_pos_loss_rec, cls_neg_loss_rec) scalars.
    """
    B, C, H, W = reg.shape          # C = 14
    A = p_pos.shape[1]              # A = 2
    HW = H * W

    # Free reshapes only — no HBM transpose / astype round trips.
    reg2 = reg.reshape(B, C, HW)
    ppos2 = p_pos.reshape(B, A, HW)
    pos2 = pos_equal_one.reshape(B, HW, A)
    neg2 = neg_equal_one.reshape(B, HW, A)
    tgt2 = targets.reshape(B, HW, C)

    tile = _pick_tile(HW, max_tile_hw)
    n_tiles = HW // tile

    kernel = functools.partial(_voxel_loss_kernel,
                               sigma2=float(gamma) * float(gamma), eps=1e-6)

    # TODO(synk): on v7x, an explicit CORE_PARALLEL leading axis (or
    # pl.core_map) would guarantee a balanced 2-TensorCore split when
    # B * n_tiles is small; "parallel" on both axes is kept here for safety.
    out = pl.pallas_call(
        kernel,
        out_shape=jax.ShapeDtypeStruct((B, n_tiles, 8, 128), jnp.float32),
        grid=(B, n_tiles),
        in_specs=[
            pl.BlockSpec((1, C, tile), lambda b, s: (b, 0, s)),   # reg
            pl.BlockSpec((1, A, tile), lambda b, s: (b, 0, s)),   # p_pos
            pl.BlockSpec((1, tile, A), lambda b, s: (b, s, 0)),   # pos mask
            pl.BlockSpec((1, tile, A), lambda b, s: (b, s, 0)),   # neg mask
            pl.BlockSpec((1, tile, C), lambda b, s: (b, s, 0)),   # targets
        ],
        out_specs=pl.BlockSpec((1, 1, 8, 128), lambda b, s: (b, s, 0, 0)),
        compiler_params=pltpu.CompilerParams(
            dimension_semantics=("parallel", "parallel"),
            vmem_limit_bytes=48 * 1024 * 1024),
    )(reg2, ppos2, pos2, neg2, tgt2)

    # Tiny (B, n_tiles, 8) reduction + normalization on the host graph.
    parts = out[..., 0]                      # (B, n_tiles, 8)
    sums = jnp.sum(parts, axis=1)            # (B, 8)
    pos_den = jnp.maximum(sums[:, 3], 1.0)
    neg_den = jnp.maximum(sums[:, 4], 1.0)
    reg_loss = jnp.sum(sums[:, 0] / pos_den)
    cls_pos_loss_rec = jnp.sum(sums[:, 1] / pos_den)
    cls_neg_loss_rec = jnp.sum(sums[:, 2] / neg_den)
    cls_loss = alpha * cls_pos_loss_rec + beta * cls_neg_loss_rec
    loss = cls_loss + reg_loss
    return loss, cls_loss, reg_loss, cls_pos_loss_rec, cls_neg_loss_rec


def voxel_loss_ref(reg, p_pos, pos, neg, tgt, alpha, beta, gamma):
    """Plain-JAX reference mirroring the PyTorch forward, for validation."""
    reg = jnp.transpose(reg, (0, 2, 3, 1)).astype(jnp.float32)
    p = jnp.transpose(p_pos, (0, 2, 3, 1)).astype(jnp.float32)
    pos = pos.astype(jnp.float32)
    neg = neg.astype(jnp.float32)
    tgt = tgt.astype(jnp.float32)
    pos_for_reg = jnp.concatenate(
        [jnp.tile(pos[..., 0:1], (1, 1, 1, 7)),
         jnp.tile(pos[..., 1:2], (1, 1, 1, 7))], axis=-1)
    pos_sum = jnp.clip(jnp.sum(pos, axis=(1, 2, 3)).reshape(-1, 1, 1, 1), 1, None)
    neg_sum = jnp.clip(jnp.sum(neg, axis=(1, 2, 3)).reshape(-1, 1, 1, 1), 1, None)
    sigma2 = gamma * gamma
    diffs = reg * pos_for_reg - tgt * pos_for_reg
    signs = (jnp.abs(diffs) < 1.0 / sigma2).astype(jnp.float32)
    sl = diffs * diffs * 0.5 * sigma2 * signs + (jnp.abs(diffs) - 0.5 / sigma2) * (1 - signs)
    reg_loss = jnp.sum(sl / pos_sum)
    cls_pos = -pos * jnp.log(p + 1e-6) / pos_sum
    cls_neg = -neg * jnp.log(1 - p + 1e-6) / neg_sum
    cls_loss = jnp.sum(alpha * cls_pos + beta * cls_neg)
    return (cls_loss + reg_loss, cls_loss, reg_loss,
            jnp.sum(cls_pos), jnp.sum(cls_neg))


if __name__ == "__main__":
    alpha, beta, gamma = 1.5, 1.0, 3.0   # VoxelNet defaults

    B, H, W = 2, 16, 16
    key = jax.random.PRNGKey(0)
    k1, k2, k3, k4, k5 = jax.random.split(key, 5)

    reg = jax.random.normal(k1, (B, 14, H, W), dtype=jnp.float32)          # NCHW
    p_pos = jax.nn.sigmoid(jax.random.normal(k2, (B, 2, H, W))) \
        .astype(jnp.float32)                                               # NCHW
    pos_equal_one = (jax.random.uniform(k3, (B, H, W, 2)) < 0.1).astype(jnp.float32)
    neg_equal_one = (jax.random.uniform(k4, (B, H, W, 2)) < 0.8).astype(jnp.float32)
    targets = jax.random.normal(k5, (B, H, W, 14), dtype=jnp.float32)

    # max_tile_hw=128 so the small demo actually exercises the spatial grid
    # axis (grid = (2, 2)); production calls use the 8192 default.
    outs = voxel_loss(reg, p_pos, pos_equal_one, neg_equal_one, targets,
                      alpha=alpha, beta=beta, gamma=gamma, max_tile_hw=128)
    outs = jax.block_until_ready(outs)

    refs = voxel_loss_ref(reg, p_pos, pos_equal_one, neg_equal_one, targets,
                          alpha, beta, gamma)
    for o, r in zip(outs, refs):
        assert jnp.allclose(o, r, rtol=1e-5, atol=1e-5), (o, r)

    print("KERNEL_OK")
</pallas_src>

<mosaic_0001>
module attributes {stable_mosaic.version = 11 : i64} {
  func.func @_voxel_loss_kernel(%arg0: i32, %arg1: i32, %arg2: memref<1x14x128xf32, #tpu.memory_space<vmem>>, %arg3: memref<1x2x128xf32, #tpu.memory_space<vmem>>, %arg4: memref<1x128x2xf32, #tpu.memory_space<vmem>>, %arg5: memref<1x128x2xf32, #tpu.memory_space<vmem>>, %arg6: memref<1x128x14xf32, #tpu.memory_space<vmem>>, %arg7: memref<1x1x8x128xf32, #tpu.memory_space<vmem>>) attributes {dimension_semantics = [#tpu.dimension_semantics<parallel>, #tpu.dimension_semantics<parallel>], iteration_bounds = array<i64: 2, 2>, scalar_prefetch = 0 : i64, scratch_operands = 0 : i64, tpu.core_type = #tpu.core_type<tc>, window_params = [{transform_indices = @transform_0, window_bounds = array<i64: 1, 14, 128>}, {transform_indices = @transform_1, window_bounds = array<i64: 1, 2, 128>}, {transform_indices = @transform_2, window_bounds = array<i64: 1, 128, 2>}, {transform_indices = @transform_3, window_bounds = array<i64: 1, 128, 2>}, {transform_indices = @transform_4, window_bounds = array<i64: 1, 128, 14>}, {transform_indices = @transform_5, window_bounds = array<i64: 1, 1, 8, 128>}]} {
    %c0 = arith.constant 0 : index
    %c0_0 = arith.constant 0 : index
    %c0_1 = arith.constant 0 : index
    %0 = vector.load %arg2[%c0, %c0_0, %c0_1] : memref<1x14x128xf32, #tpu.memory_space<vmem>>, vector<1x14x128xf32>
    %1 = vector.shape_cast %0 : vector<1x14x128xf32> to vector<14x128xf32>
    %c0_2 = arith.constant 0 : index
    %c0_3 = arith.constant 0 : index
    %c0_4 = arith.constant 0 : index
    %2 = vector.load %arg3[%c0_2, %c0_3, %c0_4] : memref<1x2x128xf32, #tpu.memory_space<vmem>>, vector<1x2x128xf32>
    %3 = vector.shape_cast %2 : vector<1x2x128xf32> to vector<2x128xf32>
    %c0_5 = arith.constant 0 : index
    %c0_6 = arith.constant 0 : index
    %c0_7 = arith.constant 0 : index
    %4 = vector.load %arg4[%c0_5, %c0_6, %c0_7] : memref<1x128x2xf32, #tpu.memory_space<vmem>>, vector<1x128x2xf32>
    %5 = vector.shape_cast %4 : vector<1x128x2xf32> to vector<128x2xf32>
    %c0_8 = arith.constant 0 : index
    %c0_9 = arith.constant 0 : index
    %c0_10 = arith.constant 0 : index
    %6 = vector.load %arg5[%c0_8, %c0_9, %c0_10] : memref<1x128x2xf32, #tpu.memory_space<vmem>>, vector<1x128x2xf32>
    %7 = vector.shape_cast %6 : vector<1x128x2xf32> to vector<128x2xf32>
    %c0_11 = arith.constant 0 : index
    %c0_12 = arith.constant 0 : index
    %c0_13 = arith.constant 0 : index
    %8 = vector.load %arg6[%c0_11, %c0_12, %c0_13] : memref<1x128x14xf32, #tpu.memory_space<vmem>>, vector<1x128x14xf32>
    %9 = vector.shape_cast %8 : vector<1x128x14xf32> to vector<128x14xf32>
    %10 = tpu.iota {dimensions = array<i32: 0>} : vector<14x14xi32>
    %11 = tpu.iota {dimensions = array<i32: 1>} : vector<14x14xi32>
    %12 = arith.cmpi eq, %10, %11 : vector<14x14xi32>
    %13 = arith.extui %12 : vector<14x14xi1> to vector<14x14xi32>
    %14 = arith.sitofp %13 : vector<14x14xi32> to vector<14x14xf32>
    %cst = arith.constant dense<0.000000e+00> : vector<14x128xf32>
    %15 = tpu.matmul %14, %9, %cst {dimension_numbers = #tpu.dot_dimension_numbers<[1], [1], [0], [0], [0, 0, 1, 0], [], []>, precision = #tpu.contract_precision<fp32>} : vector<14x14xf32>, vector<128x14xf32>, vector<14x128xf32> -> vector<14x128xf32>
    %16 = arith.subf %1, %15 : vector<14x128xf32>
    %17 = math.absf %16 : vector<14x128xf32>
    %cst_14 = arith.constant 0.111111112 : f32
    %18 = vector.broadcast %cst_14 : f32 to vector<14x128xf32>
    %19 = arith.cmpf olt, %17, %18 : vector<14x128xf32>
    %20 = arith.mulf %16, %16 : vector<14x128xf32>
    %cst_15 = arith.constant 4.500000e+00 : f32
    %21 = vector.broadcast %cst_15 : f32 to vector<14x128xf32>
    %22 = arith.mulf %20, %21 : vector<14x128xf32>
    %cst_16 = arith.constant 0.055555556 : f32
    %23 = vector.broadcast %cst_16 : f32 to vector<14x128xf32>
    %24 = arith.subf %17, %23 : vector<14x128xf32>
    %25 = arith.select %19, %22, %24 : vector<14x128xi1>, vector<14x128xf32>
    %26 = vector.extract_strided_slice %25 {offsets = [0, 0], sizes = [7, 128], strides = [1, 1]} : vector<14x128xf32> to vector<7x128xf32>
    %cst_17 = arith.constant dense<0.000000e+00> : vector<128xf32>
    %27 = vector.multi_reduction <add>, %26, %cst_17 [0] : vector<7x128xf32> to vector<128xf32>
    %28 = vector.shape_cast %27 : vector<128xf32> to vector<1x128xf32>
    %29 = vector.extract_strided_slice %25 {offsets = [7, 0], sizes = [7, 128], strides = [1, 1]} : vector<14x128xf32> to vector<7x128xf32>
    %cst_18 = arith.constant dense<0.000000e+00> : vector<128xf32>
    %30 = vector.multi_reduction <add>, %29, %cst_18 [0] : vector<7x128xf32> to vector<128xf32>
    %31 = vector.shape_cast %30 : vector<128xf32> to vector<1x128xf32>
    %32 = tpu.concatenate %28, %31 in 0 : vector<1x128xf32>, vector<1x128xf32> -> vector<2x128xf32>
    %33 = tpu.iota {dimensions = array<i32: 0>} : vector<2x2xi32>
    %34 = tpu.iota {dimensions = array<i32: 1>} : vector<2x2xi32>
    %35 = arith.cmpi eq, %33, %34 : vector<2x2xi32>
    %36 = arith.extui %35 : vector<2x2xi1> to vector<2x2xi32>
    %37 = arith.sitofp %36 : vector<2x2xi32> to vector<2x2xf32>
    %cst_19 = arith.constant dense<0.000000e+00> : vector<2x2xf32>
    %38 = tpu.matmul %32, %5, %cst_19 {dimension_numbers = #tpu.dot_dimension_numbers<[1], [0], [0], [1], [0, 0, 1, 1], [], []>, precision = #tpu.contract_precision<fp32>} : vector<2x128xf32>, vector<128x2xf32>, vector<2x2xf32> -> vector<2x2xf32>
    %39 = arith.mulf %38, %37 : vector<2x2xf32>
    %40 = vector.shape_cast %39 : vector<2x2xf32> to vector<1x2x2xf32>
    %cst_20 = arith.constant dense<0.000000e+00> : vector<1xf32>
    %41 = vector.multi_reduction <add>, %40, %cst_20 [1, 2] : vector<1x2x2xf32> to vector<1xf32>
    %42 = vector.shape_cast %41 : vector<1xf32> to vector<1x1x1xf32>
    %43 = vector.extract %42[0, 0, 0] : f32 from vector<1x1x1xf32>
    %cst_21 = arith.constant 9.99999997E-7 : f32
    %44 = vector.broadcast %cst_21 : f32 to vector<2x128xf32>
    %45 = arith.addf %3, %44 : vector<2x128xf32>
    %46 = math.log %45 : vector<2x128xf32>
    %cst_22 = arith.constant 0.000000e+00 : f32
    %47 = vector.broadcast %cst_22 : f32 to vector<2x128xf32>
    %48 = arith.subf %47, %46 : vector<2x128xf32>
    %cst_23 = arith.constant dense<0.000000e+00> : vector<2x2xf32>
    %49 = tpu.matmul %48, %5, %cst_23 {dimension_numbers = #tpu.dot_dimension_numbers<[1], [0], [0], [1], [0, 0, 1, 1], [], []>, precision = #tpu.contract_precision<fp32>} : vector<2x128xf32>, vector<128x2xf32>, vector<2x2xf32> -> vector<2x2xf32>
    %50 = arith.mulf %49, %37 : vector<2x2xf32>
    %51 = vector.shape_cast %50 : vector<2x2xf32> to vector<1x2x2xf32>
    %cst_24 = arith.constant dense<0.000000e+00> : vector<1xf32>
    %52 = vector.multi_reduction <add>, %51, %cst_24 [1, 2] : vector<1x2x2xf32> to vector<1xf32>
    %53 = vector.shape_cast %52 : vector<1xf32> to vector<1x1x1xf32>
    %54 = vector.extract %53[0, 0, 0] : f32 from vector<1x1x1xf32>
    %cst_25 = arith.constant 1.000000e+00 : f32
    %55 = vector.broadcast %cst_25 : f32 to vector<2x128xf32>
    %56 = arith.subf %55, %3 : vector<2x128xf32>
    %cst_26 = arith.constant 9.99999997E-7 : f32
    %57 = vector.broadcast %cst_26 : f32 to vector<2x128xf32>
    %58 = arith.addf %56, %57 : vector<2x128xf32>
    %59 = math.log %58 : vector<2x128xf32>
    %cst_27 = arith.constant 0.000000e+00 : f32
    %60 = vector.broadcast %cst_27 : f32 to vector<2x128xf32>
    %61 = arith.subf %60, %59 : vector<2x128xf32>
    %cst_28 = arith.constant dense<0.000000e+00> : vector<2x2xf32>
    %62 = tpu.matmul %61, %7, %cst_28 {dimension_numbers = #tpu.dot_dimension_numbers<[1], [0], [0], [1], [0, 0, 1, 1], [], []>, precision = #tpu.contract_precision<fp32>} : vector<2x128xf32>, vector<128x2xf32>, vector<2x2xf32> -> vector<2x2xf32>
    %63 = arith.mulf %62, %37 : vector<2x2xf32>
    %64 = vector.shape_cast %63 : vector<2x2xf32> to vector<1x2x2xf32>
    %cst_29 = arith.constant dense<0.000000e+00> : vector<1xf32>
    %65 = vector.multi_reduction <add>, %64, %cst_29 [1, 2] : vector<1x2x2xf32> to vector<1xf32>
    %66 = vector.shape_cast %65 : vector<1xf32> to vector<1x1x1xf32>
    %67 = vector.extract %66[0, 0, 0] : f32 from vector<1x1x1xf32>
    %68 = vector.shape_cast %5 : vector<128x2xf32> to vector<1x128x2xf32>
    %cst_30 = arith.constant dense<0.000000e+00> : vector<1xf32>
    %69 = vector.multi_reduction <add>, %68, %cst_30 [1, 2] : vector<1x128x2xf32> to vector<1xf32>
    %70 = vector.shape_cast %69 : vector<1xf32> to vector<1x1x1xf32>
    %71 = vector.extract %70[0, 0, 0] : f32 from vector<1x1x1xf32>
    %72 = vector.shape_cast %7 : vector<128x2xf32> to vector<1x128x2xf32>
    %cst_31 = arith.constant dense<0.000000e+00> : vector<1xf32>
    %73 = vector.multi_reduction <add>, %72, %cst_31 [1, 2] : vector<1x128x2xf32> to vector<1xf32>
    %74 = vector.shape_cast %73 : vector<1xf32> to vector<1x1x1xf32>
    %75 = vector.extract %74[0, 0, 0] : f32 from vector<1x1x1xf32>
    %76 = tpu.iota {dimensions = array<i32: 0>} : vector<8x128xi32>
    %c0_i32 = arith.constant 0 : i32
    %77 = vector.broadcast %c0_i32 : i32 to vector<8x128xi32>
    %78 = arith.cmpi eq, %76, %77 : vector<8x128xi32>
    %c1_i32 = arith.constant 1 : i32
    %79 = vector.broadcast %c1_i32 : i32 to vector<8x128xi32>
    %80 = arith.cmpi eq, %76, %79 : vector<8x128xi32>
    %c2_i32 = arith.constant 2 : i32
    %81 = vector.broadcast %c2_i32 : i32 to vector<8x128xi32>
    %82 = arith.cmpi eq, %76, %81 : vector<8x128xi32>
    %c3_i32 = arith.constant 3 : i32
    %83 = vector.broadcast %c3_i32 : i32 to vector<8x128xi32>
    %84 = arith.cmpi eq, %76, %83 : vector<8x128xi32>
    %85 = vector.broadcast %71 : f32 to vector<8x128xf32>
    %86 = vector.broadcast %75 : f32 to vector<8x128xf32>
    %87 = arith.select %84, %85, %86 : vector<8x128xi1>, vector<8x128xf32>
    %88 = vector.broadcast %67 : f32 to vector<8x128xf32>
    %89 = arith.select %82, %88, %87 : vector<8x128xi1>, vector<8x128xf32>
    %90 = vector.broadcast %54 : f32 to vector<8x128xf32>
    %91 = arith.select %80, %90, %89 : vector<8x128xi1>, vector<8x128xf32>
    %92 = vector.broadcast %43 : f32 to vector<8x128xf32>
    %93 = arith.select %78, %92, %91 : vector<8x128xi1>, vector<8x128xf32>
    %c0_32 = arith.constant 0 : index
    %c0_33 = arith.constant 0 : index
    %c0_34 = arith.constant 0 : index
    %c0_35 = arith.constant 0 : index
    %94 = vector.load %arg7[%c0_32, %c0_33, %c0_34, %c0_35] : memref<1x1x8x128xf32, #tpu.memory_space<vmem>>, vector<1x1x8x128xf32>
    %95 = vector.shape_cast %94 : vector<1x1x8x128xf32> to vector<8x128xf32>
    %96 = vector.shape_cast %93 : vector<8x128xf32> to vector<1x1x8x128xf32>
    tpu.vector_store %arg7[%c0_32, %c0_33, %c0_34, %c0_35], %96 {strides = array<i32>} : memref<1x1x8x128xf32, #tpu.memory_space<vmem>>, vector<1x1x8x128xf32>,
    return
  }
  func.func @transform_0(%arg0: i32, %arg1: i32) -> (i32, i32, i32) {
    %c0_i32 = arith.constant 0 : i32
    %c0_i32_0 = arith.constant 0 : i32
    return %arg0, %c0_i32, %arg1 : i32, i32, i32
  }
  func.func @transform_1(%arg0: i32, %arg1: i32) -> (i32, i32, i32) {
    %c0_i32 = arith.constant 0 : i32
    %c0_i32_0 = arith.constant 0 : i32
    return %arg0, %c0_i32, %arg1 : i32, i32, i32
  }
  func.func @transform_2(%arg0: i32, %arg1: i32) -> (i32, i32, i32) {
    %c0_i32 = arith.constant 0 : i32
    %c0_i32_0 = arith.constant 0 : i32
    return %arg0, %arg1, %c0_i32 : i32, i32, i32
  }
  func.func @transform_3(%arg0: i32, %arg1: i32) -> (i32, i32, i32) {
    %c0_i32 = arith.constant 0 : i32
    %c0_i32_0 = arith.constant 0 : i32
    return %arg0, %arg1, %c0_i32 : i32, i32, i32
  }
  func.func @transform_4(%arg0: i32, %arg1: i32) -> (i32, i32, i32) {
    %c0_i32 = arith.constant 0 : i32
    %c0_i32_0 = arith.constant 0 : i32
    return %arg0, %arg1, %c0_i32 : i32, i32, i32
  }
  func.func @transform_5(%arg0: i32, %arg1: i32) -> (i32, i32, i32, i32) {
    %c0_i32 = arith.constant 0 : i32
    %c0_i32_0 = arith.constant 0 : i32
    %c0_i32_1 = arith.constant 0 : i32
    return %arg0, %arg1, %c0_i32, %c0_i32_0 : i32, i32, i32, i32
  }
}

</mosaic_0001>

<llo_original>
// kernel: tpu_custom_call.1
$region0: #{tpu_custom_call.1}
  #allocation0 [shape = 'u32[]', space=smem, size = 0x4, offset = 0x4, fixed_abs, tag = 'smem constant byte address 0x4 - core index']
  #allocation1 [shape = 'u32[144,128]{1,0:T(1,128)}', space=vmem, size = 0x12000, scoped, tag = 'internal scratch']
  %s0 = inlined_call_operand.vmem [shape: f32[2,14,256], index: 0, kind: input, shape index: {}]
  %s1 = inlined_call_operand.vmem [shape: f32[2,2,256], index: 1, kind: input, shape index: {}]
  %s2 = inlined_call_operand.vmem [shape: f32[2,256,2], index: 2, kind: input, shape index: {}]
  %s3 = inlined_call_operand.vmem [shape: f32[2,256,2], index: 3, kind: input, shape index: {}]
  %s4 = inlined_call_operand.vmem [shape: f32[2,256,14], index: 4, kind: input, shape index: {}]
  %s5 = inlined_call_operand.hbm [shape: f32[2,2,8,128], index: 5, kind: output, shape index: {}]
  %s6 = sld [smem:[#allocation0]]
  $region91: #{tpu_custom_call.1} parent=0
    _
  %s8 = ssub.s32 1, %s6
  %s9 = scalar_select 0, %s8, %s6
  $region1: #{tpu_custom_call.1} parent=0
    #allocation2 [shape = 'u8[16384]{0}', space=vmem, size = 0x4000, scoped, tag = 'input window, operand 0']
    #allocation3 [shape = 'u8[8192]{0}', space=vmem, size = 0x2000, scoped, tag = 'output window, operand 0']
    #allocation4 [shape = 's32[2]{0}', space=sflag, size = 0x8, scoped, tag = 'scoped memory for tpu_custom_call.1']
    %10 = vsyncpa [#allocation4], 0
    %s11 = scalar_lea.sflag [#allocation4], 1
    %12 = vsyncpa %s11, 0
    loop: start=0, step=1, limit=6
    $region2: #{tpu_custom_call.1} parent=1 // loop_pre_header
      _
    $region3: #{tpu_custom_call.1} parent=1 // loop_header
      %s14 = sphi 0, %s18
      %p15 = scmp.ge.s32.totalorder %s14, 6
      %s21 = sphi 0, %s33
      %s22 = sphi 0, %s29
      %s23 = sphi 0, %s21
      %s24 = sphi 0, %s22
      %s25 = sphi 0, %s23
      %s26 = sphi 0, %s24
      %s38 = sphi 0, %s40
      %s41 = sphi 0, %s38
      %s42 = sphi 0, %s41
      %s58 = sphi 0, %s42
      %s66 = sphi 0, %s68
      %s69 = sphi 0, %s66
      %s70 = sphi 0, %s69
      %s86 = sphi 0, %s70
      %s94 = sphi 0, %s96
      %s97 = sphi 0, %s94
      %s98 = sphi 0, %s97
      %s114 = sphi 0, %s98
      %s122 = sphi 0, %s124
      %s125 = sphi 0, %s122
      %s126 = sphi 0, %s125
      %s142 = sphi 0, %s126
      %s150 = sphi 0, %s152
      %s153 = sphi 0, %s150
      %s154 = sphi 0, %s153
      %s170 = sphi 0, %s154
      %s178 = sphi 0, %s180
      %s181 = sphi 0, %s178
      %s182 = sphi 0, %s181
      %s198 = sphi 0, %s182
    $region4: #{tpu_custom_call.1} parent=1 // loop_header_branch
      %17 = sbr.rel (%p15) target = $region8
    $region5: #{tpu_custom_call.1} parent=1 // loop_body
      %s19 = ssub.s32 %s14, 1
      %s20 = ssub.s32 %s14, 2
      %s27 = sadd.s32 1, %s22
      %p28 = scmp.ge.s32.totalorder %s27, 2
      %s29 = scalar_select %p28, 0, %s27
      %s30 = sadd.s32 1, %s21
      %s31 = scalar_select %p28, %s30, %s21
      %p32 = scmp.ge.s32.totalorder %s31, 2
      %s33 = scalar_select %p32, 0, %s31
      %s34 = ssub.s32 %s21, %s33
      %s35 = ssub.s32 %s22, %s29
      %s36 = sor.u32 %s34, %s35
      %p37 = scmp.eq.s32.totalorder %s36, 0
      %s39 = sadd.s32 %s38, 1
      %s40 = scalar_select %p37, %s38, %s39
      %p43 = pneg %p37
      %p44 = scmp.eq.s32.totalorder %s14, 3
      %p45 = por %p43, %p44
      %p46 = scmp.ne.s32.totalorder %s38, %s41
      %p47 = scmp.eq.s32.totalorder %s14, 0
      %p48 = por %p46, %p47
      %p49 = scmp.ne.s32.totalorder %s38, %s41
      %p50 = scmp.eq.s32.totalorder %s19, 3
      %p51 = por %p49, %p50
      %p52 = scmp.ne.s32.totalorder %s41, %s42
      %p53 = scmp.eq.s32.totalorder %s19, 0
      %p54 = por %p52, %p53
      %p55 = scmp.ne.s32.totalorder %s41, %s42
      %p56 = scmp.eq.s32.totalorder %s20, 3
      %p57 = por %p55, %p56
      %p59 = scmp.ne.s32.totalorder %s42, %s58
      %p60 = scmp.eq.s32.totalorder %s20, 0
      %p61 = por %p59, %p60
      %s62 = ssub.s32 %s21, %s33
      %s63 = ssub.s32 %s22, %s29
      %s64 = sor.u32 %s62, %s63
      %p65 = scmp.eq.s32.totalorder %s64, 0
      %s67 = sadd.s32 %s66, 1
      %s68 = scalar_select %p65, %s66, %s67
      %p71 = pneg %p65
      %p72 = scmp.eq.s32.totalorder %s14, 3
      %p73 = por %p71, %p72
      %p74 = scmp.ne.s32.totalorder %s66, %s69
      %p75 = scmp.eq.s32.totalorder %s14, 0
      %p76 = por %p74, %p75
      %p77 = scmp.ne.s32.totalorder %s66, %s69
      %p78 = scmp.eq.s32.totalorder %s19, 3
      %p79 = por %p77, %p78
      %p80 = scmp.ne.s32.totalorder %s69, %s70
      %p81 = scmp.eq.s32.totalorder %s19, 0
      %p82 = por %p80, %p81
      %p83 = scmp.ne.s32.totalorder %s69, %s70
      %p84 = scmp.eq.s32.totalorder %s20, 3
      %p85 = por %p83, %p84
      %p87 = scmp.ne.s32.totalorder %s70, %s86
      %p88 = scmp.eq.s32.totalorder %s20, 0
      %p89 = por %p87, %p88
      %s90 = ssub.s32 %s21, %s33
      %s91 = ssub.s32 %s22, %s29
      %s92 = sor.u32 %s90, %s91
      %p93 = scmp.eq.s32.totalorder %s92, 0
      %s95 = sadd.s32 %s94, 1
      %s96 = scalar_select %p93, %s94, %s95
      %p99 = pneg %p93
      %p100 = scmp.eq.s32.totalorder %s14, 3
      %p101 = por %p99, %p100
      %p102 = scmp.ne.s32.totalorder %s94, %s97
      %p103 = scmp.eq.s32.totalorder %s14, 0
      %p104 = por %p102, %p103
      %p105 = scmp.ne.s32.totalorder %s94, %s97
      %p106 = scmp.eq.s32.totalorder %s19, 3
      %p107 = por %p105, %p106
      %p108 = scmp.ne.s32.totalorder %s97, %s98
      %p109 = scmp.eq.s32.totalorder %s19, 0
      %p110 = por %p108, %p109
      %p111 = scmp.ne.s32.totalorder %s97, %s98
      %p112 = scmp.eq.s32.totalorder %s20, 3
      %p113 = por %p111, %p112
      %p115 = scmp.ne.s32.totalorder %s98, %s114
      %p116 = scmp.eq.s32.totalorder %s20, 0
      %p117 = por %p115, %p116
      %s118 = ssub.s32 %s21, %s33
      %s119 = ssub.s32 %s22, %s29
      %s120 = sor.u32 %s118, %s119
      %p121 = scmp.eq.s32.totalorder %s120, 0
      %s123 = sadd.s32 %s122, 1
      %s124 = scalar_select %p121, %s122, %s123
      %p127 = pneg %p121
      %p128 = scmp.eq.s32.totalorder %s14, 3
      %p129 = por %p127, %p128
      %p130 = scmp.ne.s32.totalorder %s122, %s125
      %p131 = scmp.eq.s32.totalorder %s14, 0
      %p132 = por %p130, %p131
      %p133 = scmp.ne.s32.totalorder %s122, %s125
      %p134 = scmp.eq.s32.totalorder %s19, 3
      %p135 = por %p133, %p134
      %p136 = scmp.ne.s32.totalorder %s125, %s126
      %p137 = scmp.eq.s32.totalorder %s19, 0
      %p138 = por %p136, %p137
      %p139 = scmp.ne.s32.totalorder %s125, %s126
      %p140 = scmp.eq.s32.totalorder %s20, 3
      %p141 = por %p139, %p140
      %p143 = scmp.ne.s32.totalorder %s126, %s142
      %p144 = scmp.eq.s32.totalorder %s20, 0
      %p145 = por %p143, %p144
      %s146 = ssub.s32 %s21, %s33
      %s147 = ssub.s32 %s22, %s29
      %s148 = sor.u32 %s146, %s147
      %p149 = scmp.eq.s32.totalorder %s148, 0
      %s151 = sadd.s32 %s150, 1
      %s152 = scalar_select %p149, %s150, %s151
      %p155 = pneg %p149
      %p156 = scmp.eq.s32.totalorder %s14, 3
      %p157 = por %p155, %p156
      %p158 = scmp.ne.s32.totalorder %s150, %s153
      %p159 = scmp.eq.s32.totalorder %s14, 0
      %p160 = por %p158, %p159
      %p161 = scmp.ne.s32.totalorder %s150, %s153
      %p162 = scmp.eq.s32.totalorder %s19, 3
      %p163 = por %p161, %p162
      %p164 = scmp.ne.s32.totalorder %s153, %s154
      %p165 = scmp.eq.s32.totalorder %s19, 0
      %p166 = por %p164, %p165
      %p167 = scmp.ne.s32.totalorder %s153, %s154
      %p168 = scmp.eq.s32.totalorder %s20, 3
      %p169 = por %p167, %p168
      %p171 = scmp.ne.s32.totalorder %s154, %s170
      %p172 = scmp.eq.s32.totalorder %s20, 0
      %p173 = por %p171, %p172
      %s174 = ssub.s32 %s21, %s33
      %s175 = ssub.s32 %s22, %s29
      %s176 = sor.u32 %s174, %s175
      %p177 = scmp.eq.s32.totalorder %s176, 0
      %s179 = sadd.s32 %s178, 1
      %s180 = scalar_select %p177, %s178, %s179
      %p183 = pneg %p177
      %p184 = scmp.eq.s32.totalorder %s14, 3
      %p185 = por %p183, %p184
      %p186 = scmp.ne.s32.totalorder %s178, %s181
      %p187 = scmp.eq.s32.totalorder %s14, 0
      %p188 = por %p186, %p187
      %p189 = scmp.ne.s32.totalorder %s178, %s181
      %p190 = scmp.eq.s32.totalorder %s19, 3
      %p191 = por %p189, %p190
      %p192 = scmp.ne.s32.totalorder %s181, %s182
      %p193 = scmp.eq.s32.totalorder %s19, 0
      %p194 = por %p192, %p193
      %p195 = scmp.ne.s32.totalorder %s181, %s182
      %p196 = scmp.eq.s32.totalorder %s20, 3
      %p197 = por %p195, %p196
      %p199 = scmp.ne.s32.totalorder %s182, %s198
      %p200 = scmp.eq.s32.totalorder %s20, 0
      %p201 = por %p199, %p200
      %p202 = scmp.le.s32.totalorder 1, %s14
      %p203 = scmp.lt.s32.totalorder %s14, 5
      %p204 = pnand %p202, %p203
      %p205 = pneg %p204
      // Predicated region
      $region9: #{tpu_custom_call.1} parent=5 // pred_check
        _
      $region10: #{tpu_custom_call.1} parent=5 // pred_check_branch
        %207 = sbr.rel (%p204) target = $region12
      $region11: #{tpu_custom_call.1} parent=5 // pred_region
        %s208 = ssub.s32 %s14, 1
      $region12: #{tpu_custom_call.1} parent=5 // pred_fallthru
        _
      %p209 = scmp.lt.s32.totalorder %s14, 4
      // Predicated region
      $region13: #{tpu_custom_call.1} parent=5 // pred_check
        %p210 = pneg %p209
      $region14: #{tpu_custom_call.1} parent=5 // pred_check_branch
        %212 = sbr.rel (%p210) target = $region16
      $region15: #{tpu_custom_call.1} parent=5 // pred_region
        // Predicated region
        $region17: #{tpu_custom_call.1} parent=15 // pred_check
          %p213 = pneg %p48
        $region18: #{tpu_custom_call.1} parent=15 // pred_check_branch
          %215 = sbr.rel (%p213) target = $region20
        $region19: #{tpu_custom_call.1} parent=15 // pred_region
          %s216 = sand.u32 %s38, 1
          %s217 = sand.u32 %s38, 1
          %s218 = smul.addr %s217, 16
          %s219 = scalar_lea.vmem [#allocation2], %s218
          %s220 = smul.addr %s21, 4
          %s221 = sadd.s32 %s22, %s220
          %s222 = smul.addr %s221, 8
          %s223 = scalar_lea.vmem %s0, %s222
          // Predicated region
          $region21: #{tpu_custom_call.1} parent=19 // pred_check
            _
          $region22: #{tpu_custom_call.1} parent=19 // pred_check_branch
            %225 = sbr.rel (0) target = $region24
          $region23: #{tpu_custom_call.1} parent=19 // pred_region
            // Predicated region
            $region25: #{tpu_custom_call.1} parent=23 // pred_check
              _
            $region26: #{tpu_custom_call.1} parent=23 // pred_check_branch
              %227 = sbr.rel (0) target = $region28
            $region27: #{tpu_custom_call.1} parent=23 // pred_region
              // Predicated region
              $region40: #{tpu_custom_call.1} parent=27 // pred_check
                _
              $region41: #{tpu_custom_call.1} parent=27 // pred_check_branch
                %245 = sbr.rel (0) target = $region43
              $region42: #{tpu_custom_call.1} parent=27 // pred_region
                loop: start=0, step=1, limit=1
                $region44: #{tpu_custom_call.1} parent=42 // loop_pre_header
                  _
                $region45: #{tpu_custom_call.1} parent=42 // loop_header
                  %s247 = sphi 0, %s251
                  %p248 = scmp.ge.s32.totalorder %s247, 1
                  %s252 = sphi %s223, %s223
                  %s253 = sphi %s219, %s219
                $region46: #{tpu_custom_call.1} parent=42 // loop_header_branch
                  %250 = sbr.rel (%p248) target = $region50
                $region47: #{tpu_custom_call.1} parent=42 // loop_body
                  %v254 = vld [vmem:[%s252] sm:$0xff]
                  %255 = vst [vmem:[%s253] sm:$0xff] %v254
                  %v256 = vld [vmem:[%s252 + $0x10] sm:$0xff]
                  %257 = vst [vmem:[%s253 + $0x8] sm:$0xff] %v256
                $region48: #{tpu_custom_call.1} parent=42 // loop_footer
                  %s251 = sadd.s32 1, %s247
                $region49: #{tpu_custom_call.1} parent=42 // loop_footer_branch
                  %246 = sbr.rel target = $region45
                $region50: #{tpu_custom_call.1} parent=42 // loop_exit
                  _
              $region43: #{tpu_custom_call.1} parent=27 // pred_fallthru
                _
              // Predicated region
              $region51: #{tpu_custom_call.1} parent=27 // pred_check
                _
              $region52: #{tpu_custom_call.1} parent=27 // pred_check_branch
                %259 = sbr.rel target = $region54
              $region53: #{tpu_custom_call.1} parent=27 // pred_region
                _
              $region54: #{tpu_custom_call.1} parent=27 // pred_fallthru
                _
            $region28: #{tpu_custom_call.1} parent=23 // pred_fallthru
              _
            // Predicated region
            $region29: #{tpu_custom_call.1} parent=23 // pred_check
              _
            $region30: #{tpu_custom_call.1} parent=23 // pred_check_branch
              %229 = sbr.rel target = $region32
            $region31: #{tpu_custom_call.1} parent=23 // pred_region
              %s231 = ssub.s32 256, 1
              loop: start=0, step=1, limit=1
              $region33: #{tpu_custom_call.1} parent=31 // loop_pre_header
                _
              $region34: #{tpu_custom_call.1} parent=31 // loop_header
                %s233 = sphi 0, %s237
                %p234 = scmp.ge.s32.totalorder %s233, 1
                %s238 = sphi %s223, %s223
                %s239 = sphi %s219, %s219
              $region35: #{tpu_custom_call.1} parent=31 // loop_header_branch
                %236 = sbr.rel (%p234) target = $region39
              $region36: #{tpu_custom_call.1} parent=31 // loop_body
                %v240 = vld [vmem:[%s238] sm:%s231]
                %241 = vst [vmem:[%s239] sm:%s231] %v240
                %v242 = vld [vmem:[%s238 + $0x10] sm:%s231]
                %243 = vst [vmem:[%s239 + $0x8] sm:%s231] %v242
              $region37: #{tpu_custom_call.1} parent=31 // loop_footer
                %s237 = sadd.s32 1, %s233
              $region38: #{tpu_custom_call.1} parent=31 // loop_footer_branch
                %232 = sbr.rel target = $region34
              $region39: #{tpu_custom_call.1} parent=31 // loop_exit
                _
            $region32: #{tpu_custom_call.1} parent=23 // pred_fallthru
              _
          $region24: #{tpu_custom_call.1} parent=19 // pred_fallthru
            _
          %260 = vnop
        $region20: #{tpu_custom_call.1} parent=15 // pred_fallthru
          _
        // Predicated region
        $region55: #{tpu_custom_call.1} parent=15 // pred_check
          %p261 = pneg %p76
        $region56: #{tpu_custom_call.1} parent=15 // pred_check_branch
          %263 = sbr.rel (%p261) target = $region58
        $region57: #{tpu_custom_call.1} parent=15 // pred_region
          %p264 = scmp.lt.s32.totalorder %s21, 1
          %s265 = scalar_select %p264, %s21, 1
          %p266 = scmp.lt.s32.totalorder %s22, 1
          %s267 = scalar_select %p266, %s22, 1
          %s268 = smul.addr %s265, 2
          %s269 = sadd.s32 %s267, %s268
          %s270 = smul.addr %s269, 2
          %s271 = scalar_lea.vmem %s1, %s270
        $region58: #{tpu_custom_call.1} parent=15 // pred_fallthru
          _
        // Predicated region
        $region59: #{tpu_custom_call.1} parent=15 // pred_check
          %p272 = pneg %p104
        $region60: #{tpu_custom_call.1} parent=15 // pred_check_branch
          %274 = sbr.rel (%p272) target = $region62
        $region61: #{tpu_custom_call.1} parent=15 // pred_region
          %s275 = smul.u32 16, %s22
          %p276 = scmp.lt.s32.totalorder %s21, 1
          %s277 = scalar_select %p276, %s21, 1
          %p278 = scmp.lt.s32.totalorder %s275, 31
          %s279 = scalar_select %p278, %s275, 31
          %s280 = smul.addr %s277, 32
          %s281 = sadd.s32 %s279, %s280
          %s282 = smul.addr %s281, 8
          %s283 = scalar_lea.vmem %s2, %s282
          %s284 = smul.u32 16, %s22
        $region62: #{tpu_custom_call.1} parent=15 // pred_fallthru
          _
        // Predicated region
        $region63: #{tpu_custom_call.1} parent=15 // pred_check
          %p285 = pneg %p132
        $region64: #{tpu_custom_call.1} parent=15 // pred_check_branch
          %287 = sbr.rel (%p285) target = $region66
        $region65: #{tpu_custom_call.1} parent=15 // pred_region
          %s288 = smul.u32 16, %s22
          %p289 = scmp.lt.s32.totalorder %s21, 1
          %s290 = scalar_select %p289, %s21, 1
          %p291 = scmp.lt.s32.totalorder %s288, 31
          %s292 = scalar_select %p291, %s288, 31
          %s293 = smul.addr %s290, 32
          %s294 = sadd.s32 %s292, %s293
          %s295 = smul.addr %s294, 8
          %s296 = scalar_lea.vmem %s3, %s295
          %s297 = smul.u32 16, %s22
        $region66: #{tpu_custom_call.1} parent=15 // pred_fallthru
          _
        // Predicated region
        $region67: #{tpu_custom_call.1} parent=15 // pred_check
          %p298 = pneg %p160
        $region68: #{tpu_custom_call.1} parent=15 // pred_check_branch
          %300 = sbr.rel (%p298) target = $region70
        $region69: #{tpu_custom_call.1} parent=15 // pred_region
          %s301 = smul.u32 16, %s22
          %p302 = scmp.lt.s32.totalorder %s21, 1
          %s303 = scalar_select %p302, %s21, 1
          %p304 = scmp.lt.s32.totalorder %s301, 31
          %s305 = scalar_select %p304, %s301, 31
          %s306 = smul.addr %s303, 32
          %s307 = sadd.s32 %s305, %s306
          %s308 = smul.addr %s307, 8
          %s309 = scalar_lea.vmem %s4, %s308
          %s310 = smul.u32 16, %s22
        $region70: #{tpu_custom_call.1} parent=15 // pred_fallthru
          _
      $region16: #{tpu_custom_call.1} parent=5 // pred_fallthru
        _
      %p311 = scmp.le.s32.totalorder 1, %s14
      %p312 = scmp.lt.s32.totalorder %s14, 5
      %p313 = pnand %p311, %p312
      %p314 = pneg %p313
      // Predicated region
      $region71: #{tpu_custom_call.1} parent=5 // pred_check
        _
      $region72: #{tpu_custom_call.1} parent=5 // pred_check_branch
        %316 = sbr.rel (%p313) target = $region74
      $region73: #{tpu_custom_call.1} parent=5 // pred_region
        %s317 = ssub.s32 %s14, 1
        %s318 = sand.u32 %s41, 1
        %s319 = sand.u32 %s41, 1
        %s320 = smul.addr %s319, 16
        %s321 = scalar_lea.vmem [#allocation2], %s320
        // Predicated region
        $region75: #{tpu_custom_call.1} parent=73 // pred_check
          %p322 = pneg %p54
        $region76: #{tpu_custom_call.1} parent=73 // pred_check_branch
          %324 = sbr.rel (%p322) target = $region78
        $region77: #{tpu_custom_call.1} parent=73 // pred_region
          _
        $region78: #{tpu_custom_call.1} parent=73 // pred_fallthru
          _
        %s325 = sand.u32 %s41, 1
        %s326 = sand.u32 %s41, 1
        %s327 = smul.addr %s326, 16
        %s328 = scalar_lea.vmem [#allocation2], %s327
        %p329 = pneg %p54
        %p330 = pneg %p51
        %p331 = scmp.lt.s32.totalorder %s23, 1
        %s332 = scalar_select %p331, %s23, 1
        %p333 = scmp.lt.s32.totalorder %s24, 1
        %s334 = scalar_select %p333, %s24, 1
        %s335 = smul.addr %s332, 2
        %s336 = sadd.s32 %s334, %s335
        %s337 = smul.addr %s336, 2
        %s338 = scalar_lea.vmem %s1, %s337
        %p339 = pneg %p82
        %p340 = pneg %p79
        %s341 = smul.u32 16, %s24
        %p342 = scmp.lt.s32.totalorder %s23, 1
        %s343 = scalar_select %p342, %s23, 1
        %p344 = scmp.lt.s32.totalorder %s341, 31
        %s345 = scalar_select %p344, %s341, 31
        %s346 = smul.addr %s343, 32
        %s347 = sadd.s32 %s345, %s346
        %s348 = smul.addr %s347, 8
        %s349 = scalar_lea.vmem %s2, %s348
        %p350 = pneg %p110
        %p351 = pneg %p107
        %s352 = smul.u32 16, %s24
        %p353 = scmp.lt.s32.totalorder %s23, 1
        %s354 = scalar_select %p353, %s23, 1
        %p355 = scmp.lt.s32.totalorder %s352, 31
        %s356 = scalar_select %p355, %s352, 31
        %s357 = smul.addr %s354, 32
        %s358 = sadd.s32 %s356, %s357
        %s359 = smul.addr %s358, 8
        %s360 = scalar_lea.vmem %s3, %s359
        %p361 = pneg %p138
        %p362 = pneg %p135
        %s363 = smul.u32 16, %s24
        %p364 = scmp.lt.s32.totalorder %s23, 1
        %s365 = scalar_select %p364, %s23, 1
        %p366 = scmp.lt.s32.totalorder %s363, 31
        %s367 = scalar_select %p366, %s363, 31
        %s368 = smul.addr %s365, 32
        %s369 = sadd.s32 %s367, %s368
        %s370 = smul.addr %s369, 8
        %s371 = scalar_lea.vmem %s4, %s370
        %p372 = pneg %p166
        %p373 = pneg %p163
        %p374 = pneg %p194
        %p375 = pneg %p191
        %s376 = sand.u32 %s181, 1
        %s377 = scalar_lea.sflag [#allocation4], %s376
        %s378 = sand.u32 %s181, 1
        %s379 = smul.addr %s378, 8
        %s380 = scalar_lea.vmem [#allocation3], %s379
        %p381 = scmp.lt.s32.totalorder %s23, 1
        %s382 = scalar_select %p381, %s23, 1
        %p383 = scmp.lt.s32.totalorder %s24, 1
        %s384 = scalar_select %p383, %s24, 1
        %s385 = smul.addr %s382, 2
        %s386 = sadd.s32 %s384, %s385
        %s387 = smul.addr %s386, 2
        %s388 = scalar_lea.vmem %s1, %s387
        %s389 = smul.u32 16, %s24
        %p390 = scmp.lt.s32.totalorder %s23, 1
        %s391 = scalar_select %p390, %s23, 1
        %p392 = scmp.lt.s32.totalorder %s389, 31
        %s393 = scalar_select %p392, %s389, 31
        %s394 = smul.addr %s391, 32
        %s395 = sadd.s32 %s393, %s394
        %s396 = smul.addr %s395, 8
        %s397 = scalar_lea.vmem %s2, %s396
        %s398 = smul.u32 16, %s24
        %s399 = smul.u32 16, %s24
        %p400 = scmp.lt.s32.totalorder %s23, 1
        %s401 = scalar_select %p400, %s23, 1
        %p402 = scmp.lt.s32.totalorder %s399, 31
        %s403 = scalar_select %p402, %s399, 31
        %s404 = smul.addr %s401, 32
        %s405 = sadd.s32 %s403, %s404
        %s406 = smul.addr %s405, 8
        %s407 = scalar_lea.vmem %s3, %s406
        %s408 = smul.u32 16, %s24
        %s409 = smul.u32 16, %s24
        %p410 = scmp.lt.s32.totalorder %s23, 1
        %s411 = scalar_select %p410, %s23, 1
        %p412 = scmp.lt.s32.totalorder %s409, 31
        %s413 = scalar_select %p412, %s409, 31
        %s414 = smul.addr %s411, 32
        %s415 = sadd.s32 %s413, %s414
        %s416 = smul.addr %s415, 8
        %s417 = scalar_lea.vmem %s4, %s416
        %s418 = smul.u32 16, %s24
        %v419 = vld [vmem:[%s321] sm:$0xff]
        %v420 = vld [vmem:[%s321 + $0x8] sm:$0x3f]
        %v421 = vld [vmem:[%s388] sm:$0x3]
        %v422 = vld [vmem:[%s397] sm:$0xff]
        %v423 = vld [vmem:[%s397 + $0x8] sm:$0xff]
        %v424 = vld [vmem:[%s397 + $0x10] sm:$0xff]
        %v425 = vld [vmem:[%s397 + $0x18] sm:$0xff]
        %v426 = vld [vmem:[%s397 + $0x20] sm:$0xff]
        %v427 = vld [vmem:[%s397 + $0x28] sm:$0xff]
        %v428 = vld [vmem:[%s397 + $0x30] sm:$0xff]
        %v429 = vld [vmem:[%s397 + $0x38] sm:$0xff]
        %v430 = vld [vmem:[%s397 + $0x40] sm:$0xff]
        %v431 = vld [vmem:[%s397 + $0x48] sm:$0xff]
        %v432 = vld [vmem:[%s397 + $0x50] sm:$0xff]
        %v433 = vld [vmem:[%s397 + $0x58] sm:$0xff]
        %v434 = vld [vmem:[%s397 + $0x60] sm:$0xff]
        %v435 = vld [vmem:[%s397 + $0x68] sm:$0xff]
        %v436 = vld [vmem:[%s397 + $0x70] sm:$0xff]
        %v437 = vld [vmem:[%s397 + $0x78] sm:$0xff]
        %v438 = vld [vmem:[%s407] sm:$0xff]
        %v439 = vld [vmem:[%s407 + $0x8] sm:$0xff]
        %v440 = vld [vmem:[%s407 + $0x10] sm:$0xff]
        %v441 = vld [vmem:[%s407 + $0x18] sm:$0xff]
        %v442 = vld [vmem:[%s407 + $0x20] sm:$0xff]
        %v443 = vld [vmem:[%s407 + $0x28] sm:$0xff]
        %v444 = vld [vmem:[%s407 + $0x30] sm:$0xff]
        %v445 = vld [vmem:[%s407 + $0x38] sm:$0xff]
        %v446 = vld [vmem:[%s407 + $0x40] sm:$0xff]
        %v447 = vld [vmem:[%s407 + $0x48] sm:$0xff]
        %v448 = vld [vmem:[%s407 + $0x50] sm:$0xff]
        %v449 = vld [vmem:[%s407 + $0x58] sm:$0xff]
        %v450 = vld [vmem:[%s407 + $0x60] sm:$0xff]
        %v451 = vld [vmem:[%s407 + $0x68] sm:$0xff]
        %v452 = vld [vmem:[%s407 + $0x70] sm:$0xff]
        %v453 = vld [vmem:[%s407 + $0x78] sm:$0xff]
        %v454 = vld [vmem:[%s417] sm:$0xff]
        %v455 = vld [vmem:[%s417 + $0x8] sm:$0xff]
        %v456 = vld [vmem:[%s417 + $0x10] sm:$0xff]
        %v457 = vld [vmem:[%s417 + $0x18] sm:$0xff]
        %v458 = vld [vmem:[%s417 + $0x20] sm:$0xff]
        %v459 = vld [vmem:[%s417 + $0x28] sm:$0xff]
        %v460 = vld [vmem:[%s417 + $0x30] sm:$0xff]
        %v461 = vld [vmem:[%s417 + $0x38] sm:$0xff]
        %v462 = vld [vmem:[%s417 + $0x40] sm:$0xff]
        %v463 = vld [vmem:[%s417 + $0x48] sm:$0xff]
        %v464 = vld [vmem:[%s417 + $0x50] sm:$0xff]
        %v465 = vld [vmem:[%s417 + $0x58] sm:$0xff]
        %v466 = vld [vmem:[%s417 + $0x60] sm:$0xff]
        %v467 = vld [vmem:[%s417 + $0x68] sm:$0xff]
        %v468 = vld [vmem:[%s417 + $0x70] sm:$0xff]
        %v469 = vld [vmem:[%s417 + $0x78] sm:$0xff]
        %v470 = vlaneseq
        %v471 = vshrl.u32 %v470, 7
        %v472 = vadd.s32 %v471, 8
        %v473 = vlaneseq
        %v474 = vand.u32 %v473, 127
        %vm475 = vcmp.eq.s32.totalorder %v471, %v474
        %vm476 = vcmp.eq.s32.totalorder %v472, %v474
        %v477 = vsel %vm475, 1, 0
        %v478 = vsel %vm476, 1, 0
        %v479 = vcvt.s32.f32 %v477
        %v480 = vcvt.s32.f32 %v478
        %vm481 = vcmask 113664
        %v483 = vsel %vm481, %v479, 0
        %v486 = vsel %vm481, %v480, 0
        %v489 = vsel %vm481, %v454, 0
        %v492 = vsel %vm481, %v455, 0
        %v495 = vsel %vm481, %v456, 0
        %v498 = vsel %vm481, %v457, 0
        %v501 = vsel %vm481, %v458, 0
        %v504 = vsel %vm481, %v459, 0
        %v507 = vsel %vm481, %v460, 0
        %v510 = vsel %vm481, %v461, 0
        %v513 = vsel %vm481, %v462, 0
        %v516 = vsel %vm481, %v463, 0
        %v519 = vsel %vm481, %v464, 0
        %v522 = vsel %vm481, %v465, 0
        %v525 = vsel %vm481, %v466, 0
        %v528 = vsel %vm481, %v467, 0
        %v531 = vsel %vm481, %v468, 0
        %v534 = vsel %vm481, %v469, 0
        %536 = vmatprep.subr.mxu0 0.0
        %v537 = vand.u32 %v534, 4294901760
        %538 = vmatpush1.xpose.msra.mxu0 %v537
        %539 = vmatprep.subr.mxu0 0.0
        %v540 = vand.u32 %v531, 4294901760
        %541 = vmatpush1.xpose.msra.mxu0 %v540
        %542 = vmatprep.subr.mxu0 0.0
        %v543 = vand.u32 %v528, 4294901760
        %544 = vmatpush1.xpose.msra.mxu0 %v543
        %545 = vmatprep.subr.mxu0 0.0
        %v546 = vand.u32 %v525, 4294901760
        %547 = vmatpush1.xpose.msra.mxu0 %v546
        %548 = vmatprep.subr.mxu0 0.0
        %v549 = vand.u32 %v522, 4294901760
        %550 = vmatpush1.xpose.msra.mxu0 %v549
        %551 = vmatprep.subr.mxu0 0.0
        %v552 = vand.u32 %v519, 4294901760
        %553 = vmatpush1.xpose.msra.mxu0 %v552
        %554 = vmatprep.subr.mxu0 0.0
        %v555 = vand.u32 %v516, 4294901760
        %556 = vmatpush1.xpose.msra.mxu0 %v555
        %557 = vmatprep.subr.mxu0 0.0
        %v558 = vand.u32 %v513, 4294901760
        %559 = vmatpush1.xpose.msra.mxu0 %v558
        %560 = vmatprep.subr.mxu0 0.0
        %v561 = vand.u32 %v510, 4294901760
        %562 = vmatpush1.xpose.msra.mxu0 %v561
        %563 = vmatprep.subr.mxu0 0.0
        %v564 = vand.u32 %v507, 4294901760
        %565 = vmatpush1.xpose.msra.mxu0 %v564
        %566 = vmatprep.subr.mxu0 0.0
        %v567 = vand.u32 %v504, 4294901760
        %568 = vmatpush1.xpose.msra.mxu0 %v567
        %569 = vmatprep.subr.mxu0 0.0
        %v570 = vand.u32 %v501, 4294901760
        %571 = vmatpush1.xpose.msra.mxu0 %v570
        %572 = vmatprep.subr.mxu0 0.0
        %v573 = vand.u32 %v498, 4294901760
        %574 = vmatpush1.xpose.msra.mxu0 %v573
        %575 = vmatprep.subr.mxu0 0.0
        %v576 = vand.u32 %v495, 4294901760
        %577 = vmatpush1.xpose.msra.mxu0 %v576
        %578 = vmatprep.subr.mxu0 0.0
        %v579 = vand.u32 %v492, 4294901760
        %580 = vmatpush1.xpose.msra.mxu0 %v579
        %581 = vmatprep.subr.mxu0 0.0
        %v582 = vand.u32 %v489, 4294901760
        %583 = vmatpush1.xpose.msra.mxu0 %v582
        %584 = vmatprep.subr.mxu0 0.0
        %585 = vmatpush2.xpose.msra.mxu0 0.0
        %586 = vmatprep.subr.mxu0 0.0
        %587 = vmatpush2.xpose.msra.mxu0 0.0
        %588 = vmatprep.subr.mxu0 0.0
        %589 = vmatpush2.xpose.msra.mxu0 0.0
        %590 = vmatprep.subr.mxu0 0.0
        %591 = vmatpush2.xpose.msra.mxu0 0.0
        %592 = vmatprep.subr.mxu0 0.0
        %593 = vmatpush2.xpose.msra.mxu0 0.0
        %594 = vmatprep.subr.mxu0 0.0
        %595 = vmatpush2.xpose.msra.mxu0 0.0
        %596 = vmatprep.subr.mxu0 0.0
        %597 = vmatpush2.xpose.msra.mxu0 0.0
        %598 = vmatprep.subr.mxu0 0.0
        %599 = vmatpush2.xpose.msra.mxu0 0.0
        %600 = vmatprep.subr.mxu0 0.0
        %601 = vmatpush2.xpose.msra.mxu0 0.0
        %602 = vmatprep.subr.mxu0 0.0
        %603 = vmatpush2.xpose.msra.mxu0 0.0
        %604 = vmatprep.subr.mxu0 0.0
        %605 = vmatpush2.xpose.msra.mxu0 0.0
        %606 = vmatprep.subr.mxu0 0.0
        %607 = vmatpush2.xpose.msra.mxu0 0.0
        %608 = vmatprep.subr.mxu0 0.0
        %609 = vmatpush2.xpose.msra.mxu0 0.0
        %610 = vmatprep.subr.mxu0 0.0
        %611 = vmatpush2.xpose.msra.mxu0 0.0
        %612 = vmatprep.subr.mxu0 0.0
        %613 = vmatpush2.xpose.msra.mxu0 0.0
        %614 = vmatprep.subr.mxu0 0.0
        %615 = vmatpush2.xpose.msra.mxu0 0.0
        %616 = vmatprep.mubr.f32.mxu0 0.0
        %v617 = vand.u32 %v483, 4294901760
        %v618 = vsub.f32 %v483, %v617
        %v619 = vand.u32 %v618, 4294901760
        %v620 = vsub.f32 %v618, %v619
        %v621 = vand.u32 %v620, 4294901760
        %622 = vmatmul.mubr.f32.gmra.mxu0 %v621
        %v623 = vpop.f32.mrf.mxu0
        %v624 = vadd.f32 0.0, %v623
        %v625 = vpop.f32.mrf.mxu0
        %626 = vmatprep.mubr.f32.mxu0 0.0
        %v627 = vand.u32 %v486, 4294901760
        %v628 = vsub.f32 %v486, %v627
        %v629 = vand.u32 %v628, 4294901760
        %v630 = vsub.f32 %v628, %v629
        %v631 = vand.u32 %v630, 4294901760
        %632 = vmatmul.mubr.f32.gmra.mxu0 %v631
        %v633 = vpop.f32.mrf.mxu0
        %v634 = vadd.f32 0.0, %v633
        %v635 = vpop.f32.mrf.mxu0
        %636 = vdwg.mxu0
        %637 = vmatprep.subr.mxu0 0.0
        %v638 = vand.u32 %v534, 4294901760
        %v639 = vsub.f32 %v534, %v638
        %v640 = vand.u32 %v639, 4294901760
        %v641 = vsub.f32 %v639, %v640
        %v642 = vand.u32 %v641, 4294901760
        %643 = vmatpush1.xpose.msra.mxu0 %v642
        %644 = vmatprep.subr.mxu0 0.0
        %v645 = vand.u32 %v531, 4294901760
        %v646 = vsub.f32 %v531, %v645
        %v647 = vand.u32 %v646, 4294901760
        %v648 = vsub.f32 %v646, %v647
        %v649 = vand.u32 %v648, 4294901760
        %650 = vmatpush1.xpose.msra.mxu0 %v649
        %651 = vmatprep.subr.mxu0 0.0
        %v652 = vand.u32 %v528, 4294901760
        %v653 = vsub.f32 %v528, %v652
        %v654 = vand.u32 %v653, 4294901760
        %v655 = vsub.f32 %v653, %v654
        %v656 = vand.u32 %v655, 4294901760
        %657 = vmatpush1.xpose.msra.mxu0 %v656
        %658 = vmatprep.subr.mxu0 0.0
        %v659 = vand.u32 %v525, 4294901760
        %v660 = vsub.f32 %v525, %v659
        %v661 = vand.u32 %v660, 4294901760
        %v662 = vsub.f32 %v660, %v661
        %v663 = vand.u32 %v662, 4294901760
        %664 = vmatpush1.xpose.msra.mxu0 %v663
        %665 = vmatprep.subr.mxu0 0.0
        %v666 = vand.u32 %v522, 4294901760
        %v667 = vsub.f32 %v522, %v666
        %v668 = vand.u32 %v667, 4294901760
        %v669 = vsub.f32 %v667, %v668
        %v670 = vand.u32 %v669, 4294901760
        %671 = vmatpush1.xpose.msra.mxu0 %v670
        %672 = vmatprep.subr.mxu0 0.0
        %v673 = vand.u32 %v519, 4294901760
        %v674 = vsub.f32 %v519, %v673
        %v675 = vand.u32 %v674, 4294901760
        %v676 = vsub.f32 %v674, %v675
        %v677 = vand.u32 %v676, 4294901760
        %678 = vmatpush1.xpose.msra.mxu0 %v677
        %679 = vmatprep.subr.mxu0 0.0
        %v680 = vand.u32 %v516, 4294901760
        %v681 = vsub.f32 %v516, %v680
        %v682 = vand.u32 %v681, 4294901760
        %v683 = vsub.f32 %v681, %v682
        %v684 = vand.u32 %v683, 4294901760
        %685 = vmatpush1.xpose.msra.mxu0 %v684
        %686 = vmatprep.subr.mxu0 0.0
        %v687 = vand.u32 %v513, 4294901760
        %v688 = vsub.f32 %v513, %v687
        %v689 = vand.u32 %v688, 4294901760
        %v690 = vsub.f32 %v688, %v689
        %v691 = vand.u32 %v690, 4294901760
        %692 = vmatpush1.xpose.msra.mxu0 %v691
        %693 = vmatprep.subr.mxu0 0.0
        %v694 = vand.u32 %v510, 4294901760
        %v695 = vsub.f32 %v510, %v694
        %v696 = vand.u32 %v695, 4294901760
        %v697 = vsub.f32 %v695, %v696
        %v698 = vand.u32 %v697, 4294901760
        %699 = vmatpush1.xpose.msra.mxu0 %v698
        %700 = vmatprep.subr.mxu0 0.0
        %v701 = vand.u32 %v507, 4294901760
        %v702 = vsub.f32 %v507, %v701
        %v703 = vand.u32 %v702, 4294901760
        %v704 = vsub.f32 %v702, %v703
        %v705 = vand.u32 %v704, 4294901760
        %706 = vmatpush1.xpose.msra.mxu0 %v705
        %707 = vmatprep.subr.mxu0 0.0
        %v708 = vand.u32 %v504, 4294901760
        %v709 = vsub.f32 %v504, %v708
        %v710 = vand.u32 %v709, 4294901760
        %v711 = vsub.f32 %v709, %v710
        %v712 = vand.u32 %v711, 4294901760
        %713 = vmatpush1.xpose.msra.mxu0 %v712
        %714 = vmatprep.subr.mxu0 0.0
        %v715 = vand.u32 %v501, 4294901760
        %v716 = vsub.f32 %v501, %v715
        %v717 = vand.u32 %v716, 4294901760
        %v718 = vsub.f32 %v716, %v717
        %v719 = vand.u32 %v718, 4294901760
        %720 = vmatpush1.xpose.msra.mxu0 %v719
        %721 = vmatprep.subr.mxu0 0.0
        %v722 = vand.u32 %v498, 4294901760
        %v723 = vsub.f32 %v498, %v722
        %v724 = vand.u32 %v723, 4294901760
        %v725 = vsub.f32 %v723, %v724
        %v726 = vand.u32 %v725, 4294901760
        %727 = vmatpush1.xpose.msra.mxu0 %v726
        %728 = vmatprep.subr.mxu0 0.0
        %v729 = vand.u32 %v495, 4294901760
        %v730 = vsub.f32 %v495, %v729
        %v731 = vand.u32 %v730, 4294901760
        %v732 = vsub.f32 %v730, %v731
        %v733 = vand.u32 %v732, 4294901760
        %734 = vmatpush1.xpose.msra.mxu0 %v733
        %735 = vmatprep.subr.mxu0 0.0
        %v736 = vand.u32 %v492, 4294901760
        %v737 = vsub.f32 %v492, %v736
        %v738 = vand.u32 %v737, 4294901760
        %v739 = vsub.f32 %v737, %v738
        %v740 = vand.u32 %v739, 4294901760
        %741 = vmatpush1.xpose.msra.mxu0 %v740
        %742 = vmatprep.subr.mxu0 0.0
        %v743 = vand.u32 %v489, 4294901760
        %v744 = vsub.f32 %v489, %v743
        %v745 = vand.u32 %v744, 4294901760
        %v746 = vsub.f32 %v744, %v745
        %v747 = vand.u32 %v746, 4294901760
        %748 = vmatpush1.xpose.msra.mxu0 %v747
        %749 = vmatprep.subr.mxu0 0.0
        %750 = vmatpush2.xpose.msra.mxu0 0.0
        %751 = vmatprep.subr.mxu0 0.0
        %752 = vmatpush2.xpose.msra.mxu0 0.0
        %753 = vmatprep.subr.mxu0 0.0
        %754 = vmatpush2.xpose.msra.mxu0 0.0
        %755 = vmatprep.subr.mxu0 0.0
        %756 = vmatpush2.xpose.msra.mxu0 0.0
        %757 = vmatprep.subr.mxu0 0.0
        %758 = vmatpush2.xpose.msra.mxu0 0.0
        %759 = vmatprep.subr.mxu0 0.0
        %760 = vmatpush2.xpose.msra.mxu0 0.0
        %761 = vmatprep.subr.mxu0 0.0
        %762 = vmatpush2.xpose.msra.mxu0 0.0
        %763 = vmatprep.subr.mxu0 0.0
        %764 = vmatpush2.xpose.msra.mxu0 0.0
        %765 = vmatprep.subr.mxu0 0.0
        %766 = vmatpush2.xpose.msra.mxu0 0.0
        %767 = vmatprep.subr.mxu0 0.0
        %768 = vmatpush2.xpose.msra.mxu0 0.0
        %769 = vmatprep.subr.mxu0 0.0
        %770 = vmatpush2.xpose.msra.mxu0 0.0
        %771 = vmatprep.subr.mxu0 0.0
        %772 = vmatpush2.xpose.msra.mxu0 0.0
        %773 = vmatprep.subr.mxu0 0.0
        %774 = vmatpush2.xpose.msra.mxu0 0.0
        %775 = vmatprep.subr.mxu0 0.0
        %776 = vmatpush2.xpose.msra.mxu0 0.0
        %777 = vmatprep.subr.mxu0 0.0
        %778 = vmatpush2.xpose.msra.mxu0 0.0
        %779 = vmatprep.subr.mxu0 0.0
        %780 = vmatpush2.xpose.msra.mxu0 0.0
        %781 = vmatprep.mubr.f32.mxu0 0.0
        %v782 = vand.u32 %v483, 4294901760
        %783 = vmatmul.mubr.f32.gmra.mxu0 %v782
        %v784 = vpop.f32.mrf.mxu0
        %v785 = vadd.f32 %v624, %v784
        %v786 = vpop.f32.mrf.mxu0
        %787 = vmatprep.mubr.f32.mxu0 0.0
        %v788 = vand.u32 %v486, 4294901760
        %789 = vmatmul.mubr.f32.gmra.mxu0 %v788
        %v790 = vpop.f32.mrf.mxu0
        %v791 = vadd.f32 %v634, %v790
        %v792 = vpop.f32.mrf.mxu0
        %793 = vdwg.mxu0
        %794 = vmatprep.subr.mxu0 0.0
        %v795 = vand.u32 %v534, 4294901760
        %v796 = vsub.f32 %v534, %v795
        %797 = vmatpush1.xpose.msra.mxu0 %v796
        %798 = vmatprep.subr.mxu0 0.0
        %v799 = vand.u32 %v531, 4294901760
        %v800 = vsub.f32 %v531, %v799
        %801 = vmatpush1.xpose.msra.mxu0 %v800
        %802 = vmatprep.subr.mxu0 0.0
        %v803 = vand.u32 %v528, 4294901760
        %v804 = vsub.f32 %v528, %v803
        %805 = vmatpush1.xpose.msra.mxu0 %v804
        %806 = vmatprep.subr.mxu0 0.0
        %v807 = vand.u32 %v525, 4294901760
        %v808 = vsub.f32 %v525, %v807
        %809 = vmatpush1.xpose.msra.mxu0 %v808
        %810 = vmatprep.subr.mxu0 0.0
        %v811 = vand.u32 %v522, 4294901760
        %v812 = vsub.f32 %v522, %v811
        %813 = vmatpush1.xpose.msra.mxu0 %v812
        %814 = vmatprep.subr.mxu0 0.0
        %v815 = vand.u32 %v519, 4294901760
        %v816 = vsub.f32 %v519, %v815
        %817 = vmatpush1.xpose.msra.mxu0 %v816
        %818 = vmatprep.subr.mxu0 0.0
        %v819 = vand.u32 %v516, 4294901760
        %v820 = vsub.f32 %v516, %v819
        %821 = vmatpush1.xpose.msra.mxu0 %v820
        %822 = vmatprep.subr.mxu0 0.0
        %v823 = vand.u32 %v513, 4294901760
        %v824 = vsub.f32 %v513, %v823
        %825 = vmatpush1.xpose.msra.mxu0 %v824
        %826 = vmatprep.subr.mxu0 0.0
        %v827 = vand.u32 %v510, 4294901760
        %v828 = vsub.f32 %v510, %v827
        %829 = vmatpush1.xpose.msra.mxu0 %v828
        %830 = vmatprep.subr.mxu0 0.0
        %v831 = vand.u32 %v507, 4294901760
        %v832 = vsub.f32 %v507, %v831
        %833 = vmatpush1.xpose.msra.mxu0 %v832
        %834 = vmatprep.subr.mxu0 0.0
        %v835 = vand.u32 %v504, 4294901760
        %v836 = vsub.f32 %v504, %v835
        %837 = vmatpush1.xpose.msra.mxu0 %v836
        %838 = vmatprep.subr.mxu0 0.0
        %v839 = vand.u32 %v501, 4294901760
        %v840 = vsub.f32 %v501, %v839
        %841 = vmatpush1.xpose.msra.mxu0 %v840
        %842 = vmatprep.subr.mxu0 0.0
        %v843 = vand.u32 %v498, 4294901760
        %v844 = vsub.f32 %v498, %v843
        %845 = vmatpush1.xpose.msra.mxu0 %v844
        %846 = vmatprep.subr.mxu0 0.0
        %v847 = vand.u32 %v495, 4294901760
        %v848 = vsub.f32 %v495, %v847
        %849 = vmatpush1.xpose.msra.mxu0 %v848
        %850 = vmatprep.subr.mxu0 0.0
        %v851 = vand.u32 %v492, 4294901760
        %v852 = vsub.f32 %v492, %v851
        %853 = vmatpush1.xpose.msra.mxu0 %v852
        %854 = vmatprep.subr.mxu0 0.0
        %v855 = vand.u32 %v489, 4294901760
        %v856 = vsub.f32 %v489, %v855
        %857 = vmatpush1.xpose.msra.mxu0 %v856
        %858 = vmatprep.subr.mxu0 0.0
        %859 = vmatpush2.xpose.msra.mxu0 0.0
        %860 = vmatprep.subr.mxu0 0.0
        %861 = vmatpush2.xpose.msra.mxu0 0.0
        %862 = vmatprep.subr.mxu0 0.0
        %863 = vmatpush2.xpose.msra.mxu0 0.0
        %864 = vmatprep.subr.mxu0 0.0
        %865 = vmatpush2.xpose.msra.mxu0 0.0
        %866 = vmatprep.subr.mxu0 0.0
        %867 = vmatpush2.xpose.msra.mxu0 0.0
        %868 = vmatprep.subr.mxu0 0.0
        %869 = vmatpush2.xpose.msra.mxu0 0.0
        %870 = vmatprep.subr.mxu0 0.0
        %871 = vmatpush2.xpose.msra.mxu0 0.0
        %872 = vmatprep.subr.mxu0 0.0
        %873 = vmatpush2.xpose.msra.mxu0 0.0
        %874 = vmatprep.subr.mxu0 0.0
        %875 = vmatpush2.xpose.msra.mxu0 0.0
        %876 = vmatprep.subr.mxu0 0.0
        %877 = vmatpush2.xpose.msra.mxu0 0.0
        %878 = vmatprep.subr.mxu0 0.0
        %879 = vmatpush2.xpose.msra.mxu0 0.0
        %880 = vmatprep.subr.mxu0 0.0
        %881 = vmatpush2.xpose.msra.mxu0 0.0
        %882 = vmatprep.subr.mxu0 0.0
        %883 = vmatpush2.xpose.msra.mxu0 0.0
        %884 = vmatprep.subr.mxu0 0.0
        %885 = vmatpush2.xpose.msra.mxu0 0.0
        %886 = vmatprep.subr.mxu0 0.0
        %887 = vmatpush2.xpose.msra.mxu0 0.0
        %888 = vmatprep.subr.mxu0 0.0
        %889 = vmatpush2.xpose.msra.mxu0 0.0
        %890 = vmatprep.mubr.f32.mxu0 0.0
        %v891 = vand.u32 %v483, 4294901760
        %v892 = vsub.f32 %v483, %v891
        %893 = vmatmul.mubr.f32.gmra.mxu0 %v892
        %v894 = vpop.f32.mrf.mxu0
        %v895 = vadd.f32 %v785, %v894
        %v896 = vpop.f32.mrf.mxu0
        %897 = vmatprep.mubr.f32.mxu0 0.0
        %v898 = vand.u32 %v486, 4294901760
        %v899 = vsub.f32 %v486, %v898
        %900 = vmatmul.mubr.f32.gmra.mxu0 %v899
        %v901 = vpop.f32.mrf.mxu0
        %v902 = vadd.f32 %v791, %v901
        %v903 = vpop.f32.mrf.mxu0
        %904 = vdwg.mxu0
        %905 = vmatprep.subr.mxu0 0.0
        %v906 = vand.u32 %v534, 4294901760
        %907 = vmatpush1.xpose.msra.mxu0 %v906
        %908 = vmatprep.subr.mxu0 0.0
        %v909 = vand.u32 %v531, 4294901760
        %910 = vmatpush1.xpose.msra.mxu0 %v909
        %911 = vmatprep.subr.mxu0 0.0
        %v912 = vand.u32 %v528, 4294901760
        %913 = vmatpush1.xpose.msra.mxu0 %v912
        %914 = vmatprep.subr.mxu0 0.0
        %v915 = vand.u32 %v525, 4294901760
        %916 = vmatpush1.xpose.msra.mxu0 %v915
        %917 = vmatprep.subr.mxu0 0.0
        %v918 = vand.u32 %v522, 4294901760
        %919 = vmatpush1.xpose.msra.mxu0 %v918
        %920 = vmatprep.subr.mxu0 0.0
        %v921 = vand.u32 %v519, 4294901760
        %922 = vmatpush1.xpose.msra.mxu0 %v921
        %923 = vmatprep.subr.mxu0 0.0
        %v924 = vand.u32 %v516, 4294901760
        %925 = vmatpush1.xpose.msra.mxu0 %v924
        %926 = vmatprep.subr.mxu0 0.0
        %v927 = vand.u32 %v513, 4294901760
        %928 = vmatpush1.xpose.msra.mxu0 %v927
        %929 = vmatprep.subr.mxu0 0.0
        %v930 = vand.u32 %v510, 4294901760
        %931 = vmatpush1.xpose.msra.mxu0 %v930
        %932 = vmatprep.subr.mxu0 0.0
        %v933 = vand.u32 %v507, 4294901760
        %934 = vmatpush1.xpose.msra.mxu0 %v933
        %935 = vmatprep.subr.mxu0 0.0
        %v936 = vand.u32 %v504, 4294901760
        %937 = vmatpush1.xpose.msra.mxu0 %v936
        %938 = vmatprep.subr.mxu0 0.0
        %v939 = vand.u32 %v501, 4294901760
        %940 = vmatpush1.xpose.msra.mxu0 %v939
        %941 = vmatprep.subr.mxu0 0.0
        %v942 = vand.u32 %v498, 4294901760
        %943 = vmatpush1.xpose.msra.mxu0 %v942
        %944 = vmatprep.subr.mxu0 0.0
        %v945 = vand.u32 %v495, 4294901760
        %946 = vmatpush1.xpose.msra.mxu0 %v945
        %947 = vmatprep.subr.mxu0 0.0
        %v948 = vand.u32 %v492, 4294901760
        %949 = vmatpush1.xpose.msra.mxu0 %v948
        %950 = vmatprep.subr.mxu0 0.0
        %v951 = vand.u32 %v489, 4294901760
        %952 = vmatpush1.xpose.msra.mxu0 %v951
        %953 = vmatprep.subr.mxu0 0.0
        %954 = vmatpush2.xpose.msra.mxu0 0.0
        %955 = vmatprep.subr.mxu0 0.0
        %956 = vmatpush2.xpose.msra.mxu0 0.0
        %957 = vmatprep.subr.mxu0 0.0
        %958 = vmatpush2.xpose.msra.mxu0 0.0
        %959 = vmatprep.subr.mxu0 0.0
        %960 = vmatpush2.xpose.msra.mxu0 0.0
        %961 = vmatprep.subr.mxu0 0.0
        %962 = vmatpush2.xpose.msra.mxu0 0.0
        %963 = vmatprep.subr.mxu0 0.0
        %964 = vmatpush2.xpose.msra.mxu0 0.0
        %965 = vmatprep.subr.mxu0 0.0
        %966 = vmatpush2.xpose.msra.mxu0 0.0
        %967 = vmatprep.subr.mxu0 0.0
        %968 = vmatpush2.xpose.msra.mxu0 0.0
        %969 = vmatprep.subr.mxu0 0.0
        %970 = vmatpush2.xpose.msra.mxu0 0.0
        %971 = vmatprep.subr.mxu0 0.0
        %972 = vmatpush2.xpose.msra.mxu0 0.0
        %973 = vmatprep.subr.mxu0 0.0
        %974 = vmatpush2.xpose.msra.mxu0 0.0
        %975 = vmatprep.subr.mxu0 0.0
        %976 = vmatpush2.xpose.msra.mxu0 0.0
        %977 = vmatprep.subr.mxu0 0.0
        %978 = vmatpush2.xpose.msra.mxu0 0.0
        %979 = vmatprep.subr.mxu0 0.0
        %980 = vmatpush2.xpose.msra.mxu0 0.0
        %981 = vmatprep.subr.mxu0 0.0
        %982 = vmatpush2.xpose.msra.mxu0 0.0
        %983 = vmatprep.subr.mxu0 0.0
        %984 = vmatpush2.xpose.msra.mxu0 0.0
        %985 = vmatprep.mubr.f32.mxu0 0.0
        %v986 = vand.u32 %v483, 4294901760
        %v987 = vsub.f32 %v483, %v986
        %v988 = vand.u32 %v987, 4294901760
        %989 = vmatmul.mubr.f32.gmra.mxu0 %v988
        %v990 = vpop.f32.mrf.mxu0
        %v991 = vadd.f32 %v895, %v990
        %v992 = vpop.f32.mrf.mxu0
        %993 = vmatprep.mubr.f32.mxu0 0.0
        %v994 = vand.u32 %v486, 4294901760
        %v995 = vsub.f32 %v486, %v994
        %v996 = vand.u32 %v995, 4294901760
        %997 = vmatmul.mubr.f32.gmra.mxu0 %v996
        %v998 = vpop.f32.mrf.mxu0
        %v999 = vadd.f32 %v902, %v998
        %v1000 = vpop.f32.mrf.mxu0
        %1001 = vdwg.mxu0
        %1002 = vmatprep.subr.mxu0 0.0
        %v1003 = vand.u32 %v534, 4294901760
        %v1004 = vsub.f32 %v534, %v1003
        %v1005 = vand.u32 %v1004, 4294901760
        %1006 = vmatpush1.xpose.msra.mxu0 %v1005
        %1007 = vmatprep.subr.mxu0 0.0
        %v1008 = vand.u32 %v531, 4294901760
        %v1009 = vsub.f32 %v531, %v1008
        %v1010 = vand.u32 %v1009, 4294901760
        %1011 = vmatpush1.xpose.msra.mxu0 %v1010
        %1012 = vmatprep.subr.mxu0 0.0
        %v1013 = vand.u32 %v528, 4294901760
        %v1014 = vsub.f32 %v528, %v1013
        %v1015 = vand.u32 %v1014, 4294901760
        %1016 = vmatpush1.xpose.msra.mxu0 %v1015
        %1017 = vmatprep.subr.mxu0 0.0
        %v1018 = vand.u32 %v525, 4294901760
        %v1019 = vsub.f32 %v525, %v1018
        %v1020 = vand.u32 %v1019, 4294901760
        %1021 = vmatpush1.xpose.msra.mxu0 %v1020
        %1022 = vmatprep.subr.mxu0 0.0
        %v1023 = vand.u32 %v522, 4294901760
        %v1024 = vsub.f32 %v522, %v1023
        %v1025 = vand.u32 %v1024, 4294901760
        %1026 = vmatpush1.xpose.msra.mxu0 %v1025
        %1027 = vmatprep.subr.mxu0 0.0
        %v1028 = vand.u32 %v519, 4294901760
        %v1029 = vsub.f32 %v519, %v1028
        %v1030 = vand.u32 %v1029, 4294901760
        %1031 = vmatpush1.xpose.msra.mxu0 %v1030
        %1032 = vmatprep.subr.mxu0 0.0
        %v1033 = vand.u32 %v516, 4294901760
        %v1034 = vsub.f32 %v516, %v1033
        %v1035 = vand.u32 %v1034, 4294901760
        %1036 = vmatpush1.xpose.msra.mxu0 %v1035
        %1037 = vmatprep.subr.mxu0 0.0
        %v1038 = vand.u32 %v513, 4294901760
        %v1039 = vsub.f32 %v513, %v1038
        %v1040 = vand.u32 %v1039, 4294901760
        %1041 = vmatpush1.xpose.msra.mxu0 %v1040
        %1042 = vmatprep.subr.mxu0 0.0
        %v1043 = vand.u32 %v510, 4294901760
        %v1044 = vsub.f32 %v510, %v1043
        %v1045 = vand.u32 %v1044, 4294901760
        %1046 = vmatpush1.xpose.msra.mxu0 %v1045
        %1047 = vmatprep.subr.mxu0 0.0
        %v1048 = vand.u32 %v507, 4294901760
        %v1049 = vsub.f32 %v507, %v1048
        %v1050 = vand.u32 %v1049, 4294901760
        %1051 = vmatpush1.xpose.msra.mxu0 %v1050
        %1052 = vmatprep.subr.mxu0 0.0
        %v1053 = vand.u32 %v504, 4294901760
        %v1054 = vsub.f32 %v504, %v1053
        %v1055 = vand.u32 %v1054, 4294901760
        %1056 = vmatpush1.xpose.msra.mxu0 %v1055
        %1057 = vmatprep.subr.mxu0 0.0
        %v1058 = vand.u32 %v501, 4294901760
        %v1059 = vsub.f32 %v501, %v1058
        %v1060 = vand.u32 %v1059, 4294901760
        %1061 = vmatpush1.xpose.msra.mxu0 %v1060
        %1062 = vmatprep.subr.mxu0 0.0
        %v1063 = vand.u32 %v498, 4294901760
        %v1064 = vsub.f32 %v498, %v1063
        %v1065 = vand.u32 %v1064, 4294901760
        %1066 = vmatpush1.xpose.msra.mxu0 %v1065
        %1067 = vmatprep.subr.mxu0 0.0
        %v1068 = vand.u32 %v495, 4294901760
        %v1069 = vsub.f32 %v495, %v1068
        %v1070 = vand.u32 %v1069, 4294901760
        %1071 = vmatpush1.xpose.msra.mxu0 %v1070
        %1072 = vmatprep.subr.mxu0 0.0
        %v1073 = vand.u32 %v492, 4294901760
        %v1074 = vsub.f32 %v492, %v1073
        %v1075 = vand.u32 %v1074, 4294901760
        %1076 = vmatpush1.xpose.msra.mxu0 %v1075
        %1077 = vmatprep.subr.mxu0 0.0
        %v1078 = vand.u32 %v489, 4294901760
        %v1079 = vsub.f32 %v489, %v1078
        %v1080 = vand.u32 %v1079, 4294901760
        %1081 = vmatpush1.xpose.msra.mxu0 %v1080
        %1082 = vmatprep.subr.mxu0 0.0
        %1083 = vmatpush2.xpose.msra.mxu0 0.0
        %1084 = vmatprep.subr.mxu0 0.0
        %1085 = vmatpush2.xpose.msra.mxu0 0.0
        %1086 = vmatprep.subr.mxu0 0.0
        %1087 = vmatpush2.xpose.msra.mxu0 0.0
        %1088 = vmatprep.subr.mxu0 0.0
        %1089 = vmatpush2.xpose.msra.mxu0 0.0
        %1090 = vmatprep.subr.mxu0 0.0
        %1091 = vmatpush2.xpose.msra.mxu0 0.0
        %1092 = vmatprep.subr.mxu0 0.0
        %1093 = vmatpush2.xpose.msra.mxu0 0.0
        %1094 = vmatprep.subr.mxu0 0.0
        %1095 = vmatpush2.xpose.msra.mxu0 0.0
        %1096 = vmatprep.subr.mxu0 0.0
        %1097 = vmatpush2.xpose.msra.mxu0 0.0
        %1098 = vmatprep.subr.mxu0 0.0
        %1099 = vmatpush2.xpose.msra.mxu0 0.0
        %1100 = vmatprep.subr.mxu0 0.0
        %1101 = vmatpush2.xpose.msra.mxu0 0.0
        %1102 = vmatprep.subr.mxu0 0.0
        %1103 = vmatpush2.xpose.msra.mxu0 0.0
        %1104 = vmatprep.subr.mxu0 0.0
        %1105 = vmatpush2.xpose.msra.mxu0 0.0
        %1106 = vmatprep.subr.mxu0 0.0
        %1107 = vmatpush2.xpose.msra.mxu0 0.0
        %1108 = vmatprep.subr.mxu0 0.0
        %1109 = vmatpush2.xpose.msra.mxu0 0.0
        %1110 = vmatprep.subr.mxu0 0.0
        %1111 = vmatpush2.xpose.msra.mxu0 0.0
        %1112 = vmatprep.subr.mxu0 0.0
        %1113 = vmatpush2.xpose.msra.mxu0 0.0
        %1114 = vmatprep.mubr.f32.mxu0 0.0
        %v1115 = vand.u32 %v483, 4294901760
        %1116 = vmatmul.mubr.f32.gmra.mxu0 %v1115
        %v1117 = vpop.f32.mrf.mxu0
        %v1118 = vadd.f32 %v991, %v1117
        %v1119 = vpop.f32.mrf.mxu0
        %1120 = vmatprep.mubr.f32.mxu0 0.0
        %v1121 = vand.u32 %v486, 4294901760
        %1122 = vmatmul.mubr.f32.gmra.mxu0 %v1121
        %v1123 = vpop.f32.mrf.mxu0
        %v1124 = vadd.f32 %v999, %v1123
        %v1125 = vpop.f32.mrf.mxu0
        %1126 = vdwg.mxu0
        %1127 = vmatprep.subr.mxu0 0.0
        %v1128 = vand.u32 %v534, 4294901760
        %1129 = vmatpush1.xpose.msra.mxu0 %v1128
        %1130 = vmatprep.subr.mxu0 0.0
        %v1131 = vand.u32 %v531, 4294901760
        %1132 = vmatpush1.xpose.msra.mxu0 %v1131
        %1133 = vmatprep.subr.mxu0 0.0
        %v1134 = vand.u32 %v528, 4294901760
        %1135 = vmatpush1.xpose.msra.mxu0 %v1134
        %1136 = vmatprep.subr.mxu0 0.0
        %v1137 = vand.u32 %v525, 4294901760
        %1138 = vmatpush1.xpose.msra.mxu0 %v1137
        %1139 = vmatprep.subr.mxu0 0.0
        %v1140 = vand.u32 %v522, 4294901760
        %1141 = vmatpush1.xpose.msra.mxu0 %v1140
        %1142 = vmatprep.subr.mxu0 0.0
        %v1143 = vand.u32 %v519, 4294901760
        %1144 = vmatpush1.xpose.msra.mxu0 %v1143
        %1145 = vmatprep.subr.mxu0 0.0
        %v1146 = vand.u32 %v516, 4294901760
        %1147 = vmatpush1.xpose.msra.mxu0 %v1146
        %1148 = vmatprep.subr.mxu0 0.0
        %v1149 = vand.u32 %v513, 4294901760
        %1150 = vmatpush1.xpose.msra.mxu0 %v1149
        %1151 = vmatprep.subr.mxu0 0.0
        %v1152 = vand.u32 %v510, 4294901760
        %1153 = vmatpush1.xpose.msra.mxu0 %v1152
        %1154 = vmatprep.subr.mxu0 0.0
        %v1155 = vand.u32 %v507, 4294901760
        %1156 = vmatpush1.xpose.msra.mxu0 %v1155
        %1157 = vmatprep.subr.mxu0 0.0
        %v1158 = vand.u32 %v504, 4294901760
        %1159 = vmatpush1.xpose.msra.mxu0 %v1158
        %1160 = vmatprep.subr.mxu0 0.0
        %v1161 = vand.u32 %v501, 4294901760
        %1162 = vmatpush1.xpose.msra.mxu0 %v1161
        %1163 = vmatprep.subr.mxu0 0.0
        %v1164 = vand.u32 %v498, 4294901760
        %1165 = vmatpush1.xpose.msra.mxu0 %v1164
        %1166 = vmatprep.subr.mxu0 0.0
        %v1167 = vand.u32 %v495, 4294901760
        %1168 = vmatpush1.xpose.msra.mxu0 %v1167
        %1169 = vmatprep.subr.mxu0 0.0
        %v1170 = vand.u32 %v492, 4294901760
        %1171 = vmatpush1.xpose.msra.mxu0 %v1170
        %1172 = vmatprep.subr.mxu0 0.0
        %v1173 = vand.u32 %v489, 4294901760
        %1174 = vmatpush1.xpose.msra.mxu0 %v1173
        %1175 = vmatprep.subr.mxu0 0.0
        %1176 = vmatpush2.xpose.msra.mxu0 0.0
        %1177 = vmatprep.subr.mxu0 0.0
        %1178 = vmatpush2.xpose.msra.mxu0 0.0
        %1179 = vmatprep.subr.mxu0 0.0
        %1180 = vmatpush2.xpose.msra.mxu0 0.0
        %1181 = vmatprep.subr.mxu0 0.0
        %1182 = vmatpush2.xpose.msra.mxu0 0.0
        %1183 = vmatprep.subr.mxu0 0.0
        %1184 = vmatpush2.xpose.msra.mxu0 0.0
        %1185 = vmatprep.subr.mxu0 0.0
        %1186 = vmatpush2.xpose.msra.mxu0 0.0
        %1187 = vmatprep.subr.mxu0 0.0
        %1188 = vmatpush2.xpose.msra.mxu0 0.0
        %1189 = vmatprep.subr.mxu0 0.0
        %1190 = vmatpush2.xpose.msra.mxu0 0.0
        %1191 = vmatprep.subr.mxu0 0.0
        %1192 = vmatpush2.xpose.msra.mxu0 0.0
        %1193 = vmatprep.subr.mxu0 0.0
        %1194 = vmatpush2.xpose.msra.mxu0 0.0
        %1195 = vmatprep.subr.mxu0 0.0
        %1196 = vmatpush2.xpose.msra.mxu0 0.0
        %1197 = vmatprep.subr.mxu0 0.0
        %1198 = vmatpush2.xpose.msra.mxu0 0.0
        %1199 = vmatprep.subr.mxu0 0.0
        %1200 = vmatpush2.xpose.msra.mxu0 0.0
        %1201 = vmatprep.subr.mxu0 0.0
        %1202 = vmatpush2.xpose.msra.mxu0 0.0
        %1203 = vmatprep.subr.mxu0 0.0
        %1204 = vmatpush2.xpose.msra.mxu0 0.0
        %1205 = vmatprep.subr.mxu0 0.0
        %1206 = vmatpush2.xpose.msra.mxu0 0.0
        %1207 = vmatprep.mubr.f32.mxu0 0.0
        %v1208 = vand.u32 %v483, 4294901760
        %1209 = vmatmul.mubr.f32.gmra.mxu0 %v1208
        %v1210 = vpop.f32.mrf.mxu0
        %v1211 = vadd.f32 %v1118, %v1210
        %v1212 = vpop.f32.mrf.mxu0
        %1213 = vmatprep.mubr.f32.mxu0 0.0
        %v1214 = vand.u32 %v486, 4294901760
        %1215 = vmatmul.mubr.f32.gmra.mxu0 %v1214
        %v1216 = vpop.f32.mrf.mxu0
        %v1217 = vadd.f32 %v1124, %v1216
        %v1218 = vpop.f32.mrf.mxu0
        %1219 = vdwg.mxu0
        %v1220 = vsub.f32 %v419, %v1211
        %v1221 = vsub.f32 %v420, %v1217
        %v1222 = vand.u32 2147483647, %v1220
        %v1223 = vand.u32 2147483647, %v1221
        %vm1224 = vcmp.lt.f32.partialorder %v1222, 0.11111111
        %vm1225 = vcmp.lt.f32.partialorder %v1223, 0.11111111
        %v1226 = vmul.f32 %v1220, %v1220
        %v1227 = vmul.f32 %v1221, %v1221
        %v1228 = vmul.f32 %v1226, 4.5
        %v1229 = vmul.f32 %v1227, 4.5
        %v1230 = vsub.f32 %v1222, 0.055555556
        %v1231 = vsub.f32 %v1223, 0.055555556
        %v1232 = vsel %vm1224, %v1228, %v1230
        %v1233 = vsel %vm1225, %v1229, %v1231
        %vm1234 = vcmask 1046528
        %v1235 = vsel %vm1234, %v1232, 0.0
        %v1236 = vrot.slane %v1235, 4
        %v1237 = vadd.f32 %v1235, %v1236
        %v1238 = vrot.slane %v1237, 2
        %v1239 = vadd.f32 %v1237, %v1238
        %v1240 = vrot.slane %v1239, 1
        %v1241 = vadd.f32 %v1239, %v1240
        %vm1244 = vcmask 1040384
        %v1245 = vrot.slane %v1232, 7
        %v1246 = vrot.slane %v1233, 7
        %v1247 = vsel %vm1244, %v1245, %v1246
        %v1249 = vsel %vm1234, %v1247, 0.0
        %v1250 = vrot.slane %v1249, 4
        %v1251 = vadd.f32 %v1249, %v1250
        %v1252 = vrot.slane %v1251, 2
        %v1253 = vadd.f32 %v1251, %v1252
        %v1254 = vrot.slane %v1253, 1
        %v1255 = vadd.f32 %v1253, %v1254
        %v1256 = vsel %vm1244, %v1241, %v1255
        %1257 = vmatprep.subr.mxu0 0.0
        %v1258 = vand.u32 %v437, 4294901760
        %1259 = vmatpush1.msra.mxu0 %v1258
        %1260 = vmatprep.subr.mxu0 0.0
        %v1261 = vand.u32 %v436, 4294901760
        %1262 = vmatpush1.msra.mxu0 %v1261
        %1263 = vmatprep.subr.mxu0 0.0
        %v1264 = vand.u32 %v435, 4294901760
        %1265 = vmatpush1.msra.mxu0 %v1264
        %1266 = vmatprep.subr.mxu0 0.0
        %v1267 = vand.u32 %v434, 4294901760
        %1268 = vmatpush1.msra.mxu0 %v1267
        %1269 = vmatprep.subr.mxu0 0.0
        %v1270 = vand.u32 %v433, 4294901760
        %1271 = vmatpush1.msra.mxu0 %v1270
        %1272 = vmatprep.subr.mxu0 0.0
        %v1273 = vand.u32 %v432, 4294901760
        %1274 = vmatpush1.msra.mxu0 %v1273
        %1275 = vmatprep.subr.mxu0 0.0
        %v1276 = vand.u32 %v431, 4294901760
        %1277 = vmatpush1.msra.mxu0 %v1276
        %1278 = vmatprep.subr.mxu0 0.0
        %v1279 = vand.u32 %v430, 4294901760
        %1280 = vmatpush1.msra.mxu0 %v1279
        %1281 = vmatprep.subr.mxu0 0.0
        %v1282 = vand.u32 %v429, 4294901760
        %1283 = vmatpush1.msra.mxu0 %v1282
        %1284 = vmatprep.subr.mxu0 0.0
        %v1285 = vand.u32 %v428, 4294901760
        %1286 = vmatpush1.msra.mxu0 %v1285
        %1287 = vmatprep.subr.mxu0 0.0
        %v1288 = vand.u32 %v427, 4294901760
        %1289 = vmatpush1.msra.mxu0 %v1288
        %1290 = vmatprep.subr.mxu0 0.0
        %v1291 = vand.u32 %v426, 4294901760
        %1292 = vmatpush1.msra.mxu0 %v1291
        %1293 = vmatprep.subr.mxu0 0.0
        %v1294 = vand.u32 %v425, 4294901760
        %1295 = vmatpush1.msra.mxu0 %v1294
        %1296 = vmatprep.subr.mxu0 0.0
        %v1297 = vand.u32 %v424, 4294901760
        %1298 = vmatpush1.msra.mxu0 %v1297
        %1299 = vmatprep.subr.mxu0 0.0
        %v1300 = vand.u32 %v423, 4294901760
        %1301 = vmatpush1.msra.mxu0 %v1300
        %1302 = vmatprep.subr.mxu0 0.0
        %v1303 = vand.u32 %v422, 4294901760
        %1304 = vmatpush1.msra.mxu0 %v1303
        %1305 = vmatprep.subr.mxu0 0.0
        %1306 = vmatpush2.msra.mxu0 0.0
        %1307 = vmatprep.subr.mxu0 0.0
        %1308 = vmatpush2.msra.mxu0 0.0
        %1309 = vmatprep.subr.mxu0 0.0
        %1310 = vmatpush2.msra.mxu0 0.0
        %1311 = vmatprep.subr.mxu0 0.0
        %1312 = vmatpush2.msra.mxu0 0.0
        %1313 = vmatprep.subr.mxu0 0.0
        %1314 = vmatpush2.msra.mxu0 0.0
        %1315 = vmatprep.subr.mxu0 0.0
        %1316 = vmatpush2.msra.mxu0 0.0
        %1317 = vmatprep.subr.mxu0 0.0
        %1318 = vmatpush2.msra.mxu0 0.0
        %1319 = vmatprep.subr.mxu0 0.0
        %1320 = vmatpush2.msra.mxu0 0.0
        %1321 = vmatprep.subr.mxu0 0.0
        %1322 = vmatpush2.msra.mxu0 0.0
        %1323 = vmatprep.subr.mxu0 0.0
        %1324 = vmatpush2.msra.mxu0 0.0
        %1325 = vmatprep.subr.mxu0 0.0
        %1326 = vmatpush2.msra.mxu0 0.0
        %1327 = vmatprep.subr.mxu0 0.0
        %1328 = vmatpush2.msra.mxu0 0.0
        %1329 = vmatprep.subr.mxu0 0.0
        %1330 = vmatpush2.msra.mxu0 0.0
        %1331 = vmatprep.subr.mxu0 0.0
        %1332 = vmatpush2.msra.mxu0 0.0
        %1333 = vmatprep.subr.mxu0 0.0
        %1334 = vmatpush2.msra.mxu0 0.0
        %1335 = vmatprep.subr.mxu0 0.0
        %1336 = vmatpush2.msra.mxu0 0.0
        %1337 = vmatprep.mubr.f32.mxu0 0.0
        %v1338 = vand.u32 %v1256, 4294901760
        %v1339 = vsub.f32 %v1256, %v1338
        %v1340 = vand.u32 %v1339, 4294901760
        %v1341 = vsub.f32 %v1339, %v1340
        %v1342 = vand.u32 %v1341, 4294901760
        %1343 = vmatmul.mubr.f32.gmra.mxu0 %v1342
        %v1344 = vpop.f32.mrf.mxu0
        %v1345 = vadd.f32 0.0, %v1344
        %v1346 = vpop.f32.mrf.mxu0
        %1347 = vdwg.mxu0
        %1348 = vmatprep.subr.mxu0 0.0
        %v1349 = vand.u32 %v437, 4294901760
        %v1350 = vsub.f32 %v437, %v1349
        %v1351 = vand.u32 %v1350, 4294901760
        %v1352 = vsub.f32 %v1350, %v1351
        %v1353 = vand.u32 %v1352, 4294901760
        %1354 = vmatpush1.msra.mxu0 %v1353
        %1355 = vmatprep.subr.mxu0 0.0
        %v1356 = vand.u32 %v436, 4294901760
        %v1357 = vsub.f32 %v436, %v1356
        %v1358 = vand.u32 %v1357, 4294901760
        %v1359 = vsub.f32 %v1357, %v1358
        %v1360 = vand.u32 %v1359, 4294901760
        %1361 = vmatpush1.msra.mxu0 %v1360
        %1362 = vmatprep.subr.mxu0 0.0
        %v1363 = vand.u32 %v435, 4294901760
        %v1364 = vsub.f32 %v435, %v1363
        %v1365 = vand.u32 %v1364, 4294901760
        %v1366 = vsub.f32 %v1364, %v1365
        %v1367 = vand.u32 %v1366, 4294901760
        %1368 = vmatpush1.msra.mxu0 %v1367
        %1369 = vmatprep.subr.mxu0 0.0
        %v1370 = vand.u32 %v434, 4294901760
        %v1371 = vsub.f32 %v434, %v1370
        %v1372 = vand.u32 %v1371, 4294901760
        %v1373 = vsub.f32 %v1371, %v1372
        %v1374 = vand.u32 %v1373, 4294901760
        %1375 = vmatpush1.msra.mxu0 %v1374
        %1376 = vmatprep.subr.mxu0 0.0
        %v1377 = vand.u32 %v433, 4294901760
        %v1378 = vsub.f32 %v433, %v1377
        %v1379 = vand.u32 %v1378, 4294901760
        %v1380 = vsub.f32 %v1378, %v1379
        %v1381 = vand.u32 %v1380, 4294901760
        %1382 = vmatpush1.msra.mxu0 %v1381
        %1383 = vmatprep.subr.mxu0 0.0
        %v1384 = vand.u32 %v432, 4294901760
        %v1385 = vsub.f32 %v432, %v1384
        %v1386 = vand.u32 %v1385, 4294901760
        %v1387 = vsub.f32 %v1385, %v1386
        %v1388 = vand.u32 %v1387, 4294901760
        %1389 = vmatpush1.msra.mxu0 %v1388
        %1390 = vmatprep.subr.mxu0 0.0
        %v1391 = vand.u32 %v431, 4294901760
        %v1392 = vsub.f32 %v431, %v1391
        %v1393 = vand.u32 %v1392, 4294901760
        %v1394 = vsub.f32 %v1392, %v1393
        %v1395 = vand.u32 %v1394, 4294901760
        %1396 = vmatpush1.msra.mxu0 %v1395
        %1397 = vmatprep.subr.mxu0 0.0
        %v1398 = vand.u32 %v430, 4294901760
        %v1399 = vsub.f32 %v430, %v1398
        %v1400 = vand.u32 %v1399, 4294901760
        %v1401 = vsub.f32 %v1399, %v1400
        %v1402 = vand.u32 %v1401, 4294901760
        %1403 = vmatpush1.msra.mxu0 %v1402
        %1404 = vmatprep.subr.mxu0 0.0
        %v1405 = vand.u32 %v429, 4294901760
        %v1406 = vsub.f32 %v429, %v1405
        %v1407 = vand.u32 %v1406, 4294901760
        %v1408 = vsub.f32 %v1406, %v1407
        %v1409 = vand.u32 %v1408, 4294901760
        %1410 = vmatpush1.msra.mxu0 %v1409
        %1411 = vmatprep.subr.mxu0 0.0
        %v1412 = vand.u32 %v428, 4294901760
        %v1413 = vsub.f32 %v428, %v1412
        %v1414 = vand.u32 %v1413, 4294901760
        %v1415 = vsub.f32 %v1413, %v1414
        %v1416 = vand.u32 %v1415, 4294901760
        %1417 = vmatpush1.msra.mxu0 %v1416
        %1418 = vmatprep.subr.mxu0 0.0
        %v1419 = vand.u32 %v427, 4294901760
        %v1420 = vsub.f32 %v427, %v1419
        %v1421 = vand.u32 %v1420, 4294901760
        %v1422 = vsub.f32 %v1420, %v1421
        %v1423 = vand.u32 %v1422, 4294901760
        %1424 = vmatpush1.msra.mxu0 %v1423
        %1425 = vmatprep.subr.mxu0 0.0
        %v1426 = vand.u32 %v426, 4294901760
        %v1427 = vsub.f32 %v426, %v1426
        %v1428 = vand.u32 %v1427, 4294901760
        %v1429 = vsub.f32 %v1427, %v1428
        %v1430 = vand.u32 %v1429, 4294901760
        %1431 = vmatpush1.msra.mxu0 %v1430
        %1432 = vmatprep.subr.mxu0 0.0
        %v1433 = vand.u32 %v425, 4294901760
        %v1434 = vsub.f32 %v425, %v1433
        %v1435 = vand.u32 %v1434, 4294901760
        %v1436 = vsub.f32 %v1434, %v1435
        %v1437 = vand.u32 %v1436, 4294901760
        %1438 = vmatpush1.msra.mxu0 %v1437
        %1439 = vmatprep.subr.mxu0 0.0
        %v1440 = vand.u32 %v424, 4294901760
        %v1441 = vsub.f32 %v424, %v1440
        %v1442 = vand.u32 %v1441, 4294901760
        %v1443 = vsub.f32 %v1441, %v1442
        %v1444 = vand.u32 %v1443, 4294901760
        %1445 = vmatpush1.msra.mxu0 %v1444
        %1446 = vmatprep.subr.mxu0 0.0
        %v1447 = vand.u32 %v423, 4294901760
        %v1448 = vsub.f32 %v423, %v1447
        %v1449 = vand.u32 %v1448, 4294901760
        %v1450 = vsub.f32 %v1448, %v1449
        %v1451 = vand.u32 %v1450, 4294901760
        %1452 = vmatpush1.msra.mxu0 %v1451
        %1453 = vmatprep.subr.mxu0 0.0
        %v1454 = vand.u32 %v422, 4294901760
        %v1455 = vsub.f32 %v422, %v1454
        %v1456 = vand.u32 %v1455, 4294901760
        %v1457 = vsub.f32 %v1455, %v1456
        %v1458 = vand.u32 %v1457, 4294901760
        %1459 = vmatpush1.msra.mxu0 %v1458
        %1460 = vmatprep.subr.mxu0 0.0
        %1461 = vmatpush2.msra.mxu0 0.0
        %1462 = vmatprep.subr.mxu0 0.0
        %1463 = vmatpush2.msra.mxu0 0.0
        %1464 = vmatprep.subr.mxu0 0.0
        %1465 = vmatpush2.msra.mxu0 0.0
        %1466 = vmatprep.subr.mxu0 0.0
        %1467 = vmatpush2.msra.mxu0 0.0
        %1468 = vmatprep.subr.mxu0 0.0
        %1469 = vmatpush2.msra.mxu0 0.0
        %1470 = vmatprep.subr.mxu0 0.0
        %1471 = vmatpush2.msra.mxu0 0.0
        %1472 = vmatprep.subr.mxu0 0.0
        %1473 = vmatpush2.msra.mxu0 0.0
        %1474 = vmatprep.subr.mxu0 0.0
        %1475 = vmatpush2.msra.mxu0 0.0
        %1476 = vmatprep.subr.mxu0 0.0
        %1477 = vmatpush2.msra.mxu0 0.0
        %1478 = vmatprep.subr.mxu0 0.0
        %1479 = vmatpush2.msra.mxu0 0.0
        %1480 = vmatprep.subr.mxu0 0.0
        %1481 = vmatpush2.msra.mxu0 0.0
        %1482 = vmatprep.subr.mxu0 0.0
        %1483 = vmatpush2.msra.mxu0 0.0
        %1484 = vmatprep.subr.mxu0 0.0
        %1485 = vmatpush2.msra.mxu0 0.0
        %1486 = vmatprep.subr.mxu0 0.0
        %1487 = vmatpush2.msra.mxu0 0.0
        %1488 = vmatprep.subr.mxu0 0.0
        %1489 = vmatpush2.msra.mxu0 0.0
        %1490 = vmatprep.subr.mxu0 0.0
        %1491 = vmatpush2.msra.mxu0 0.0
        %1492 = vmatprep.mubr.f32.mxu0 0.0
        %v1493 = vand.u32 %v1256, 4294901760
        %1494 = vmatmul.mubr.f32.gmra.mxu0 %v1493
        %v1495 = vpop.f32.mrf.mxu0
        %v1496 = vadd.f32 %v1345, %v1495
        %v1497 = vpop.f32.mrf.mxu0
        %1498 = vdwg.mxu0
        %1499 = vmatprep.subr.mxu0 0.0
        %v1500 = vand.u32 %v437, 4294901760
        %v1501 = vsub.f32 %v437, %v1500
        %1502 = vmatpush1.msra.mxu0 %v1501
        %1503 = vmatprep.subr.mxu0 0.0
        %v1504 = vand.u32 %v436, 4294901760
        %v1505 = vsub.f32 %v436, %v1504
        %1506 = vmatpush1.msra.mxu0 %v1505
        %1507 = vmatprep.subr.mxu0 0.0
        %v1508 = vand.u32 %v435, 4294901760
        %v1509 = vsub.f32 %v435, %v1508
        %1510 = vmatpush1.msra.mxu0 %v1509
        %1511 = vmatprep.subr.mxu0 0.0
        %v1512 = vand.u32 %v434, 4294901760
        %v1513 = vsub.f32 %v434, %v1512
        %1514 = vmatpush1.msra.mxu0 %v1513
        %1515 = vmatprep.subr.mxu0 0.0
        %v1516 = vand.u32 %v433, 4294901760
        %v1517 = vsub.f32 %v433, %v1516
        %1518 = vmatpush1.msra.mxu0 %v1517
        %1519 = vmatprep.subr.mxu0 0.0
        %v1520 = vand.u32 %v432, 4294901760
        %v1521 = vsub.f32 %v432, %v1520
        %1522 = vmatpush1.msra.mxu0 %v1521
        %1523 = vmatprep.subr.mxu0 0.0
        %v1524 = vand.u32 %v431, 4294901760
        %v1525 = vsub.f32 %v431, %v1524
        %1526 = vmatpush1.msra.mxu0 %v1525
        %1527 = vmatprep.subr.mxu0 0.0
        %v1528 = vand.u32 %v430, 4294901760
        %v1529 = vsub.f32 %v430, %v1528
        %1530 = vmatpush1.msra.mxu0 %v1529
        %1531 = vmatprep.subr.mxu0 0.0
        %v1532 = vand.u32 %v429, 4294901760
        %v1533 = vsub.f32 %v429, %v1532
        %1534 = vmatpush1.msra.mxu0 %v1533
        %1535 = vmatprep.subr.mxu0 0.0
        %v1536 = vand.u32 %v428, 4294901760
        %v1537 = vsub.f32 %v428, %v1536
        %1538 = vmatpush1.msra.mxu0 %v1537
        %1539 = vmatprep.subr.mxu0 0.0
        %v1540 = vand.u32 %v427, 4294901760
        %v1541 = vsub.f32 %v427, %v1540
        %1542 = vmatpush1.msra.mxu0 %v1541
        %1543 = vmatprep.subr.mxu0 0.0
        %v1544 = vand.u32 %v426, 4294901760
        %v1545 = vsub.f32 %v426, %v1544
        %1546 = vmatpush1.msra.mxu0 %v1545
        %1547 = vmatprep.subr.mxu0 0.0
        %v1548 = vand.u32 %v425, 4294901760
        %v1549 = vsub.f32 %v425, %v1548
        %1550 = vmatpush1.msra.mxu0 %v1549
        %1551 = vmatprep.subr.mxu0 0.0
        %v1552 = vand.u32 %v424, 4294901760
        %v1553 = vsub.f32 %v424, %v1552
        %1554 = vmatpush1.msra.mxu0 %v1553
        %1555 = vmatprep.subr.mxu0 0.0
        %v1556 = vand.u32 %v423, 4294901760
        %v1557 = vsub.f32 %v423, %v1556
        %1558 = vmatpush1.msra.mxu0 %v1557
        %1559 = vmatprep.subr.mxu0 0.0
        %v1560 = vand.u32 %v422, 4294901760
        %v1561 = vsub.f32 %v422, %v1560
        %1562 = vmatpush1.msra.mxu0 %v1561
        %1563 = vmatprep.subr.mxu0 0.0
        %1564 = vmatpush2.msra.mxu0 0.0
        %1565 = vmatprep.subr.mxu0 0.0
        %1566 = vmatpush2.msra.mxu0 0.0
        %1567 = vmatprep.subr.mxu0 0.0
        %1568 = vmatpush2.msra.mxu0 0.0
        %1569 = vmatprep.subr.mxu0 0.0
        %1570 = vmatpush2.msra.mxu0 0.0
        %1571 = vmatprep.subr.mxu0 0.0
        %1572 = vmatpush2.msra.mxu0 0.0
        %1573 = vmatprep.subr.mxu0 0.0
        %1574 = vmatpush2.msra.mxu0 0.0
        %1575 = vmatprep.subr.mxu0 0.0
        %1576 = vmatpush2.msra.mxu0 0.0
        %1577 = vmatprep.subr.mxu0 0.0
        %1578 = vmatpush2.msra.mxu0 0.0
        %1579 = vmatprep.subr.mxu0 0.0
        %1580 = vmatpush2.msra.mxu0 0.0
        %1581 = vmatprep.subr.mxu0 0.0
        %1582 = vmatpush2.msra.mxu0 0.0
        %1583 = vmatprep.subr.mxu0 0.0
        %1584 = vmatpush2.msra.mxu0 0.0
        %1585 = vmatprep.subr.mxu0 0.0
        %1586 = vmatpush2.msra.mxu0 0.0
        %1587 = vmatprep.subr.mxu0 0.0
        %1588 = vmatpush2.msra.mxu0 0.0
        %1589 = vmatprep.subr.mxu0 0.0
        %1590 = vmatpush2.msra.mxu0 0.0
        %1591 = vmatprep.subr.mxu0 0.0
        %1592 = vmatpush2.msra.mxu0 0.0
        %1593 = vmatprep.subr.mxu0 0.0
        %1594 = vmatpush2.msra.mxu0 0.0
        %1595 = vmatprep.mubr.f32.mxu0 0.0
        %v1596 = vand.u32 %v1256, 4294901760
        %v1597 = vsub.f32 %v1256, %v1596
        %1598 = vmatmul.mubr.f32.gmra.mxu0 %v1597
        %v1599 = vpop.f32.mrf.mxu0
        %v1600 = vadd.f32 %v1496, %v1599
        %v1601 = vpop.f32.mrf.mxu0
        %1602 = vdwg.mxu0
        %1603 = vmatprep.subr.mxu0 0.0
        %v1604 = vand.u32 %v437, 4294901760
        %1605 = vmatpush1.msra.mxu0 %v1604
        %1606 = vmatprep.subr.mxu0 0.0
        %v1607 = vand.u32 %v436, 4294901760
        %1608 = vmatpush1.msra.mxu0 %v1607
        %1609 = vmatprep.subr.mxu0 0.0
        %v1610 = vand.u32 %v435, 4294901760
        %1611 = vmatpush1.msra.mxu0 %v1610
        %1612 = vmatprep.subr.mxu0 0.0
        %v1613 = vand.u32 %v434, 4294901760
        %1614 = vmatpush1.msra.mxu0 %v1613
        %1615 = vmatprep.subr.mxu0 0.0
        %v1616 = vand.u32 %v433, 4294901760
        %1617 = vmatpush1.msra.mxu0 %v1616
        %1618 = vmatprep.subr.mxu0 0.0
        %v1619 = vand.u32 %v432, 4294901760
        %1620 = vmatpush1.msra.mxu0 %v1619
        %1621 = vmatprep.subr.mxu0 0.0
        %v1622 = vand.u32 %v431, 4294901760
        %1623 = vmatpush1.msra.mxu0 %v1622
        %1624 = vmatprep.subr.mxu0 0.0
        %v1625 = vand.u32 %v430, 4294901760
        %1626 = vmatpush1.msra.mxu0 %v1625
        %1627 = vmatprep.subr.mxu0 0.0
        %v1628 = vand.u32 %v429, 4294901760
        %1629 = vmatpush1.msra.mxu0 %v1628
        %1630 = vmatprep.subr.mxu0 0.0
        %v1631 = vand.u32 %v428, 4294901760
        %1632 = vmatpush1.msra.mxu0 %v1631
        %1633 = vmatprep.subr.mxu0 0.0
        %v1634 = vand.u32 %v427, 4294901760
        %1635 = vmatpush1.msra.mxu0 %v1634
        %1636 = vmatprep.subr.mxu0 0.0
        %v1637 = vand.u32 %v426, 4294901760
        %1638 = vmatpush1.msra.mxu0 %v1637
        %1639 = vmatprep.subr.mxu0 0.0
        %v1640 = vand.u32 %v425, 4294901760
        %1641 = vmatpush1.msra.mxu0 %v1640
        %1642 = vmatprep.subr.mxu0 0.0
        %v1643 = vand.u32 %v424, 4294901760
        %1644 = vmatpush1.msra.mxu0 %v1643
        %1645 = vmatprep.subr.mxu0 0.0
        %v1646 = vand.u32 %v423, 4294901760
        %1647 = vmatpush1.msra.mxu0 %v1646
        %1648 = vmatprep.subr.mxu0 0.0
        %v1649 = vand.u32 %v422, 4294901760
        %1650 = vmatpush1.msra.mxu0 %v1649
        %1651 = vmatprep.subr.mxu0 0.0
        %1652 = vmatpush2.msra.mxu0 0.0
        %1653 = vmatprep.subr.mxu0 0.0
        %1654 = vmatpush2.msra.mxu0 0.0
        %1655 = vmatprep.subr.mxu0 0.0
        %1656 = vmatpush2.msra.mxu0 0.0
        %1657 = vmatprep.subr.mxu0 0.0
        %1658 = vmatpush2.msra.mxu0 0.0
        %1659 = vmatprep.subr.mxu0 0.0
        %1660 = vmatpush2.msra.mxu0 0.0
        %1661 = vmatprep.subr.mxu0 0.0
        %1662 = vmatpush2.msra.mxu0 0.0
        %1663 = vmatprep.subr.mxu0 0.0
        %1664 = vmatpush2.msra.mxu0 0.0
        %1665 = vmatprep.subr.mxu0 0.0
        %1666 = vmatpush2.msra.mxu0 0.0
        %1667 = vmatprep.subr.mxu0 0.0
        %1668 = vmatpush2.msra.mxu0 0.0
        %1669 = vmatprep.subr.mxu0 0.0
        %1670 = vmatpush2.msra.mxu0 0.0
        %1671 = vmatprep.subr.mxu0 0.0
        %1672 = vmatpush2.msra.mxu0 0.0
        %1673 = vmatprep.subr.mxu0 0.0
        %1674 = vmatpush2.msra.mxu0 0.0
        %1675 = vmatprep.subr.mxu0 0.0
        %1676 = vmatpush2.msra.mxu0 0.0
        %1677 = vmatprep.subr.mxu0 0.0
        %1678 = vmatpush2.msra.mxu0 0.0
        %1679 = vmatprep.subr.mxu0 0.0
        %1680 = vmatpush2.msra.mxu0 0.0
        %1681 = vmatprep.subr.mxu0 0.0
        %1682 = vmatpush2.msra.mxu0 0.0
        %1683 = vmatprep.mubr.f32.mxu0 0.0
        %v1684 = vand.u32 %v1256, 4294901760
        %v1685 = vsub.f32 %v1256, %v1684
        %v1686 = vand.u32 %v1685, 4294901760
        %1687 = vmatmul.mubr.f32.gmra.mxu0 %v1686
        %v1688 = vpop.f32.mrf.mxu0
        %v1689 = vadd.f32 %v1600, %v1688
        %v1690 = vpop.f32.mrf.mxu0
        %1691 = vdwg.mxu0
        %1692 = vmatprep.subr.mxu0 0.0
        %v1693 = vand.u32 %v437, 4294901760
        %v1694 = vsub.f32 %v437, %v1693
        %v1695 = vand.u32 %v1694, 4294901760
        %1696 = vmatpush1.msra.mxu0 %v1695
        %1697 = vmatprep.subr.mxu0 0.0
        %v1698 = vand.u32 %v436, 4294901760
        %v1699 = vsub.f32 %v436, %v1698
        %v1700 = vand.u32 %v1699, 4294901760
        %1701 = vmatpush1.msra.mxu0 %v1700
        %1702 = vmatprep.subr.mxu0 0.0
        %v1703 = vand.u32 %v435, 4294901760
        %v1704 = vsub.f32 %v435, %v1703
        %v1705 = vand.u32 %v1704, 4294901760
        %1706 = vmatpush1.msra.mxu0 %v1705
        %1707 = vmatprep.subr.mxu0 0.0
        %v1708 = vand.u32 %v434, 4294901760
        %v1709 = vsub.f32 %v434, %v1708
        %v1710 = vand.u32 %v1709, 4294901760
        %1711 = vmatpush1.msra.mxu0 %v1710
        %1712 = vmatprep.subr.mxu0 0.0
        %v1713 = vand.u32 %v433, 4294901760
        %v1714 = vsub.f32 %v433, %v1713
        %v1715 = vand.u32 %v1714, 4294901760
        %1716 = vmatpush1.msra.mxu0 %v1715
        %1717 = vmatprep.subr.mxu0 0.0
        %v1718 = vand.u32 %v432, 4294901760
        %v1719 = vsub.f32 %v432, %v1718
        %v1720 = vand.u32 %v1719, 4294901760
        %1721 = vmatpush1.msra.mxu0 %v1720
        %1722 = vmatprep.subr.mxu0 0.0
        %v1723 = vand.u32 %v431, 4294901760
        %v1724 = vsub.f32 %v431, %v1723
        %v1725 = vand.u32 %v1724, 4294901760
        %1726 = vmatpush1.msra.mxu0 %v1725
        %1727 = vmatprep.subr.mxu0 0.0
        %v1728 = vand.u32 %v430, 4294901760
        %v1729 = vsub.f32 %v430, %v1728
        %v1730 = vand.u32 %v1729, 4294901760
        %1731 = vmatpush1.msra.mxu0 %v1730
        %1732 = vmatprep.subr.mxu0 0.0
        %v1733 = vand.u32 %v429, 4294901760
        %v1734 = vsub.f32 %v429, %v1733
        %v1735 = vand.u32 %v1734, 4294901760
        %1736 = vmatpush1.msra.mxu0 %v1735
        %1737 = vmatprep.subr.mxu0 0.0
        %v1738 = vand.u32 %v428, 4294901760
        %v1739 = vsub.f32 %v428, %v1738
        %v1740 = vand.u32 %v1739, 4294901760
        %1741 = vmatpush1.msra.mxu0 %v1740
        %1742 = vmatprep.subr.mxu0 0.0
        %v1743 = vand.u32 %v427, 4294901760
        %v1744 = vsub.f32 %v427, %v1743
        %v1745 = vand.u32 %v1744, 4294901760
        %1746 = vmatpush1.msra.mxu0 %v1745
        %1747 = vmatprep.subr.mxu0 0.0
        %v1748 = vand.u32 %v426, 4294901760
        %v1749 = vsub.f32 %v426, %v1748
        %v1750 = vand.u32 %v1749, 4294901760
        %1751 = vmatpush1.msra.mxu0 %v1750
        %1752 = vmatprep.subr.mxu0 0.0
        %v1753 = vand.u32 %v425, 4294901760
        %v1754 = vsub.f32 %v425, %v1753
        %v1755 = vand.u32 %v1754, 4294901760
        %1756 = vmatpush1.msra.mxu0 %v1755
        %1757 = vmatprep.subr.mxu0 0.0
        %v1758 = vand.u32 %v424, 4294901760
        %v1759 = vsub.f32 %v424, %v1758
        %v1760 = vand.u32 %v1759, 4294901760
        %1761 = vmatpush1.msra.mxu0 %v1760
        %1762 = vmatprep.subr.mxu0 0.0
        %v1763 = vand.u32 %v423, 4294901760
        %v1764 = vsub.f32 %v423, %v1763
        %v1765 = vand.u32 %v1764, 4294901760
        %1766 = vmatpush1.msra.mxu0 %v1765
        %1767 = vmatprep.subr.mxu0 0.0
        %v1768 = vand.u32 %v422, 4294901760
        %v1769 = vsub.f32 %v422, %v1768
        %v1770 = vand.u32 %v1769, 4294901760
        %1771 = vmatpush1.msra.mxu0 %v1770
        %1772 = vmatprep.subr.mxu0 0.0
        %1773 = vmatpush2.msra.mxu0 0.0
        %1774 = vmatprep.subr.mxu0 0.0
        %1775 = vmatpush2.msra.mxu0 0.0
        %1776 = vmatprep.subr.mxu0 0.0
        %1777 = vmatpush2.msra.mxu0 0.0
        %1778 = vmatprep.subr.mxu0 0.0
        %1779 = vmatpush2.msra.mxu0 0.0
        %1780 = vmatprep.subr.mxu0 0.0
        %1781 = vmatpush2.msra.mxu0 0.0
        %1782 = vmatprep.subr.mxu0 0.0
        %1783 = vmatpush2.msra.mxu0 0.0
        %1784 = vmatprep.subr.mxu0 0.0
        %1785 = vmatpush2.msra.mxu0 0.0
        %1786 = vmatprep.subr.mxu0 0.0
        %1787 = vmatpush2.msra.mxu0 0.0
        %1788 = vmatprep.subr.mxu0 0.0
        %1789 = vmatpush2.msra.mxu0 0.0
        %1790 = vmatprep.subr.mxu0 0.0
        %1791 = vmatpush2.msra.mxu0 0.0
        %1792 = vmatprep.subr.mxu0 0.0
        %1793 = vmatpush2.msra.mxu0 0.0
        %1794 = vmatprep.subr.mxu0 0.0
        %1795 = vmatpush2.msra.mxu0 0.0
        %1796 = vmatprep.subr.mxu0 0.0
        %1797 = vmatpush2.msra.mxu0 0.0
        %1798 = vmatprep.subr.mxu0 0.0
        %1799 = vmatpush2.msra.mxu0 0.0
        %1800 = vmatprep.subr.mxu0 0.0
        %1801 = vmatpush2.msra.mxu0 0.0
        %1802 = vmatprep.subr.mxu0 0.0
        %1803 = vmatpush2.msra.mxu0 0.0
        %1804 = vmatprep.mubr.f32.mxu0 0.0
        %v1805 = vand.u32 %v1256, 4294901760
        %1806 = vmatmul.mubr.f32.gmra.mxu0 %v1805
        %v1807 = vpop.f32.mrf.mxu0
        %v1808 = vadd.f32 %v1689, %v1807
        %v1809 = vpop.f32.mrf.mxu0
        %1810 = vdwg.mxu0
        %1811 = vmatprep.subr.mxu0 0.0
        %v1812 = vand.u32 %v437, 4294901760
        %1813 = vmatpush1.msra.mxu0 %v1812
        %1814 = vmatprep.subr.mxu0 0.0
        %v1815 = vand.u32 %v436, 4294901760
        %1816 = vmatpush1.msra.mxu0 %v1815
        %1817 = vmatprep.subr.mxu0 0.0
        %v1818 = vand.u32 %v435, 4294901760
        %1819 = vmatpush1.msra.mxu0 %v1818
        %1820 = vmatprep.subr.mxu0 0.0
        %v1821 = vand.u32 %v434, 4294901760
        %1822 = vmatpush1.msra.mxu0 %v1821
        %1823 = vmatprep.subr.mxu0 0.0
        %v1824 = vand.u32 %v433, 4294901760
        %1825 = vmatpush1.msra.mxu0 %v1824
        %1826 = vmatprep.subr.mxu0 0.0
        %v1827 = vand.u32 %v432, 4294901760
        %1828 = vmatpush1.msra.mxu0 %v1827
        %1829 = vmatprep.subr.mxu0 0.0
        %v1830 = vand.u32 %v431, 4294901760
        %1831 = vmatpush1.msra.mxu0 %v1830
        %1832 = vmatprep.subr.mxu0 0.0
        %v1833 = vand.u32 %v430, 4294901760
        %1834 = vmatpush1.msra.mxu0 %v1833
        %1835 = vmatprep.subr.mxu0 0.0
        %v1836 = vand.u32 %v429, 4294901760
        %1837 = vmatpush1.msra.mxu0 %v1836
        %1838 = vmatprep.subr.mxu0 0.0
        %v1839 = vand.u32 %v428, 4294901760
        %1840 = vmatpush1.msra.mxu0 %v1839
        %1841 = vmatprep.subr.mxu0 0.0
        %v1842 = vand.u32 %v427, 4294901760
        %1843 = vmatpush1.msra.mxu0 %v1842
        %1844 = vmatprep.subr.mxu0 0.0
        %v1845 = vand.u32 %v426, 4294901760
        %1846 = vmatpush1.msra.mxu0 %v1845
        %1847 = vmatprep.subr.mxu0 0.0
        %v1848 = vand.u32 %v425, 4294901760
        %1849 = vmatpush1.msra.mxu0 %v1848
        %1850 = vmatprep.subr.mxu0 0.0
        %v1851 = vand.u32 %v424, 4294901760
        %1852 = vmatpush1.msra.mxu0 %v1851
        %1853 = vmatprep.subr.mxu0 0.0
        %v1854 = vand.u32 %v423, 4294901760
        %1855 = vmatpush1.msra.mxu0 %v1854
        %1856 = vmatprep.subr.mxu0 0.0
        %v1857 = vand.u32 %v422, 4294901760
        %1858 = vmatpush1.msra.mxu0 %v1857
        %1859 = vmatprep.subr.mxu0 0.0
        %1860 = vmatpush2.msra.mxu0 0.0
        %1861 = vmatprep.subr.mxu0 0.0
        %1862 = vmatpush2.msra.mxu0 0.0
        %1863 = vmatprep.subr.mxu0 0.0
        %1864 = vmatpush2.msra.mxu0 0.0
        %1865 = vmatprep.subr.mxu0 0.0
        %1866 = vmatpush2.msra.mxu0 0.0
        %1867 = vmatprep.subr.mxu0 0.0
        %1868 = vmatpush2.msra.mxu0 0.0
        %1869 = vmatprep.subr.mxu0 0.0
        %1870 = vmatpush2.msra.mxu0 0.0
        %1871 = vmatprep.subr.mxu0 0.0
        %1872 = vmatpush2.msra.mxu0 0.0
        %1873 = vmatprep.subr.mxu0 0.0
        %1874 = vmatpush2.msra.mxu0 0.0
        %1875 = vmatprep.subr.mxu0 0.0
        %1876 = vmatpush2.msra.mxu0 0.0
        %1877 = vmatprep.subr.mxu0 0.0
        %1878 = vmatpush2.msra.mxu0 0.0
        %1879 = vmatprep.subr.mxu0 0.0
        %1880 = vmatpush2.msra.mxu0 0.0
        %1881 = vmatprep.subr.mxu0 0.0
        %1882 = vmatpush2.msra.mxu0 0.0
        %1883 = vmatprep.subr.mxu0 0.0
        %1884 = vmatpush2.msra.mxu0 0.0
        %1885 = vmatprep.subr.mxu0 0.0
        %1886 = vmatpush2.msra.mxu0 0.0
        %1887 = vmatprep.subr.mxu0 0.0
        %1888 = vmatpush2.msra.mxu0 0.0
        %1889 = vmatprep.subr.mxu0 0.0
        %1890 = vmatpush2.msra.mxu0 0.0
        %1891 = vmatprep.mubr.f32.mxu0 0.0
        %v1892 = vand.u32 %v1256, 4294901760
        %1893 = vmatmul.mubr.f32.gmra.mxu0 %v1892
        %v1894 = vpop.f32.mrf.mxu0
        %v1895 = vadd.f32 %v1808, %v1894
        %v1896 = vpop.f32.mrf.mxu0
        %1897 = vdwg.mxu0
        %v1898 = vmul.f32 %v1895, %v479
        %vm1899 = vcmask 9216
        %v1900 = vsel %vm1899, %v1898, 0.0
        %1901 = vadd.xlane.f32.xlu0 %v1900
        %v1902 = vpop.xlane.xlu0 %1901
        %v1903 = vrot.slane %v1902, 4
        %v1904 = vadd.f32 %v1902, %v1903
        %v1905 = vrot.slane %v1904, 2
        %v1906 = vadd.f32 %v1904, %v1905
        %v1907 = vrot.slane %v1906, 1
        %v1908 = vadd.f32 %v1906, %v1907
        %s1909 = vtos %v1908
        %v1910 = vadd.f32 %v421, 1e-06
        %v1911 = vlog2.pop %v1910
        %v1912 = vmul.f32 %v1911, 0.6931472
        %v1913 = vsub.f32 0.0, %v1912
        %1914 = vmatprep.subr.mxu0 0.0
        %v1915 = vand.u32 %v437, 4294901760
        %1916 = vmatpush1.msra.mxu0 %v1915
        %1917 = vmatprep.subr.mxu0 0.0
        %v1918 = vand.u32 %v436, 4294901760
        %1919 = vmatpush1.msra.mxu0 %v1918
        %1920 = vmatprep.subr.mxu0 0.0
        %v1921 = vand.u32 %v435, 4294901760
        %1922 = vmatpush1.msra.mxu0 %v1921
        %1923 = vmatprep.subr.mxu0 0.0
        %v1924 = vand.u32 %v434, 4294901760
        %1925 = vmatpush1.msra.mxu0 %v1924
        %1926 = vmatprep.subr.mxu0 0.0
        %v1927 = vand.u32 %v433, 4294901760
        %1928 = vmatpush1.msra.mxu0 %v1927
        %1929 = vmatprep.subr.mxu0 0.0
        %v1930 = vand.u32 %v432, 4294901760
        %1931 = vmatpush1.msra.mxu0 %v1930
        %1932 = vmatprep.subr.mxu0 0.0
        %v1933 = vand.u32 %v431, 4294901760
        %1934 = vmatpush1.msra.mxu0 %v1933
        %1935 = vmatprep.subr.mxu0 0.0
        %v1936 = vand.u32 %v430, 4294901760
        %1937 = vmatpush1.msra.mxu0 %v1936
        %1938 = vmatprep.subr.mxu0 0.0
        %v1939 = vand.u32 %v429, 4294901760
        %1940 = vmatpush1.msra.mxu0 %v1939
        %1941 = vmatprep.subr.mxu0 0.0
        %v1942 = vand.u32 %v428, 4294901760
        %1943 = vmatpush1.msra.mxu0 %v1942
        %1944 = vmatprep.subr.mxu0 0.0
        %v1945 = vand.u32 %v427, 4294901760
        %1946 = vmatpush1.msra.mxu0 %v1945
        %1947 = vmatprep.subr.mxu0 0.0
        %v1948 = vand.u32 %v426, 4294901760
        %1949 = vmatpush1.msra.mxu0 %v1948
        %1950 = vmatprep.subr.mxu0 0.0
        %v1951 = vand.u32 %v425, 4294901760
        %1952 = vmatpush1.msra.mxu0 %v1951
        %1953 = vmatprep.subr.mxu0 0.0
        %v1954 = vand.u32 %v424, 4294901760
        %1955 = vmatpush1.msra.mxu0 %v1954
        %1956 = vmatprep.subr.mxu0 0.0
        %v1957 = vand.u32 %v423, 4294901760
        %1958 = vmatpush1.msra.mxu0 %v1957
        %1959 = vmatprep.subr.mxu0 0.0
        %v1960 = vand.u32 %v422, 4294901760
        %1961 = vmatpush1.msra.mxu0 %v1960
        %1962 = vmatprep.subr.mxu0 0.0
        %1963 = vmatpush2.msra.mxu0 0.0
        %1964 = vmatprep.subr.mxu0 0.0
        %1965 = vmatpush2.msra.mxu0 0.0
        %1966 = vmatprep.subr.mxu0 0.0
        %1967 = vmatpush2.msra.mxu0 0.0
        %1968 = vmatprep.subr.mxu0 0.0
        %1969 = vmatpush2.msra.mxu0 0.0
        %1970 = vmatprep.subr.mxu0 0.0
        %1971 = vmatpush2.msra.mxu0 0.0
        %1972 = vmatprep.subr.mxu0 0.0
        %1973 = vmatpush2.msra.mxu0 0.0
        %1974 = vmatprep.subr.mxu0 0.0
        %1975 = vmatpush2.msra.mxu0 0.0
        %1976 = vmatprep.subr.mxu0 0.0
        %1977 = vmatpush2.msra.mxu0 0.0
        %1978 = vmatprep.subr.mxu0 0.0
        %1979 = vmatpush2.msra.mxu0 0.0
        %1980 = vmatprep.subr.mxu0 0.0
        %1981 = vmatpush2.msra.mxu0 0.0
        %1982 = vmatprep.subr.mxu0 0.0
        %1983 = vmatpush2.msra.mxu0 0.0
        %1984 = vmatprep.subr.mxu0 0.0
        %1985 = vmatpush2.msra.mxu0 0.0
        %1986 = vmatprep.subr.mxu0 0.0
        %1987 = vmatpush2.msra.mxu0 0.0
        %1988 = vmatprep.subr.mxu0 0.0
        %1989 = vmatpush2.msra.mxu0 0.0
        %1990 = vmatprep.subr.mxu0 0.0
        %1991 = vmatpush2.msra.mxu0 0.0
        %1992 = vmatprep.subr.mxu0 0.0
        %1993 = vmatpush2.msra.mxu0 0.0
        %1994 = vmatprep.mubr.f32.mxu0 0.0
        %v1995 = vand.u32 %v1913, 4294901760
        %v1996 = vsub.f32 %v1913, %v1995
        %v1997 = vand.u32 %v1996, 4294901760
        %v1998 = vsub.f32 %v1996, %v1997
        %v1999 = vand.u32 %v1998, 4294901760
        %2000 = vmatmul.mubr.f32.gmra.mxu0 %v1999
        %v2001 = vpop.f32.mrf.mxu0
        %v2002 = vadd.f32 0.0, %v2001
        %v2003 = vpop.f32.mrf.mxu0
        %2004 = vdwg.mxu0
        %2005 = vmatprep.subr.mxu0 0.0
        %v2006 = vand.u32 %v437, 4294901760
        %v2007 = vsub.f32 %v437, %v2006
        %v2008 = vand.u32 %v2007, 4294901760
        %v2009 = vsub.f32 %v2007, %v2008
        %v2010 = vand.u32 %v2009, 4294901760
        %2011 = vmatpush1.msra.mxu0 %v2010
        %2012 = vmatprep.subr.mxu0 0.0
        %v2013 = vand.u32 %v436, 4294901760
        %v2014 = vsub.f32 %v436, %v2013
        %v2015 = vand.u32 %v2014, 4294901760
        %v2016 = vsub.f32 %v2014, %v2015
        %v2017 = vand.u32 %v2016, 4294901760
        %2018 = vmatpush1.msra.mxu0 %v2017
        %2019 = vmatprep.subr.mxu0 0.0
        %v2020 = vand.u32 %v435, 4294901760
        %v2021 = vsub.f32 %v435, %v2020
        %v2022 = vand.u32 %v2021, 4294901760
        %v2023 = vsub.f32 %v2021, %v2022
        %v2024 = vand.u32 %v2023, 4294901760
        %2025 = vmatpush1.msra.mxu0 %v2024
        %2026 = vmatprep.subr.mxu0 0.0
        %v2027 = vand.u32 %v434, 4294901760
        %v2028 = vsub.f32 %v434, %v2027
        %v2029 = vand.u32 %v2028, 4294901760
        %v2030 = vsub.f32 %v2028, %v2029
        %v2031 = vand.u32 %v2030, 4294901760
        %2032 = vmatpush1.msra.mxu0 %v2031
        %2033 = vmatprep.subr.mxu0 0.0
        %v2034 = vand.u32 %v433, 4294901760
        %v2035 = vsub.f32 %v433, %v2034
        %v2036 = vand.u32 %v2035, 4294901760
        %v2037 = vsub.f32 %v2035, %v2036
        %v2038 = vand.u32 %v2037, 4294901760
        %2039 = vmatpush1.msra.mxu0 %v2038
        %2040 = vmatprep.subr.mxu0 0.0
        %v2041 = vand.u32 %v432, 4294901760
        %v2042 = vsub.f32 %v432, %v2041
        %v2043 = vand.u32 %v2042, 4294901760
        %v2044 = vsub.f32 %v2042, %v2043
        %v2045 = vand.u32 %v2044, 4294901760
        %2046 = vmatpush1.msra.mxu0 %v2045
        %2047 = vmatprep.subr.mxu0 0.0
        %v2048 = vand.u32 %v431, 4294901760
        %v2049 = vsub.f32 %v431, %v2048
        %v2050 = vand.u32 %v2049, 4294901760
        %v2051 = vsub.f32 %v2049, %v2050
        %v2052 = vand.u32 %v2051, 4294901760
        %2053 = vmatpush1.msra.mxu0 %v2052
        %2054 = vmatprep.subr.mxu0 0.0
        %v2055 = vand.u32 %v430, 4294901760
        %v2056 = vsub.f32 %v430, %v2055
        %v2057 = vand.u32 %v2056, 4294901760
        %v2058 = vsub.f32 %v2056, %v2057
        %v2059 = vand.u32 %v2058, 4294901760
        %2060 = vmatpush1.msra.mxu0 %v2059
        %2061 = vmatprep.subr.mxu0 0.0
        %v2062 = vand.u32 %v429, 4294901760
        %v2063 = vsub.f32 %v429, %v2062
        %v2064 = vand.u32 %v2063, 4294901760
        %v2065 = vsub.f32 %v2063, %v2064
        %v2066 = vand.u32 %v2065, 4294901760
        %2067 = vmatpush1.msra.mxu0 %v2066
        %2068 = vmatprep.subr.mxu0 0.0
        %v2069 = vand.u32 %v428, 4294901760
        %v2070 = vsub.f32 %v428, %v2069
        %v2071 = vand.u32 %v2070, 4294901760
        %v2072 = vsub.f32 %v2070, %v2071
        %v2073 = vand.u32 %v2072, 4294901760
        %2074 = vmatpush1.msra.mxu0 %v2073
        %2075 = vmatprep.subr.mxu0 0.0
        %v2076 = vand.u32 %v427, 4294901760
        %v2077 = vsub.f32 %v427, %v2076
        %v2078 = vand.u32 %v2077, 4294901760
        %v2079 = vsub.f32 %v2077, %v2078
        %v2080 = vand.u32 %v2079, 4294901760
        %2081 = vmatpush1.msra.mxu0 %v2080
        %2082 = vmatprep.subr.mxu0 0.0
        %v2083 = vand.u32 %v426, 4294901760
        %v2084 = vsub.f32 %v426, %v2083
        %v2085 = vand.u32 %v2084, 4294901760
        %v2086 = vsub.f32 %v2084, %v2085
        %v2087 = vand.u32 %v2086, 4294901760
        %2088 = vmatpush1.msra.mxu0 %v2087
        %2089 = vmatprep.subr.mxu0 0.0
        %v2090 = vand.u32 %v425, 4294901760
        %v2091 = vsub.f32 %v425, %v2090
        %v2092 = vand.u32 %v2091, 4294901760
        %v2093 = vsub.f32 %v2091, %v2092
        %v2094 = vand.u32 %v2093, 4294901760
        %2095 = vmatpush1.msra.mxu0 %v2094
        %2096 = vmatprep.subr.mxu0 0.0
        %v2097 = vand.u32 %v424, 4294901760
        %v2098 = vsub.f32 %v424, %v2097
        %v2099 = vand.u32 %v2098, 4294901760
        %v2100 = vsub.f32 %v2098, %v2099
        %v2101 = vand.u32 %v2100, 4294901760
        %2102 = vmatpush1.msra.mxu0 %v2101
        %2103 = vmatprep.subr.mxu0 0.0
        %v2104 = vand.u32 %v423, 4294901760
        %v2105 = vsub.f32 %v423, %v2104
        %v2106 = vand.u32 %v2105, 4294901760
        %v2107 = vsub.f32 %v2105, %v2106
        %v2108 = vand.u32 %v2107, 4294901760
        %2109 = vmatpush1.msra.mxu0 %v2108
        %2110 = vmatprep.subr.mxu0 0.0
        %v2111 = vand.u32 %v422, 4294901760
        %v2112 = vsub.f32 %v422, %v2111
        %v2113 = vand.u32 %v2112, 4294901760
        %v2114 = vsub.f32 %v2112, %v2113
        %v2115 = vand.u32 %v2114, 4294901760
        %2116 = vmatpush1.msra.mxu0 %v2115
        %2117 = vmatprep.subr.mxu0 0.0
        %2118 = vmatpush2.msra.mxu0 0.0
        %2119 = vmatprep.subr.mxu0 0.0
        %2120 = vmatpush2.msra.mxu0 0.0
        %2121 = vmatprep.subr.mxu0 0.0
        %2122 = vmatpush2.msra.mxu0 0.0
        %2123 = vmatprep.subr.mxu0 0.0
        %2124 = vmatpush2.msra.mxu0 0.0
        %2125 = vmatprep.subr.mxu0 0.0
        %2126 = vmatpush2.msra.mxu0 0.0
        %2127 = vmatprep.subr.mxu0 0.0
        %2128 = vmatpush2.msra.mxu0 0.0
        %2129 = vmatprep.subr.mxu0 0.0
        %2130 = vmatpush2.msra.mxu0 0.0
        %2131 = vmatprep.subr.mxu0 0.0
        %2132 = vmatpush2.msra.mxu0 0.0
        %2133 = vmatprep.subr.mxu0 0.0
        %2134 = vmatpush2.msra.mxu0 0.0
        %2135 = vmatprep.subr.mxu0 0.0
        %2136 = vmatpush2.msra.mxu0 0.0
        %2137 = vmatprep.subr.mxu0 0.0
        %2138 = vmatpush2.msra.mxu0 0.0
        %2139 = vmatprep.subr.mxu0 0.0
        %2140 = vmatpush2.msra.mxu0 0.0
        %2141 = vmatprep.subr.mxu0 0.0
        %2142 = vmatpush2.msra.mxu0 0.0
        %2143 = vmatprep.subr.mxu0 0.0
        %2144 = vmatpush2.msra.mxu0 0.0
        %2145 = vmatprep.subr.mxu0 0.0
        %2146 = vmatpush2.msra.mxu0 0.0
        %2147 = vmatprep.subr.mxu0 0.0
        %2148 = vmatpush2.msra.mxu0 0.0
        %2149 = vmatprep.mubr.f32.mxu0 0.0
        %v2150 = vand.u32 %v1913, 4294901760
        %2151 = vmatmul.mubr.f32.gmra.mxu0 %v2150
        %v2152 = vpop.f32.mrf.mxu0
        %v2153 = vadd.f32 %v2002, %v2152
        %v2154 = vpop.f32.mrf.mxu0
        %2155 = vdwg.mxu0
        %2156 = vmatprep.subr.mxu0 0.0
        %v2157 = vand.u32 %v437, 4294901760
        %v2158 = vsub.f32 %v437, %v2157
        %2159 = vmatpush1.msra.mxu0 %v2158
        %2160 = vmatprep.subr.mxu0 0.0
        %v2161 = vand.u32 %v436, 4294901760
        %v2162 = vsub.f32 %v436, %v2161
        %2163 = vmatpush1.msra.mxu0 %v2162
        %2164 = vmatprep.subr.mxu0 0.0
        %v2165 = vand.u32 %v435, 4294901760
        %v2166 = vsub.f32 %v435, %v2165
        %2167 = vmatpush1.msra.mxu0 %v2166
        %2168 = vmatprep.subr.mxu0 0.0
        %v2169 = vand.u32 %v434, 4294901760
        %v2170 = vsub.f32 %v434, %v2169
        %2171 = vmatpush1.msra.mxu0 %v2170
        %2172 = vmatprep.subr.mxu0 0.0
        %v2173 = vand.u32 %v433, 4294901760
        %v2174 = vsub.f32 %v433, %v2173
        %2175 = vmatpush1.msra.mxu0 %v2174
        %2176 = vmatprep.subr.mxu0 0.0
        %v2177 = vand.u32 %v432, 4294901760
        %v2178 = vsub.f32 %v432, %v2177
        %2179 = vmatpush1.msra.mxu0 %v2178
        %2180 = vmatprep.subr.mxu0 0.0
        %v2181 = vand.u32 %v431, 4294901760
        %v2182 = vsub.f32 %v431, %v2181
        %2183 = vmatpush1.msra.mxu0 %v2182
        %2184 = vmatprep.subr.mxu0 0.0
        %v2185 = vand.u32 %v430, 4294901760
        %v2186 = vsub.f32 %v430, %v2185
        %2187 = vmatpush1.msra.mxu0 %v2186
        %2188 = vmatprep.subr.mxu0 0.0
        %v2189 = vand.u32 %v429, 4294901760
        %v2190 = vsub.f32 %v429, %v2189
        %2191 = vmatpush1.msra.mxu0 %v2190
        %2192 = vmatprep.subr.mxu0 0.0
        %v2193 = vand.u32 %v428, 4294901760
        %v2194 = vsub.f32 %v428, %v2193
        %2195 = vmatpush1.msra.mxu0 %v2194
        %2196 = vmatprep.subr.mxu0 0.0
        %v2197 = vand.u32 %v427, 4294901760
        %v2198 = vsub.f32 %v427, %v2197
        %2199 = vmatpush1.msra.mxu0 %v2198
        %2200 = vmatprep.subr.mxu0 0.0
        %v2201 = vand.u32 %v426, 4294901760
        %v2202 = vsub.f32 %v426, %v2201
        %2203 = vmatpush1.msra.mxu0 %v2202
        %2204 = vmatprep.subr.mxu0 0.0
        %v2205 = vand.u32 %v425, 4294901760
        %v2206 = vsub.f32 %v425, %v2205
        %2207 = vmatpush1.msra.mxu0 %v2206
        %2208 = vmatprep.subr.mxu0 0.0
        %v2209 = vand.u32 %v424, 4294901760
        %v2210 = vsub.f32 %v424, %v2209
        %2211 = vmatpush1.msra.mxu0 %v2210
        %2212 = vmatprep.subr.mxu0 0.0
        %v2213 = vand.u32 %v423, 4294901760
        %v2214 = vsub.f32 %v423, %v2213
        %2215 = vmatpush1.msra.mxu0 %v2214
        %2216 = vmatprep.subr.mxu0 0.0
        %v2217 = vand.u32 %v422, 4294901760
        %v2218 = vsub.f32 %v422, %v2217
        %2219 = vmatpush1.msra.mxu0 %v2218
        %2220 = vmatprep.subr.mxu0 0.0
        %2221 = vmatpush2.msra.mxu0 0.0
        %2222 = vmatprep.subr.mxu0 0.0
        %2223 = vmatpush2.msra.mxu0 0.0
        %2224 = vmatprep.subr.mxu0 0.0
        %2225 = vmatpush2.msra.mxu0 0.0
        %2226 = vmatprep.subr.mxu0 0.0
        %2227 = vmatpush2.msra.mxu0 0.0
        %2228 = vmatprep.subr.mxu0 0.0
        %2229 = vmatpush2.msra.mxu0 0.0
        %2230 = vmatprep.subr.mxu0 0.0
        %2231 = vmatpush2.msra.mxu0 0.0
        %2232 = vmatprep.subr.mxu0 0.0
        %2233 = vmatpush2.msra.mxu0 0.0
        %2234 = vmatprep.subr.mxu0 0.0
        %2235 = vmatpush2.msra.mxu0 0.0
        %2236 = vmatprep.subr.mxu0 0.0
        %2237 = vmatpush2.msra.mxu0 0.0
        %2238 = vmatprep.subr.mxu0 0.0
        %2239 = vmatpush2.msra.mxu0 0.0
        %2240 = vmatprep.subr.mxu0 0.0
        %2241 = vmatpush2.msra.mxu0 0.0
        %2242 = vmatprep.subr.mxu0 0.0
        %2243 = vmatpush2.msra.mxu0 0.0
        %2244 = vmatprep.subr.mxu0 0.0
        %2245 = vmatpush2.msra.mxu0 0.0
        %2246 = vmatprep.subr.mxu0 0.0
        %2247 = vmatpush2.msra.mxu0 0.0
        %2248 = vmatprep.subr.mxu0 0.0
        %2249 = vmatpush2.msra.mxu0 0.0
        %2250 = vmatprep.subr.mxu0 0.0
        %2251 = vmatpush2.msra.mxu0 0.0
        %2252 = vmatprep.mubr.f32.mxu0 0.0
        %v2253 = vand.u32 %v1913, 4294901760
        %v2254 = vsub.f32 %v1913, %v2253
        %2255 = vmatmul.mubr.f32.gmra.mxu0 %v2254
        %v2256 = vpop.f32.mrf.mxu0
        %v2257 = vadd.f32 %v2153, %v2256
        %v2258 = vpop.f32.mrf.mxu0
        %2259 = vdwg.mxu0
        %2260 = vmatprep.subr.mxu0 0.0
        %v2261 = vand.u32 %v437, 4294901760
        %2262 = vmatpush1.msra.mxu0 %v2261
        %2263 = vmatprep.subr.mxu0 0.0
        %v2264 = vand.u32 %v436, 4294901760
        %2265 = vmatpush1.msra.mxu0 %v2264
        %2266 = vmatprep.subr.mxu0 0.0
        %v2267 = vand.u32 %v435, 4294901760
        %2268 = vmatpush1.msra.mxu0 %v2267
        %2269 = vmatprep.subr.mxu0 0.0
        %v2270 = vand.u32 %v434, 4294901760
        %2271 = vmatpush1.msra.mxu0 %v2270
        %2272 = vmatprep.subr.mxu0 0.0
        %v2273 = vand.u32 %v433, 4294901760
        %2274 = vmatpush1.msra.mxu0 %v2273
        %2275 = vmatprep.subr.mxu0 0.0
        %v2276 = vand.u32 %v432, 4294901760
        %2277 = vmatpush1.msra.mxu0 %v2276
        %2278 = vmatprep.subr.mxu0 0.0
        %v2279 = vand.u32 %v431, 4294901760
        %2280 = vmatpush1.msra.mxu0 %v2279
        %2281 = vmatprep.subr.mxu0 0.0
        %v2282 = vand.u32 %v430, 4294901760
        %2283 = vmatpush1.msra.mxu0 %v2282
        %2284 = vmatprep.subr.mxu0 0.0
        %v2285 = vand.u32 %v429, 4294901760
        %2286 = vmatpush1.msra.mxu0 %v2285
        %2287 = vmatprep.subr.mxu0 0.0
        %v2288 = vand.u32 %v428, 4294901760
        %2289 = vmatpush1.msra.mxu0 %v2288
        %2290 = vmatprep.subr.mxu0 0.0
        %v2291 = vand.u32 %v427, 4294901760
        %2292 = vmatpush1.msra.mxu0 %v2291
        %2293 = vmatprep.subr.mxu0 0.0
        %v2294 = vand.u32 %v426, 4294901760
        %2295 = vmatpush1.msra.mxu0 %v2294
        %2296 = vmatprep.subr.mxu0 0.0
        %v2297 = vand.u32 %v425, 4294901760
        %2298 = vmatpush1.msra.mxu0 %v2297
        %2299 = vmatprep.subr.mxu0 0.0
        %v2300 = vand.u32 %v424, 4294901760
        %2301 = vmatpush1.msra.mxu0 %v2300
        %2302 = vmatprep.subr.mxu0 0.0
        %v2303 = vand.u32 %v423, 4294901760
        %2304 = vmatpush1.msra.mxu0 %v2303
        %2305 = vmatprep.subr.mxu0 0.0
        %v2306 = vand.u32 %v422, 4294901760
        %2307 = vmatpush1.msra.mxu0 %v2306
        %2308 = vmatprep.subr.mxu0 0.0
        %2309 = vmatpush2.msra.mxu0 0.0
        %2310 = vmatprep.subr.mxu0 0.0
        %2311 = vmatpush2.msra.mxu0 0.0
        %2312 = vmatprep.subr.mxu0 0.0
        %2313 = vmatpush2.msra.mxu0 0.0
        %2314 = vmatprep.subr.mxu0 0.0
        %2315 = vmatpush2.msra.mxu0 0.0
        %2316 = vmatprep.subr.mxu0 0.0
        %2317 = vmatpush2.msra.mxu0 0.0
        %2318 = vmatprep.subr.mxu0 0.0
        %2319 = vmatpush2.msra.mxu0 0.0
        %2320 = vmatprep.subr.mxu0 0.0
        %2321 = vmatpush2.msra.mxu0 0.0
        %2322 = vmatprep.subr.mxu0 0.0
        %2323 = vmatpush2.msra.mxu0 0.0
        %2324 = vmatprep.subr.mxu0 0.0
        %2325 = vmatpush2.msra.mxu0 0.0
        %2326 = vmatprep.subr.mxu0 0.0
        %2327 = vmatpush2.msra.mxu0 0.0
        %2328 = vmatprep.subr.mxu0 0.0
        %2329 = vmatpush2.msra.mxu0 0.0
        %2330 = vmatprep.subr.mxu0 0.0
        %2331 = vmatpush2.msra.mxu0 0.0
        %2332 = vmatprep.subr.mxu0 0.0
        %2333 = vmatpush2.msra.mxu0 0.0
        %2334 = vmatprep.subr.mxu0 0.0
        %2335 = vmatpush2.msra.mxu0 0.0
        %2336 = vmatprep.subr.mxu0 0.0
        %2337 = vmatpush2.msra.mxu0 0.0
        %2338 = vmatprep.subr.mxu0 0.0
        %2339 = vmatpush2.msra.mxu0 0.0
        %2340 = vmatprep.mubr.f32.mxu0 0.0
        %v2341 = vand.u32 %v1913, 4294901760
        %v2342 = vsub.f32 %v1913, %v2341
        %v2343 = vand.u32 %v2342, 4294901760
        %2344 = vmatmul.mubr.f32.gmra.mxu0 %v2343
        %v2345 = vpop.f32.mrf.mxu0
        %v2346 = vadd.f32 %v2257, %v2345
        %v2347 = vpop.f32.mrf.mxu0
        %2348 = vdwg.mxu0
        %2349 = vmatprep.subr.mxu0 0.0
        %v2350 = vand.u32 %v437, 4294901760
        %v2351 = vsub.f32 %v437, %v2350
        %v2352 = vand.u32 %v2351, 4294901760
        %2353 = vmatpush1.msra.mxu0 %v2352
        %2354 = vmatprep.subr.mxu0 0.0
        %v2355 = vand.u32 %v436, 4294901760
        %v2356 = vsub.f32 %v436, %v2355
        %v2357 = vand.u32 %v2356, 4294901760
        %2358 = vmatpush1.msra.mxu0 %v2357
        %2359 = vmatprep.subr.mxu0 0.0
        %v2360 = vand.u32 %v435, 4294901760
        %v2361 = vsub.f32 %v435, %v2360
        %v2362 = vand.u32 %v2361, 4294901760
        %2363 = vmatpush1.msra.mxu0 %v2362
        %2364 = vmatprep.subr.mxu0 0.0
        %v2365 = vand.u32 %v434, 4294901760
        %v2366 = vsub.f32 %v434, %v2365
        %v2367 = vand.u32 %v2366, 4294901760
        %2368 = vmatpush1.msra.mxu0 %v2367
        %2369 = vmatprep.subr.mxu0 0.0
        %v2370 = vand.u32 %v433, 4294901760
        %v2371 = vsub.f32 %v433, %v2370
        %v2372 = vand.u32 %v2371, 4294901760
        %2373 = vmatpush1.msra.mxu0 %v2372
        %2374 = vmatprep.subr.mxu0 0.0
        %v2375 = vand.u32 %v432, 4294901760
        %v2376 = vsub.f32 %v432, %v2375
        %v2377 = vand.u32 %v2376, 4294901760
        %2378 = vmatpush1.msra.mxu0 %v2377
        %2379 = vmatprep.subr.mxu0 0.0
        %v2380 = vand.u32 %v431, 4294901760
        %v2381 = vsub.f32 %v431, %v2380
        %v2382 = vand.u32 %v2381, 4294901760
        %2383 = vmatpush1.msra.mxu0 %v2382
        %2384 = vmatprep.subr.mxu0 0.0
        %v2385 = vand.u32 %v430, 4294901760
        %v2386 = vsub.f32 %v430, %v2385
        %v2387 = vand.u32 %v2386, 4294901760
        %2388 = vmatpush1.msra.mxu0 %v2387
        %2389 = vmatprep.subr.mxu0 0.0
        %v2390 = vand.u32 %v429, 4294901760
        %v2391 = vsub.f32 %v429, %v2390
        %v2392 = vand.u32 %v2391, 4294901760
        %2393 = vmatpush1.msra.mxu0 %v2392
        %2394 = vmatprep.subr.mxu0 0.0
        %v2395 = vand.u32 %v428, 4294901760
        %v2396 = vsub.f32 %v428, %v2395
        %v2397 = vand.u32 %v2396, 4294901760
        %2398 = vmatpush1.msra.mxu0 %v2397
        %2399 = vmatprep.subr.mxu0 0.0
        %v2400 = vand.u32 %v427, 4294901760
        %v2401 = vsub.f32 %v427, %v2400
        %v2402 = vand.u32 %v2401, 4294901760
        %2403 = vmatpush1.msra.mxu0 %v2402
        %2404 = vmatprep.subr.mxu0 0.0
        %v2405 = vand.u32 %v426, 4294901760
        %v2406 = vsub.f32 %v426, %v2405
        %v2407 = vand.u32 %v2406, 4294901760
        %2408 = vmatpush1.msra.mxu0 %v2407
        %2409 = vmatprep.subr.mxu0 0.0
        %v2410 = vand.u32 %v425, 4294901760
        %v2411 = vsub.f32 %v425, %v2410
        %v2412 = vand.u32 %v2411, 4294901760
        %2413 = vmatpush1.msra.mxu0 %v2412
        %2414 = vmatprep.subr.mxu0 0.0
        %v2415 = vand.u32 %v424, 4294901760
        %v2416 = vsub.f32 %v424, %v2415
        %v2417 = vand.u32 %v2416, 4294901760
        %2418 = vmatpush1.msra.mxu0 %v2417
        %2419 = vmatprep.subr.mxu0 0.0
        %v2420 = vand.u32 %v423, 4294901760
        %v2421 = vsub.f32 %v423, %v2420
        %v2422 = vand.u32 %v2421, 4294901760
        %2423 = vmatpush1.msra.mxu0 %v2422
        %2424 = vmatprep.subr.mxu0 0.0
        %v2425 = vand.u32 %v422, 4294901760
        %v2426 = vsub.f32 %v422, %v2425
        %v2427 = vand.u32 %v2426, 4294901760
        %2428 = vmatpush1.msra.mxu0 %v2427
        %2429 = vmatprep.subr.mxu0 0.0
        %2430 = vmatpush2.msra.mxu0 0.0
        %2431 = vmatprep.subr.mxu0 0.0
        %2432 = vmatpush2.msra.mxu0 0.0
        %2433 = vmatprep.subr.mxu0 0.0
        %2434 = vmatpush2.msra.mxu0 0.0
        %2435 = vmatprep.subr.mxu0 0.0
        %2436 = vmatpush2.msra.mxu0 0.0
        %2437 = vmatprep.subr.mxu0 0.0
        %2438 = vmatpush2.msra.mxu0 0.0
        %2439 = vmatprep.subr.mxu0 0.0
        %2440 = vmatpush2.msra.mxu0 0.0
        %2441 = vmatprep.subr.mxu0 0.0
        %2442 = vmatpush2.msra.mxu0 0.0
        %2443 = vmatprep.subr.mxu0 0.0
        %2444 = vmatpush2.msra.mxu0 0.0
        %2445 = vmatprep.subr.mxu0 0.0
        %2446 = vmatpush2.msra.mxu0 0.0
        %2447 = vmatprep.subr.mxu0 0.0
        %2448 = vmatpush2.msra.mxu0 0.0
        %2449 = vmatprep.subr.mxu0 0.0
        %2450 = vmatpush2.msra.mxu0 0.0
        %2451 = vmatprep.subr.mxu0 0.0
        %2452 = vmatpush2.msra.mxu0 0.0
        %2453 = vmatprep.subr.mxu0 0.0
        %2454 = vmatpush2.msra.mxu0 0.0
        %2455 = vmatprep.subr.mxu0 0.0
        %2456 = vmatpush2.msra.mxu0 0.0
        %2457 = vmatprep.subr.mxu0 0.0
        %2458 = vmatpush2.msra.mxu0 0.0
        %2459 = vmatprep.subr.mxu0 0.0
        %2460 = vmatpush2.msra.mxu0 0.0
        %2461 = vmatprep.mubr.f32.mxu0 0.0
        %v2462 = vand.u32 %v1913, 4294901760
        %2463 = vmatmul.mubr.f32.gmra.mxu0 %v2462
        %v2464 = vpop.f32.mrf.mxu0
        %v2465 = vadd.f32 %v2346, %v2464
        %v2466 = vpop.f32.mrf.mxu0
        %2467 = vdwg.mxu0
        %2468 = vmatprep.subr.mxu0 0.0
        %v2469 = vand.u32 %v437, 4294901760
        %2470 = vmatpush1.msra.mxu0 %v2469
        %2471 = vmatprep.subr.mxu0 0.0
        %v2472 = vand.u32 %v436, 4294901760
        %2473 = vmatpush1.msra.mxu0 %v2472
        %2474 = vmatprep.subr.mxu0 0.0
        %v2475 = vand.u32 %v435, 4294901760
        %2476 = vmatpush1.msra.mxu0 %v2475
        %2477 = vmatprep.subr.mxu0 0.0
        %v2478 = vand.u32 %v434, 4294901760
        %2479 = vmatpush1.msra.mxu0 %v2478
        %2480 = vmatprep.subr.mxu0 0.0
        %v2481 = vand.u32 %v433, 4294901760
        %2482 = vmatpush1.msra.mxu0 %v2481
        %2483 = vmatprep.subr.mxu0 0.0
        %v2484 = vand.u32 %v432, 4294901760
        %2485 = vmatpush1.msra.mxu0 %v2484
        %2486 = vmatprep.subr.mxu0 0.0
        %v2487 = vand.u32 %v431, 4294901760
        %2488 = vmatpush1.msra.mxu0 %v2487
        %2489 = vmatprep.subr.mxu0 0.0
        %v2490 = vand.u32 %v430, 4294901760
        %2491 = vmatpush1.msra.mxu0 %v2490
        %2492 = vmatprep.subr.mxu0 0.0
        %v2493 = vand.u32 %v429, 4294901760
        %2494 = vmatpush1.msra.mxu0 %v2493
        %2495 = vmatprep.subr.mxu0 0.0
        %v2496 = vand.u32 %v428, 4294901760
        %2497 = vmatpush1.msra.mxu0 %v2496
        %2498 = vmatprep.subr.mxu0 0.0
        %v2499 = vand.u32 %v427, 4294901760
        %2500 = vmatpush1.msra.mxu0 %v2499
        %2501 = vmatprep.subr.mxu0 0.0
        %v2502 = vand.u32 %v426, 4294901760
        %2503 = vmatpush1.msra.mxu0 %v2502
        %2504 = vmatprep.subr.mxu0 0.0
        %v2505 = vand.u32 %v425, 4294901760
        %2506 = vmatpush1.msra.mxu0 %v2505
        %2507 = vmatprep.subr.mxu0 0.0
        %v2508 = vand.u32 %v424, 4294901760
        %2509 = vmatpush1.msra.mxu0 %v2508
        %2510 = vmatprep.subr.mxu0 0.0
        %v2511 = vand.u32 %v423, 4294901760
        %2512 = vmatpush1.msra.mxu0 %v2511
        %2513 = vmatprep.subr.mxu0 0.0
        %v2514 = vand.u32 %v422, 4294901760
        %2515 = vmatpush1.msra.mxu0 %v2514
        %2516 = vmatprep.subr.mxu0 0.0
        %2517 = vmatpush2.msra.mxu0 0.0
        %2518 = vmatprep.subr.mxu0 0.0
        %2519 = vmatpush2.msra.mxu0 0.0
        %2520 = vmatprep.subr.mxu0 0.0
        %2521 = vmatpush2.msra.mxu0 0.0
        %2522 = vmatprep.subr.mxu0 0.0
        %2523 = vmatpush2.msra.mxu0 0.0
        %2524 = vmatprep.subr.mxu0 0.0
        %2525 = vmatpush2.msra.mxu0 0.0
        %2526 = vmatprep.subr.mxu0 0.0
        %2527 = vmatpush2.msra.mxu0 0.0
        %2528 = vmatprep.subr.mxu0 0.0
        %2529 = vmatpush2.msra.mxu0 0.0
        %2530 = vmatprep.subr.mxu0 0.0
        %2531 = vmatpush2.msra.mxu0 0.0
        %2532 = vmatprep.subr.mxu0 0.0
        %2533 = vmatpush2.msra.mxu0 0.0
        %2534 = vmatprep.subr.mxu0 0.0
        %2535 = vmatpush2.msra.mxu0 0.0
        %2536 = vmatprep.subr.mxu0 0.0
        %2537 = vmatpush2.msra.mxu0 0.0
        %2538 = vmatprep.subr.mxu0 0.0
        %2539 = vmatpush2.msra.mxu0 0.0
        %2540 = vmatprep.subr.mxu0 0.0
        %2541 = vmatpush2.msra.mxu0 0.0
        %2542 = vmatprep.subr.mxu0 0.0
        %2543 = vmatpush2.msra.mxu0 0.0
        %2544 = vmatprep.subr.mxu0 0.0
        %2545 = vmatpush2.msra.mxu0 0.0
        %2546 = vmatprep.subr.mxu0 0.0
        %2547 = vmatpush2.msra.mxu0 0.0
        %2548 = vmatprep.mubr.f32.mxu0 0.0
        %v2549 = vand.u32 %v1913, 4294901760
        %2550 = vmatmul.mubr.f32.gmra.mxu0 %v2549
        %v2551 = vpop.f32.mrf.mxu0
        %v2552 = vadd.f32 %v2465, %v2551
        %v2553 = vpop.f32.mrf.mxu0
        %2554 = vdwg.mxu0
        %v2555 = vmul.f32 %v2552, %v479
        %v2556 = vsel %vm1899, %v2555, 0.0
        %2557 = vadd.xlane.f32.xlu0 %v2556
        %v2558 = vpop.xlane.xlu0 %2557
        %v2559 = vrot.slane %v2558, 4
        %v2560 = vadd.f32 %v2558, %v2559
        %v2561 = vrot.slane %v2560, 2
        %v2562 = vadd.f32 %v2560, %v2561
        %v2563 = vrot.slane %v2562, 1
        %v2564 = vadd.f32 %v2562, %v2563
        %s2565 = vtos %v2564
        %v2566 = vsub.f32 1.0, %v421
        %v2567 = vadd.f32 %v2566, 1e-06
        %v2568 = vlog2.pop %v2567
        %v2569 = vmul.f32 %v2568, 0.6931472
        %v2570 = vsub.f32 0.0, %v2569
        %2571 = vmatprep.subr.mxu0 0.0
        %v2572 = vand.u32 %v453, 4294901760
        %2573 = vmatpush1.msra.mxu0 %v2572
        %2574 = vmatprep.subr.mxu0 0.0
        %v2575 = vand.u32 %v452, 4294901760
        %2576 = vmatpush1.msra.mxu0 %v2575
        %2577 = vmatprep.subr.mxu0 0.0
        %v2578 = vand.u32 %v451, 4294901760
        %2579 = vmatpush1.msra.mxu0 %v2578
        %2580 = vmatprep.subr.mxu0 0.0
        %v2581 = vand.u32 %v450, 4294901760
        %2582 = vmatpush1.msra.mxu0 %v2581
        %2583 = vmatprep.subr.mxu0 0.0
        %v2584 = vand.u32 %v449, 4294901760
        %2585 = vmatpush1.msra.mxu0 %v2584
        %2586 = vmatprep.subr.mxu0 0.0
        %v2587 = vand.u32 %v448, 4294901760
        %2588 = vmatpush1.msra.mxu0 %v2587
        %2589 = vmatprep.subr.mxu0 0.0
        %v2590 = vand.u32 %v447, 4294901760
        %2591 = vmatpush1.msra.mxu0 %v2590
        %2592 = vmatprep.subr.mxu0 0.0
        %v2593 = vand.u32 %v446, 4294901760
        %2594 = vmatpush1.msra.mxu0 %v2593
        %2595 = vmatprep.subr.mxu0 0.0
        %v2596 = vand.u32 %v445, 4294901760
        %2597 = vmatpush1.msra.mxu0 %v2596
        %2598 = vmatprep.subr.mxu0 0.0
        %v2599 = vand.u32 %v444, 4294901760
        %2600 = vmatpush1.msra.mxu0 %v2599
        %2601 = vmatprep.subr.mxu0 0.0
        %v2602 = vand.u32 %v443, 4294901760
        %2603 = vmatpush1.msra.mxu0 %v2602
        %2604 = vmatprep.subr.mxu0 0.0
        %v2605 = vand.u32 %v442, 4294901760
        %2606 = vmatpush1.msra.mxu0 %v2605
        %2607 = vmatprep.subr.mxu0 0.0
        %v2608 = vand.u32 %v441, 4294901760
        %2609 = vmatpush1.msra.mxu0 %v2608
        %2610 = vmatprep.subr.mxu0 0.0
        %v2611 = vand.u32 %v440, 4294901760
        %2612 = vmatpush1.msra.mxu0 %v2611
        %2613 = vmatprep.subr.mxu0 0.0
        %v2614 = vand.u32 %v439, 4294901760
        %2615 = vmatpush1.msra.mxu0 %v2614
        %2616 = vmatprep.subr.mxu0 0.0
        %v2617 = vand.u32 %v438, 4294901760
        %2618 = vmatpush1.msra.mxu0 %v2617
        %2619 = vmatprep.subr.mxu0 0.0
        %2620 = vmatpush2.msra.mxu0 0.0
        %2621 = vmatprep.subr.mxu0 0.0
        %2622 = vmatpush2.msra.mxu0 0.0
        %2623 = vmatprep.subr.mxu0 0.0
        %2624 = vmatpush2.msra.mxu0 0.0
        %2625 = vmatprep.subr.mxu0 0.0
        %2626 = vmatpush2.msra.mxu0 0.0
        %2627 = vmatprep.subr.mxu0 0.0
        %2628 = vmatpush2.msra.mxu0 0.0
        %2629 = vmatprep.subr.mxu0 0.0
        %2630 = vmatpush2.msra.mxu0 0.0
        %2631 = vmatprep.subr.mxu0 0.0
        %2632 = vmatpush2.msra.mxu0 0.0
        %2633 = vmatprep.subr.mxu0 0.0
        %2634 = vmatpush2.msra.mxu0 0.0
        %2635 = vmatprep.subr.mxu0 0.0
        %2636 = vmatpush2.msra.mxu0 0.0
        %2637 = vmatprep.subr.mxu0 0.0
        %2638 = vmatpush2.msra.mxu0 0.0
        %2639 = vmatprep.subr.mxu0 0.0
        %2640 = vmatpush2.msra.mxu0 0.0
        %2641 = vmatprep.subr.mxu0 0.0
        %2642 = vmatpush2.msra.mxu0 0.0
        %2643 = vmatprep.subr.mxu0 0.0
        %2644 = vmatpush2.msra.mxu0 0.0
        %2645 = vmatprep.subr.mxu0 0.0
        %2646 = vmatpush2.msra.mxu0 0.0
        %2647 = vmatprep.subr.mxu0 0.0
        %2648 = vmatpush2.msra.mxu0 0.0
        %2649 = vmatprep.subr.mxu0 0.0
        %2650 = vmatpush2.msra.mxu0 0.0
        %2651 = vmatprep.mubr.f32.mxu0 0.0
        %v2652 = vand.u32 %v2570, 4294901760
        %v2653 = vsub.f32 %v2570, %v2652
        %v2654 = vand.u32 %v2653, 4294901760
        %v2655 = vsub.f32 %v2653, %v2654
        %v2656 = vand.u32 %v2655, 4294901760
        %2657 = vmatmul.mubr.f32.gmra.mxu0 %v2656
        %v2658 = vpop.f32.mrf.mxu0
        %v2659 = vadd.f32 0.0, %v2658
        %v2660 = vpop.f32.mrf.mxu0
        %2661 = vdwg.mxu0
        %2662 = vmatprep.subr.mxu0 0.0
        %v2663 = vand.u32 %v453, 4294901760
        %v2664 = vsub.f32 %v453, %v2663
        %v2665 = vand.u32 %v2664, 4294901760
        %v2666 = vsub.f32 %v2664, %v2665
        %v2667 = vand.u32 %v2666, 4294901760
        %2668 = vmatpush1.msra.mxu0 %v2667
        %2669 = vmatprep.subr.mxu0 0.0
        %v2670 = vand.u32 %v452, 4294901760
        %v2671 = vsub.f32 %v452, %v2670
        %v2672 = vand.u32 %v2671, 4294901760
        %v2673 = vsub.f32 %v2671, %v2672
        %v2674 = vand.u32 %v2673, 4294901760
        %2675 = vmatpush1.msra.mxu0 %v2674
        %2676 = vmatprep.subr.mxu0 0.0
        %v2677 = vand.u32 %v451, 4294901760
        %v2678 = vsub.f32 %v451, %v2677
        %v2679 = vand.u32 %v2678, 4294901760
        %v2680 = vsub.f32 %v2678, %v2679
        %v2681 = vand.u32 %v2680, 4294901760
        %2682 = vmatpush1.msra.mxu0 %v2681
        %2683 = vmatprep.subr.mxu0 0.0
        %v2684 = vand.u32 %v450, 4294901760
        %v2685 = vsub.f32 %v450, %v2684
        %v2686 = vand.u32 %v2685, 4294901760
        %v2687 = vsub.f32 %v2685, %v2686
        %v2688 = vand.u32 %v2687, 4294901760
        %2689 = vmatpush1.msra.mxu0 %v2688
        %2690 = vmatprep.subr.mxu0 0.0
        %v2691 = vand.u32 %v449, 4294901760
        %v2692 = vsub.f32 %v449, %v2691
        %v2693 = vand.u32 %v2692, 4294901760
        %v2694 = vsub.f32 %v2692, %v2693
        %v2695 = vand.u32 %v2694, 4294901760
        %2696 = vmatpush1.msra.mxu0 %v2695
        %2697 = vmatprep.subr.mxu0 0.0
        %v2698 = vand.u32 %v448, 4294901760
        %v2699 = vsub.f32 %v448, %v2698
        %v2700 = vand.u32 %v2699, 4294901760
        %v2701 = vsub.f32 %v2699, %v2700
        %v2702 = vand.u32 %v2701, 4294901760
        %2703 = vmatpush1.msra.mxu0 %v2702
        %2704 = vmatprep.subr.mxu0 0.0
        %v2705 = vand.u32 %v447, 4294901760
        %v2706 = vsub.f32 %v447, %v2705
        %v2707 = vand.u32 %v2706, 4294901760
        %v2708 = vsub.f32 %v2706, %v2707
        %v2709 = vand.u32 %v2708, 4294901760
        %2710 = vmatpush1.msra.mxu0 %v2709
        %2711 = vmatprep.subr.mxu0 0.0
        %v2712 = vand.u32 %v446, 4294901760
        %v2713 = vsub.f32 %v446, %v2712
        %v2714 = vand.u32 %v2713, 4294901760
        %v2715 = vsub.f32 %v2713, %v2714
        %v2716 = vand.u32 %v2715, 4294901760
        %2717 = vmatpush1.msra.mxu0 %v2716
        %2718 = vmatprep.subr.mxu0 0.0
        %v2719 = vand.u32 %v445, 4294901760
        %v2720 = vsub.f32 %v445, %v2719
        %v2721 = vand.u32 %v2720, 4294901760
        %v2722 = vsub.f32 %v2720, %v2721
        %v2723 = vand.u32 %v2722, 4294901760
        %2724 = vmatpush1.msra.mxu0 %v2723
        %2725 = vmatprep.subr.mxu0 0.0
        %v2726 = vand.u32 %v444, 4294901760
        %v2727 = vsub.f32 %v444, %v2726
        %v2728 = vand.u32 %v2727, 4294901760
        %v2729 = vsub.f32 %v2727, %v2728
        %v2730 = vand.u32 %v2729, 4294901760
        %2731 = vmatpush1.msra.mxu0 %v2730
        %2732 = vmatprep.subr.mxu0 0.0
        %v2733 = vand.u32 %v443, 4294901760
        %v2734 = vsub.f32 %v443, %v2733
        %v2735 = vand.u32 %v2734, 4294901760
        %v2736 = vsub.f32 %v2734, %v2735
        %v2737 = vand.u32 %v2736, 4294901760
        %2738 = vmatpush1.msra.mxu0 %v2737
        %2739 = vmatprep.subr.mxu0 0.0
        %v2740 = vand.u32 %v442, 4294901760
        %v2741 = vsub.f32 %v442, %v2740
        %v2742 = vand.u32 %v2741, 4294901760
        %v2743 = vsub.f32 %v2741, %v2742
        %v2744 = vand.u32 %v2743, 4294901760
        %2745 = vmatpush1.msra.mxu0 %v2744
        %2746 = vmatprep.subr.mxu0 0.0
        %v2747 = vand.u32 %v441, 4294901760
        %v2748 = vsub.f32 %v441, %v2747
        %v2749 = vand.u32 %v2748, 4294901760
        %v2750 = vsub.f32 %v2748, %v2749
        %v2751 = vand.u32 %v2750, 4294901760
        %2752 = vmatpush1.msra.mxu0 %v2751
        %2753 = vmatprep.subr.mxu0 0.0
        %v2754 = vand.u32 %v440, 4294901760
        %v2755 = vsub.f32 %v440, %v2754
        %v2756 = vand.u32 %v2755, 4294901760
        %v2757 = vsub.f32 %v2755, %v2756
        %v2758 = vand.u32 %v2757, 4294901760
        %2759 = vmatpush1.msra.mxu0 %v2758
        %2760 = vmatprep.subr.mxu0 0.0
        %v2761 = vand.u32 %v439, 4294901760
        %v2762 = vsub.f32 %v439, %v2761
        %v2763 = vand.u32 %v2762, 4294901760
        %v2764 = vsub.f32 %v2762, %v2763
        %v2765 = vand.u32 %v2764, 4294901760
        %2766 = vmatpush1.msra.mxu0 %v2765
        %2767 = vmatprep.subr.mxu0 0.0
        %v2768 = vand.u32 %v438, 4294901760
        %v2769 = vsub.f32 %v438, %v2768
        %v2770 = vand.u32 %v2769, 4294901760
        %v2771 = vsub.f32 %v2769, %v2770
        %v2772 = vand.u32 %v2771, 4294901760
        %2773 = vmatpush1.msra.mxu0 %v2772
        %2774 = vmatprep.subr.mxu0 0.0
        %2775 = vmatpush2.msra.mxu0 0.0
        %2776 = vmatprep.subr.mxu0 0.0
        %2777 = vmatpush2.msra.mxu0 0.0
        %2778 = vmatprep.subr.mxu0 0.0
        %2779 = vmatpush2.msra.mxu0 0.0
        %2780 = vmatprep.subr.mxu0 0.0
        %2781 = vmatpush2.msra.mxu0 0.0
        %2782 = vmatprep.subr.mxu0 0.0
        %2783 = vmatpush2.msra.mxu0 0.0
        %2784 = vmatprep.subr.mxu0 0.0
        %2785 = vmatpush2.msra.mxu0 0.0
        %2786 = vmatprep.subr.mxu0 0.0
        %2787 = vmatpush2.msra.mxu0 0.0
        %2788 = vmatprep.subr.mxu0 0.0
        %2789 = vmatpush2.msra.mxu0 0.0
        %2790 = vmatprep.subr.mxu0 0.0
        %2791 = vmatpush2.msra.mxu0 0.0
        %2792 = vmatprep.subr.mxu0 0.0
        %2793 = vmatpush2.msra.mxu0 0.0
        %2794 = vmatprep.subr.mxu0 0.0
        %2795 = vmatpush2.msra.mxu0 0.0
        %2796 = vmatprep.subr.mxu0 0.0
        %2797 = vmatpush2.msra.mxu0 0.0
        %2798 = vmatprep.subr.mxu0 0.0
        %2799 = vmatpush2.msra.mxu0 0.0
        %2800 = vmatprep.subr.mxu0 0.0
        %2801 = vmatpush2.msra.mxu0 0.0
        %2802 = vmatprep.subr.mxu0 0.0
        %2803 = vmatpush2.msra.mxu0 0.0
        %2804 = vmatprep.subr.mxu0 0.0
        %2805 = vmatpush2.msra.mxu0 0.0
        %2806 = vmatprep.mubr.f32.mxu0 0.0
        %v2807 = vand.u32 %v2570, 4294901760
        %2808 = vmatmul.mubr.f32.gmra.mxu0 %v2807
        %v2809 = vpop.f32.mrf.mxu0
        %v2810 = vadd.f32 %v2659, %v2809
        %v2811 = vpop.f32.mrf.mxu0
        %2812 = vdwg.mxu0
        %2813 = vmatprep.subr.mxu0 0.0
        %v2814 = vand.u32 %v453, 4294901760
        %v2815 = vsub.f32 %v453, %v2814
        %2816 = vmatpush1.msra.mxu0 %v2815
        %2817 = vmatprep.subr.mxu0 0.0
        %v2818 = vand.u32 %v452, 4294901760
        %v2819 = vsub.f32 %v452, %v2818
        %2820 = vmatpush1.msra.mxu0 %v2819
        %2821 = vmatprep.subr.mxu0 0.0
        %v2822 = vand.u32 %v451, 4294901760
        %v2823 = vsub.f32 %v451, %v2822
        %2824 = vmatpush1.msra.mxu0 %v2823
        %2825 = vmatprep.subr.mxu0 0.0
        %v2826 = vand.u32 %v450, 4294901760
        %v2827 = vsub.f32 %v450, %v2826
        %2828 = vmatpush1.msra.mxu0 %v2827
        %2829 = vmatprep.subr.mxu0 0.0
        %v2830 = vand.u32 %v449, 4294901760
        %v2831 = vsub.f32 %v449, %v2830
        %2832 = vmatpush1.msra.mxu0 %v2831
        %2833 = vmatprep.subr.mxu0 0.0
        %v2834 = vand.u32 %v448, 4294901760
        %v2835 = vsub.f32 %v448, %v2834
        %2836 = vmatpush1.msra.mxu0 %v2835
        %2837 = vmatprep.subr.mxu0 0.0
        %v2838 = vand.u32 %v447, 4294901760
        %v2839 = vsub.f32 %v447, %v2838
        %2840 = vmatpush1.msra.mxu0 %v2839
        %2841 = vmatprep.subr.mxu0 0.0
        %v2842 = vand.u32 %v446, 4294901760
        %v2843 = vsub.f32 %v446, %v2842
        %2844 = vmatpush1.msra.mxu0 %v2843
        %2845 = vmatprep.subr.mxu0 0.0
        %v2846 = vand.u32 %v445, 4294901760
        %v2847 = vsub.f32 %v445, %v2846
        %2848 = vmatpush1.msra.mxu0 %v2847
        %2849 = vmatprep.subr.mxu0 0.0
        %v2850 = vand.u32 %v444, 4294901760
        %v2851 = vsub.f32 %v444, %v2850
        %2852 = vmatpush1.msra.mxu0 %v2851
        %2853 = vmatprep.subr.mxu0 0.0
        %v2854 = vand.u32 %v443, 4294901760
        %v2855 = vsub.f32 %v443, %v2854
        %2856 = vmatpush1.msra.mxu0 %v2855
        %2857 = vmatprep.subr.mxu0 0.0
        %v2858 = vand.u32 %v442, 4294901760
        %v2859 = vsub.f32 %v442, %v2858
        %2860 = vmatpush1.msra.mxu0 %v2859
        %2861 = vmatprep.subr.mxu0 0.0
        %v2862 = vand.u32 %v441, 4294901760
        %v2863 = vsub.f32 %v441, %v2862
        %2864 = vmatpush1.msra.mxu0 %v2863
        %2865 = vmatprep.subr.mxu0 0.0
        %v2866 = vand.u32 %v440, 4294901760
        %v2867 = vsub.f32 %v440, %v2866
        %2868 = vmatpush1.msra.mxu0 %v2867
        %2869 = vmatprep.subr.mxu0 0.0
        %v2870 = vand.u32 %v439, 4294901760
        %v2871 = vsub.f32 %v439, %v2870
        %2872 = vmatpush1.msra.mxu0 %v2871
        %2873 = vmatprep.subr.mxu0 0.0
        %v2874 = vand.u32 %v438, 4294901760
        %v2875 = vsub.f32 %v438, %v2874
        %2876 = vmatpush1.msra.mxu0 %v2875
        %2877 = vmatprep.subr.mxu0 0.0
        %2878 = vmatpush2.msra.mxu0 0.0
        %2879 = vmatprep.subr.mxu0 0.0
        %2880 = vmatpush2.msra.mxu0 0.0
        %2881 = vmatprep.subr.mxu0 0.0
        %2882 = vmatpush2.msra.mxu0 0.0
        %2883 = vmatprep.subr.mxu0 0.0
        %2884 = vmatpush2.msra.mxu0 0.0
        %2885 = vmatprep.subr.mxu0 0.0
        %2886 = vmatpush2.msra.mxu0 0.0
        %2887 = vmatprep.subr.mxu0 0.0
        %2888 = vmatpush2.msra.mxu0 0.0
        %2889 = vmatprep.subr.mxu0 0.0
        %2890 = vmatpush2.msra.mxu0 0.0
        %2891 = vmatprep.subr.mxu0 0.0
        %2892 = vmatpush2.msra.mxu0 0.0
        %2893 = vmatprep.subr.mxu0 0.0
        %2894 = vmatpush2.msra.mxu0 0.0
        %2895 = vmatprep.subr.mxu0 0.0
        %2896 = vmatpush2.msra.mxu0 0.0
        %2897 = vmatprep.subr.mxu0 0.0
        %2898 = vmatpush2.msra.mxu0 0.0
        %2899 = vmatprep.subr.mxu0 0.0
        %2900 = vmatpush2.msra.mxu0 0.0
        %2901 = vmatprep.subr.mxu0 0.0
        %2902 = vmatpush2.msra.mxu0 0.0
        %2903 = vmatprep.subr.mxu0 0.0
        %2904 = vmatpush2.msra.mxu0 0.0
        %2905 = vmatprep.subr.mxu0 0.0
        %2906 = vmatpush2.msra.mxu0 0.0
        %2907 = vmatprep.subr.mxu0 0.0
        %2908 = vmatpush2.msra.mxu0 0.0
        %2909 = vmatprep.mubr.f32.mxu0 0.0
        %v2910 = vand.u32 %v2570, 4294901760
        %v2911 = vsub.f32 %v2570, %v2910
        %2912 = vmatmul.mubr.f32.gmra.mxu0 %v2911
        %v2913 = vpop.f32.mrf.mxu0
        %v2914 = vadd.f32 %v2810, %v2913
        %v2915 = vpop.f32.mrf.mxu0
        %2916 = vdwg.mxu0
        %2917 = vmatprep.subr.mxu0 0.0
        %v2918 = vand.u32 %v453, 4294901760
        %2919 = vmatpush1.msra.mxu0 %v2918
        %2920 = vmatprep.subr.mxu0 0.0
        %v2921 = vand.u32 %v452, 4294901760
        %2922 = vmatpush1.msra.mxu0 %v2921
        %2923 = vmatprep.subr.mxu0 0.0
        %v2924 = vand.u32 %v451, 4294901760
        %2925 = vmatpush1.msra.mxu0 %v2924
        %2926 = vmatprep.subr.mxu0 0.0
        %v2927 = vand.u32 %v450, 4294901760
        %2928 = vmatpush1.msra.mxu0 %v2927
        %2929 = vmatprep.subr.mxu0 0.0
        %v2930 = vand.u32 %v449, 4294901760
        %2931 = vmatpush1.msra.mxu0 %v2930
        %2932 = vmatprep.subr.mxu0 0.0
        %v2933 = vand.u32 %v448, 4294901760
        %2934 = vmatpush1.msra.mxu0 %v2933
        %2935 = vmatprep.subr.mxu0 0.0
        %v2936 = vand.u32 %v447, 4294901760
        %2937 = vmatpush1.msra.mxu0 %v2936
        %2938 = vmatprep.subr.mxu0 0.0
        %v2939 = vand.u32 %v446, 4294901760
        %2940 = vmatpush1.msra.mxu0 %v2939
        %2941 = vmatprep.subr.mxu0 0.0
        %v2942 = vand.u32 %v445, 4294901760
        %2943 = vmatpush1.msra.mxu0 %v2942
        %2944 = vmatprep.subr.mxu0 0.0
        %v2945 = vand.u32 %v444, 4294901760
        %2946 = vmatpush1.msra.mxu0 %v2945
        %2947 = vmatprep.subr.mxu0 0.0
        %v2948 = vand.u32 %v443, 4294901760
        %2949 = vmatpush1.msra.mxu0 %v2948
        %2950 = vmatprep.subr.mxu0 0.0
        %v2951 = vand.u32 %v442, 4294901760
        %2952 = vmatpush1.msra.mxu0 %v2951
        %2953 = vmatprep.subr.mxu0 0.0
        %v2954 = vand.u32 %v441, 4294901760
        %2955 = vmatpush1.msra.mxu0 %v2954
        %2956 = vmatprep.subr.mxu0 0.0
        %v2957 = vand.u32 %v440, 4294901760
        %2958 = vmatpush1.msra.mxu0 %v2957
        %2959 = vmatprep.subr.mxu0 0.0
        %v2960 = vand.u32 %v439, 4294901760
        %2961 = vmatpush1.msra.mxu0 %v2960
        %2962 = vmatprep.subr.mxu0 0.0
        %v2963 = vand.u32 %v438, 4294901760
        %2964 = vmatpush1.msra.mxu0 %v2963
        %2965 = vmatprep.subr.mxu0 0.0
        %2966 = vmatpush2.msra.mxu0 0.0
        %2967 = vmatprep.subr.mxu0 0.0
        %2968 = vmatpush2.msra.mxu0 0.0
        %2969 = vmatprep.subr.mxu0 0.0
        %2970 = vmatpush2.msra.mxu0 0.0
        %2971 = vmatprep.subr.mxu0 0.0
        %2972 = vmatpush2.msra.mxu0 0.0
        %2973 = vmatprep.subr.mxu0 0.0
        %2974 = vmatpush2.msra.mxu0 0.0
        %2975 = vmatprep.subr.mxu0 0.0
        %2976 = vmatpush2.msra.mxu0 0.0
        %2977 = vmatprep.subr.mxu0 0.0
        %2978 = vmatpush2.msra.mxu0 0.0
        %2979 = vmatprep.subr.mxu0 0.0
        %2980 = vmatpush2.msra.mxu0 0.0
        %2981 = vmatprep.subr.mxu0 0.0
        %2982 = vmatpush2.msra.mxu0 0.0
        %2983 = vmatprep.subr.mxu0 0.0
        %2984 = vmatpush2.msra.mxu0 0.0
        %2985 = vmatprep.subr.mxu0 0.0
        %2986 = vmatpush2.msra.mxu0 0.0
        %2987 = vmatprep.subr.mxu0 0.0
        %2988 = vmatpush2.msra.mxu0 0.0
        %2989 = vmatprep.subr.mxu0 0.0
        %2990 = vmatpush2.msra.mxu0 0.0
        %2991 = vmatprep.subr.mxu0 0.0
        %2992 = vmatpush2.msra.mxu0 0.0
        %2993 = vmatprep.subr.mxu0 0.0
        %2994 = vmatpush2.msra.mxu0 0.0
        %2995 = vmatprep.subr.mxu0 0.0
        %2996 = vmatpush2.msra.mxu0 0.0
        %2997 = vmatprep.mubr.f32.mxu0 0.0
        %v2998 = vand.u32 %v2570, 4294901760
        %v2999 = vsub.f32 %v2570, %v2998
        %v3000 = vand.u32 %v2999, 4294901760
        %3001 = vmatmul.mubr.f32.gmra.mxu0 %v3000
        %v3002 = vpop.f32.mrf.mxu0
        %v3003 = vadd.f32 %v2914, %v3002
        %v3004 = vpop.f32.mrf.mxu0
        %3005 = vdwg.mxu0
        %3006 = vmatprep.subr.mxu0 0.0
        %v3007 = vand.u32 %v453, 4294901760
        %v3008 = vsub.f32 %v453, %v3007
        %v3009 = vand.u32 %v3008, 4294901760
        %3010 = vmatpush1.msra.mxu0 %v3009
        %3011 = vmatprep.subr.mxu0 0.0
        %v3012 = vand.u32 %v452, 4294901760
        %v3013 = vsub.f32 %v452, %v3012
        %v3014 = vand.u32 %v3013, 4294901760
        %3015 = vmatpush1.msra.mxu0 %v3014
        %3016 = vmatprep.subr.mxu0 0.0
        %v3017 = vand.u32 %v451, 4294901760
        %v3018 = vsub.f32 %v451, %v3017
        %v3019 = vand.u32 %v3018, 4294901760
        %3020 = vmatpush1.msra.mxu0 %v3019
        %3021 = vmatprep.subr.mxu0 0.0
        %v3022 = vand.u32 %v450, 4294901760
        %v3023 = vsub.f32 %v450, %v3022
        %v3024 = vand.u32 %v3023, 4294901760
        %3025 = vmatpush1.msra.mxu0 %v3024
        %3026 = vmatprep.subr.mxu0 0.0
        %v3027 = vand.u32 %v449, 4294901760
        %v3028 = vsub.f32 %v449, %v3027
        %v3029 = vand.u32 %v3028, 4294901760
        %3030 = vmatpush1.msra.mxu0 %v3029
        %3031 = vmatprep.subr.mxu0 0.0
        %v3032 = vand.u32 %v448, 4294901760
        %v3033 = vsub.f32 %v448, %v3032
        %v3034 = vand.u32 %v3033, 4294901760
        %3035 = vmatpush1.msra.mxu0 %v3034
        %3036 = vmatprep.subr.mxu0 0.0
        %v3037 = vand.u32 %v447, 4294901760
        %v3038 = vsub.f32 %v447, %v3037
        %v3039 = vand.u32 %v3038, 4294901760
        %3040 = vmatpush1.msra.mxu0 %v3039
        %3041 = vmatprep.subr.mxu0 0.0
        %v3042 = vand.u32 %v446, 4294901760
        %v3043 = vsub.f32 %v446, %v3042
        %v3044 = vand.u32 %v3043, 4294901760
        %3045 = vmatpush1.msra.mxu0 %v3044
        %3046 = vmatprep.subr.mxu0 0.0
        %v3047 = vand.u32 %v445, 4294901760
        %v3048 = vsub.f32 %v445, %v3047
        %v3049 = vand.u32 %v3048, 4294901760
        %3050 = vmatpush1.msra.mxu0 %v3049
        %3051 = vmatprep.subr.mxu0 0.0
        %v3052 = vand.u32 %v444, 4294901760
        %v3053 = vsub.f32 %v444, %v3052
        %v3054 = vand.u32 %v3053, 4294901760
        %3055 = vmatpush1.msra.mxu0 %v3054
        %3056 = vmatprep.subr.mxu0 0.0
        %v3057 = vand.u32 %v443, 4294901760
        %v3058 = vsub.f32 %v443, %v3057
        %v3059 = vand.u32 %v3058, 4294901760
        %3060 = vmatpush1.msra.mxu0 %v3059
        %3061 = vmatprep.subr.mxu0 0.0
        %v3062 = vand.u32 %v442, 4294901760
        %v3063 = vsub.f32 %v442, %v3062
        %v3064 = vand.u32 %v3063, 4294901760
        %3065 = vmatpush1.msra.mxu0 %v3064
        %3066 = vmatprep.subr.mxu0 0.0
        %v3067 = vand.u32 %v441, 4294901760
        %v3068 = vsub.f32 %v441, %v3067
        %v3069 = vand.u32 %v3068, 4294901760
        %3070 = vmatpush1.msra.mxu0 %v3069
        %3071 = vmatprep.subr.mxu0 0.0
        %v3072 = vand.u32 %v440, 4294901760
        %v3073 = vsub.f32 %v440, %v3072
        %v3074 = vand.u32 %v3073, 4294901760
        %3075 = vmatpush1.msra.mxu0 %v3074
        %3076 = vmatprep.subr.mxu0 0.0
        %v3077 = vand.u32 %v439, 4294901760
        %v3078 = vsub.f32 %v439, %v3077
        %v3079 = vand.u32 %v3078, 4294901760
        %3080 = vmatpush1.msra.mxu0 %v3079
        %3081 = vmatprep.subr.mxu0 0.0
        %v3082 = vand.u32 %v438, 4294901760
        %v3083 = vsub.f32 %v438, %v3082
        %v3084 = vand.u32 %v3083, 4294901760
        %3085 = vmatpush1.msra.mxu0 %v3084
        %3086 = vmatprep.subr.mxu0 0.0
        %3087 = vmatpush2.msra.mxu0 0.0
        %3088 = vmatprep.subr.mxu0 0.0
        %3089 = vmatpush2.msra.mxu0 0.0
        %3090 = vmatprep.subr.mxu0 0.0
        %3091 = vmatpush2.msra.mxu0 0.0
        %3092 = vmatprep.subr.mxu0 0.0
        %3093 = vmatpush2.msra.mxu0 0.0
        %3094 = vmatprep.subr.mxu0 0.0
        %3095 = vmatpush2.msra.mxu0 0.0
        %3096 = vmatprep.subr.mxu0 0.0
        %3097 = vmatpush2.msra.mxu0 0.0
        %3098 = vmatprep.subr.mxu0 0.0
        %3099 = vmatpush2.msra.mxu0 0.0
        %3100 = vmatprep.subr.mxu0 0.0
        %3101 = vmatpush2.msra.mxu0 0.0
        %3102 = vmatprep.subr.mxu0 0.0
        %3103 = vmatpush2.msra.mxu0 0.0
        %3104 = vmatprep.subr.mxu0 0.0
        %3105 = vmatpush2.msra.mxu0 0.0
        %3106 = vmatprep.subr.mxu0 0.0
        %3107 = vmatpush2.msra.mxu0 0.0
        %3108 = vmatprep.subr.mxu0 0.0
        %3109 = vmatpush2.msra.mxu0 0.0
        %3110 = vmatprep.subr.mxu0 0.0
        %3111 = vmatpush2.msra.mxu0 0.0
        %3112 = vmatprep.subr.mxu0 0.0
        %3113 = vmatpush2.msra.mxu0 0.0
        %3114 = vmatprep.subr.mxu0 0.0
        %3115 = vmatpush2.msra.mxu0 0.0
        %3116 = vmatprep.subr.mxu0 0.0
        %3117 = vmatpush2.msra.mxu0 0.0
        %3118 = vmatprep.mubr.f32.mxu0 0.0
        %v3119 = vand.u32 %v2570, 4294901760
        %3120 = vmatmul.mubr.f32.gmra.mxu0 %v3119
        %v3121 = vpop.f32.mrf.mxu0
        %v3122 = vadd.f32 %v3003, %v3121
        %v3123 = vpop.f32.mrf.mxu0
        %3124 = vdwg.mxu0
        %3125 = vmatprep.subr.mxu0 0.0
        %v3126 = vand.u32 %v453, 4294901760
        %3127 = vmatpush1.msra.mxu0 %v3126
        %3128 = vmatprep.subr.mxu0 0.0
        %v3129 = vand.u32 %v452, 4294901760
        %3130 = vmatpush1.msra.mxu0 %v3129
        %3131 = vmatprep.subr.mxu0 0.0
        %v3132 = vand.u32 %v451, 4294901760
        %3133 = vmatpush1.msra.mxu0 %v3132
        %3134 = vmatprep.subr.mxu0 0.0
        %v3135 = vand.u32 %v450, 4294901760
        %3136 = vmatpush1.msra.mxu0 %v3135
        %3137 = vmatprep.subr.mxu0 0.0
        %v3138 = vand.u32 %v449, 4294901760
        %3139 = vmatpush1.msra.mxu0 %v3138
        %3140 = vmatprep.subr.mxu0 0.0
        %v3141 = vand.u32 %v448, 4294901760
        %3142 = vmatpush1.msra.mxu0 %v3141
        %3143 = vmatprep.subr.mxu0 0.0
        %v3144 = vand.u32 %v447, 4294901760
        %3145 = vmatpush1.msra.mxu0 %v3144
        %3146 = vmatprep.subr.mxu0 0.0
        %v3147 = vand.u32 %v446, 4294901760
        %3148 = vmatpush1.msra.mxu0 %v3147
        %3149 = vmatprep.subr.mxu0 0.0
        %v3150 = vand.u32 %v445, 4294901760
        %3151 = vmatpush1.msra.mxu0 %v3150
        %3152 = vmatprep.subr.mxu0 0.0
        %v3153 = vand.u32 %v444, 4294901760
        %3154 = vmatpush1.msra.mxu0 %v3153
        %3155 = vmatprep.subr.mxu0 0.0
        %v3156 = vand.u32 %v443, 4294901760
        %3157 = vmatpush1.msra.mxu0 %v3156
        %3158 = vmatprep.subr.mxu0 0.0
        %v3159 = vand.u32 %v442, 4294901760
        %3160 = vmatpush1.msra.mxu0 %v3159
        %3161 = vmatprep.subr.mxu0 0.0
        %v3162 = vand.u32 %v441, 4294901760
        %3163 = vmatpush1.msra.mxu0 %v3162
        %3164 = vmatprep.subr.mxu0 0.0
        %v3165 = vand.u32 %v440, 4294901760
        %3166 = vmatpush1.msra.mxu0 %v3165
        %3167 = vmatprep.subr.mxu0 0.0
        %v3168 = vand.u32 %v439, 4294901760
        %3169 = vmatpush1.msra.mxu0 %v3168
        %3170 = vmatprep.subr.mxu0 0.0
        %v3171 = vand.u32 %v438, 4294901760
        %3172 = vmatpush1.msra.mxu0 %v3171
        %3173 = vmatprep.subr.mxu0 0.0
        %3174 = vmatpush2.msra.mxu0 0.0
        %3175 = vmatprep.subr.mxu0 0.0
        %3176 = vmatpush2.msra.mxu0 0.0
        %3177 = vmatprep.subr.mxu0 0.0
        %3178 = vmatpush2.msra.mxu0 0.0
        %3179 = vmatprep.subr.mxu0 0.0
        %3180 = vmatpush2.msra.mxu0 0.0
        %3181 = vmatprep.subr.mxu0 0.0
        %3182 = vmatpush2.msra.mxu0 0.0
        %3183 = vmatprep.subr.mxu0 0.0
        %3184 = vmatpush2.msra.mxu0 0.0
        %3185 = vmatprep.subr.mxu0 0.0
        %3186 = vmatpush2.msra.mxu0 0.0
        %3187 = vmatprep.subr.mxu0 0.0
        %3188 = vmatpush2.msra.mxu0 0.0
        %3189 = vmatprep.subr.mxu0 0.0
        %3190 = vmatpush2.msra.mxu0 0.0
        %3191 = vmatprep.subr.mxu0 0.0
        %3192 = vmatpush2.msra.mxu0 0.0
        %3193 = vmatprep.subr.mxu0 0.0
        %3194 = vmatpush2.msra.mxu0 0.0
        %3195 = vmatprep.subr.mxu0 0.0
        %3196 = vmatpush2.msra.mxu0 0.0
        %3197 = vmatprep.subr.mxu0 0.0
        %3198 = vmatpush2.msra.mxu0 0.0
        %3199 = vmatprep.subr.mxu0 0.0
        %3200 = vmatpush2.msra.mxu0 0.0
        %3201 = vmatprep.subr.mxu0 0.0
        %3202 = vmatpush2.msra.mxu0 0.0
        %3203 = vmatprep.subr.mxu0 0.0
        %3204 = vmatpush2.msra.mxu0 0.0
        %3205 = vmatprep.mubr.f32.mxu0 0.0
        %v3206 = vand.u32 %v2570, 4294901760
        %3207 = vmatmul.mubr.f32.gmra.mxu0 %v3206
        %v3208 = vpop.f32.mrf.mxu0
        %v3209 = vadd.f32 %v3122, %v3208
        %v3210 = vpop.f32.mrf.mxu0
        %3211 = vdwg.mxu0
        %v3212 = vmul.f32 %v3209, %v479
        %v3213 = vsel %vm1899, %v3212, 0.0
        %3214 = vadd.xlane.f32.xlu0 %v3213
        %v3215 = vpop.xlane.xlu0 %3214
        %v3216 = vrot.slane %v3215, 4
        %v3217 = vadd.f32 %v3215, %v3216
        %v3218 = vrot.slane %v3217, 2
        %v3219 = vadd.f32 %v3217, %v3218
        %v3220 = vrot.slane %v3219, 1
        %v3221 = vadd.f32 %v3219, %v3220
        %s3222 = vtos %v3221
        %vm3223 = vcmask 15360
        %v3224 = vsel %vm3223, %v422, 0.0
        %v3225 = vsel %vm3223, %v423, 0.0
        %v3226 = vadd.f32 %v3224, %v3225
        %v3227 = vsel %vm3223, %v424, 0.0
        %v3228 = vadd.f32 %v3226, %v3227
        %v3229 = vsel %vm3223, %v425, 0.0
        %v3230 = vadd.f32 %v3228, %v3229
        %v3231 = vsel %vm3223, %v426, 0.0
        %v3232 = vadd.f32 %v3230, %v3231
        %v3233 = vsel %vm3223, %v427, 0.0
        %v3234 = vadd.f32 %v3232, %v3233
        %v3235 = vsel %vm3223, %v428, 0.0
        %v3236 = vadd.f32 %v3234, %v3235
        %v3237 = vsel %vm3223, %v429, 0.0
        %v3238 = vadd.f32 %v3236, %v3237
        %v3239 = vsel %vm3223, %v430, 0.0
        %v3240 = vadd.f32 %v3238, %v3239
        %v3241 = vsel %vm3223, %v431, 0.0
        %v3242 = vadd.f32 %v3240, %v3241
        %v3243 = vsel %vm3223, %v432, 0.0
        %v3244 = vadd.f32 %v3242, %v3243
        %v3245 = vsel %vm3223, %v433, 0.0
        %v3246 = vadd.f32 %v3244, %v3245
        %v3247 = vsel %vm3223, %v434, 0.0
        %v3248 = vadd.f32 %v3246, %v3247
        %v3249 = vsel %vm3223, %v435, 0.0
        %v3250 = vadd.f32 %v3248, %v3249
        %v3251 = vsel %vm3223, %v436, 0.0
        %v3252 = vadd.f32 %v3250, %v3251
        %v3253 = vsel %vm3223, %v437, 0.0
        %v3254 = vadd.f32 %v3252, %v3253
        %3255 = vadd.xlane.f32.xlu0 %v3254
        %v3256 = vpop.xlane.xlu0 %3255
        %v3257 = vrot.slane %v3256, 4
        %v3258 = vadd.f32 %v3256, %v3257
        %v3259 = vrot.slane %v3258, 2
        %v3260 = vadd.f32 %v3258, %v3259
        %v3261 = vrot.slane %v3260, 1
        %v3262 = vadd.f32 %v3260, %v3261
        %s3263 = vtos %v3262
        %v3264 = vsel %vm3223, %v438, 0.0
        %v3265 = vsel %vm3223, %v439, 0.0
        %v3266 = vadd.f32 %v3264, %v3265
        %v3267 = vsel %vm3223, %v440, 0.0
        %v3268 = vadd.f32 %v3266, %v3267
        %v3269 = vsel %vm3223, %v441, 0.0
        %v3270 = vadd.f32 %v3268, %v3269
        %v3271 = vsel %vm3223, %v442, 0.0
        %v3272 = vadd.f32 %v3270, %v3271
        %v3273 = vsel %vm3223, %v443, 0.0
        %v3274 = vadd.f32 %v3272, %v3273
        %v3275 = vsel %vm3223, %v444, 0.0
        %v3276 = vadd.f32 %v3274, %v3275
        %v3277 = vsel %vm3223, %v445, 0.0
        %v3278 = vadd.f32 %v3276, %v3277
        %v3279 = vsel %vm3223, %v446, 0.0
        %v3280 = vadd.f32 %v3278, %v3279
        %v3281 = vsel %vm3223, %v447, 0.0
        %v3282 = vadd.f32 %v3280, %v3281
        %v3283 = vsel %vm3223, %v448, 0.0
        %v3284 = vadd.f32 %v3282, %v3283
        %v3285 = vsel %vm3223, %v449, 0.0
        %v3286 = vadd.f32 %v3284, %v3285
        %v3287 = vsel %vm3223, %v450, 0.0
        %v3288 = vadd.f32 %v3286, %v3287
        %v3289 = vsel %vm3223, %v451, 0.0
        %v3290 = vadd.f32 %v3288, %v3289
        %v3291 = vsel %vm3223, %v452, 0.0
        %v3292 = vadd.f32 %v3290, %v3291
        %v3293 = vsel %vm3223, %v453, 0.0
        %v3294 = vadd.f32 %v3292, %v3293
        %3295 = vadd.xlane.f32.xlu0 %v3294
        %v3296 = vpop.xlane.xlu0 %3295
        %v3297 = vrot.slane %v3296, 4
        %v3298 = vadd.f32 %v3296, %v3297
        %v3299 = vrot.slane %v3298, 2
        %v3300 = vadd.f32 %v3298, %v3299
        %v3301 = vrot.slane %v3300, 1
        %v3302 = vadd.f32 %v3300, %v3301
        %s3303 = vtos %v3302
        %vm3304 = vcmp.eq.s32.totalorder %v471, 0
        %vm3305 = vcmp.eq.s32.totalorder %v471, 1
        %vm3306 = vcmp.eq.s32.totalorder %v471, 2
        %vm3307 = vcmp.eq.s32.totalorder %v471, 3
        %v3308 = vstv %s3263
        %v3309 = vstv %s3303
        %v3310 = vsel %vm3307, %v3308, %v3309
        %v3311 = vstv %s3222
        %v3312 = vsel %vm3306, %v3311, %v3310
        %v3313 = vstv %s2565
        %v3314 = vsel %vm3305, %v3313, %v3312
        %v3315 = vstv %s1909
        %v3316 = vsel %vm3304, %v3315, %v3314
        %3317 = vst [vmem:[%s380] sm:$0xff] %v3316
        %s3318 = sand.u32 %s181, 1
        %s3319 = scalar_lea.sflag [#allocation4], %s3318
        %s3320 = sand.u32 %s181, 1
        %s3321 = smul.addr %s3320, 8
        %s3322 = scalar_lea.vmem [#allocation3], %s3321
        // Predicated region
        $region79: #{tpu_custom_call.1} parent=73 // pred_check
          %p3323 = pneg %p191
        $region80: #{tpu_custom_call.1} parent=73 // pred_check_branch
          %3325 = sbr.rel (%p3323) target = $region82
        $region81: #{tpu_custom_call.1} parent=73 // pred_region
          %s3327 = ssub.s32 128, 128
          %3328 = vsyncadd %s3319, %s3327
          %s3329 = smul.addr %s23, 2
          %s3330 = sadd.s32 %s24, %s3329
          %s3331 = smul.addr %s3330, 128
          %s3332 = scalar_lea.hbm %s5, %s3331
          %s3334 = sshll.u32 %s3322, 4
          %s3335 = int_to_ptr.vmem [resolvable:$true] %s3334
          %3337 = dma.vmem_to_hbm [thread:$0]  %s3335, 128, %s3332, %s3319
        $region82: #{tpu_custom_call.1} parent=73 // pred_fallthru
          _
      $region74: #{tpu_custom_call.1} parent=5 // pred_fallthru
        _
      %p3338 = scmp.le.s32.totalorder 2, %s14
      // Predicated region
      $region83: #{tpu_custom_call.1} parent=5 // pred_check
        %p3339 = pneg %p3338
      $region84: #{tpu_custom_call.1} parent=5 // pred_check_branch
        %3341 = sbr.rel (%p3339) target = $region86
      $region85: #{tpu_custom_call.1} parent=5 // pred_region
        %s3342 = ssub.s32 %s14, 2
        // Predicated region
        $region87: #{tpu_custom_call.1} parent=85 // pred_check
          %p3343 = pneg %p197
        $region88: #{tpu_custom_call.1} parent=85 // pred_check_branch
          %3345 = sbr.rel (%p3343) target = $region90
        $region89: #{tpu_custom_call.1} parent=85 // pred_region
          %s3346 = sand.u32 %s182, 1
          %s3347 = scalar_lea.sflag [#allocation4], %s3346
          %s3348 = sand.u32 %s182, 1
          %s3349 = smul.addr %s3348, 8
          %s3350 = scalar_lea.vmem [#allocation3], %s3349
          %3351 = dma.done %s3347, 128
        $region90: #{tpu_custom_call.1} parent=85 // pred_fallthru
          _
      $region86: #{tpu_custom_call.1} parent=5 // pred_fallthru
        _
    $region6: #{tpu_custom_call.1} parent=1 // loop_footer
      %s18 = sadd.s32 1, %s14
    $region7: #{tpu_custom_call.1} parent=1 // loop_footer_branch
      %13 = sbr.rel target = $region3
    $region8: #{tpu_custom_call.1} parent=1 // loop_exit
      _
    %3352 = vsyncpa [#allocation4], 1
    %s3353 = scalar_lea.sflag [#allocation4], 1
    %3354 = vsyncpa %s3353, 1

</llo_original>
